<compile_context>
chip_gen: v7x
topology: tpu7x:2x2x1
jax: 0.10.0
libtpu: 0.0.40
codegen_flags: <defaults>
</compile_context>

<pallas_src>
import jax
import jax.numpy as jnp
import numpy as np
from jax.experimental import pallas as pl
from jax.experimental.pallas import tpu as pltpu

# ---- model hyperparameters (match the PyTorch script) ----------------------
INPUT_SIZE = 4          # X_train.shape[2]
HIDDEN = 32             # hidden_size
L = 32                  # width of the FCNN ("l")
L2 = L // 2
NUM_LAYERS = 2
BATCH = 2
SEQ = 8
TB = SEQ * BATCH        # flattened (t, b) rows
LANES = 128             # vreg lane width; also 4*HIDDEN

# ---- packed-weight slab layout (all offsets multiples of 8 sublanes) --------
R_WIH0 = 0      # (D, 4H)   layer-0 input weights  (only rows 0..D used)
R_WHH0 = 8      # (H, 4H)   layer-0 recurrent weights
R_B0   = 40     # (1, 4H)   layer-0 fused bias (bih+bhh)
R_WIH1 = 48     # (H, 4H)   layer-1 input weights
R_WHH1 = 80     # (H, 4H)   layer-1 recurrent weights
R_B1   = 112    # (1, 4H)   layer-1 fused bias
R_WLIN = 120    # (H, 128)  linear weights, lanes 0..L valid
R_BLIN = 152    # (1, 128)  linear bias, lanes 0..L valid
R_WFC  = 160    # (128,128) fc weights, rows 0..L / lanes 0..L2 valid
R_BFC  = 288    # (1, 128)  fc bias, lanes 0..L2 valid
R_WFC2 = 296    # (128,128) fc2 weights broadcast across all 128 lanes, rows 0..L2 valid
R_BFC2 = 424    # (1, 128)  fc2 bias broadcast across lanes
SLAB_ROWS = 432


def lstm_mlp_kernel(x_ref, w_ref, out_ref, xproj_ref, h1all_ref):
    B, T, H = BATCH, SEQ, HIDDEN

    def sigmoid(v):
        return 1.0 / (1.0 + jnp.exp(-v))

    def lrelu(v):                       # nn.LeakyReLU() default slope
        return jnp.where(v > 0, v, 0.01 * v)

    # ---- hoisted layer-0 input projection for ALL timesteps (one MXU matmul) ----
    # (T*B, D) @ (D, 4H) + b0 ; removes x@Wih0 and the bias add from the serial path.
    xproj_ref[...] = (
        jnp.dot(x_ref[...], w_ref[R_WIH0:R_WIH0 + INPUT_SIZE, :],
                preferred_element_type=jnp.float32)
        + w_ref[R_B0:R_B0 + 1, :])

    # recurrent weights held as values across the unrolled time loop
    whh0 = w_ref[R_WHH0:R_WHH0 + H, :]
    wih1 = w_ref[R_WIH1:R_WIH1 + H, :]
    whh1 = w_ref[R_WHH1:R_WHH1 + H, :]
    b1 = w_ref[R_B1:R_B1 + 1, :]

    def cell(pre, h, c, whh):
        # gate column order (reordered at pack time): [ i | f | o | g ]
        g_lin = pre + jnp.dot(h, whh, preferred_element_type=jnp.float32)
        sg = sigmoid(g_lin)             # one activation pass over all 128 lanes
        i = sg[:, 0:H]
        f = sg[:, H:2 * H]
        o = sg[:, 2 * H:3 * H]
        g = jnp.tanh(g_lin[:, 3 * H:4 * H])
        c_new = f * c + i * g
        h_new = o * jnp.tanh(c_new)
        return h_new, c_new

    zeros = jnp.zeros((B, H), jnp.float32)
    h0, c0, h1, c1 = zeros, zeros, zeros, zeros

    # T=8 is a static, tiny trip count: fully unrolled time loop (equivalent to
    # lax.fori_loop(..., unroll=True)); every slice offset below is static.
    for t in range(T):
        pre0 = xproj_ref[t * B:(t + 1) * B, :]            # precomputed x@Wih0 + b0
        h0, c0 = cell(pre0, h0, c0, whh0)
        # TODO(synk): inter-layer dropout (p=0.5) skipped — inference semantics.
        pre1 = jnp.dot(h0, wih1, preferred_element_type=jnp.float32) + b1
        h1, c1 = cell(pre1, h1, c1, whh1)
        h1all_ref[t * B:(t + 1) * B, :] = h1              # stash for the batched head

    # ---- MLP head, batched over all T*B rows (hoisted out of the recurrence) ----
    # Operands are lane-padded/broadcast to 128 at pack time, so every matmul is a
    # full-width MXU op and the final store is lane-dense (no masked vst).
    y = (jnp.dot(h1all_ref[...], w_ref[R_WLIN:R_WLIN + H, :],
                 preferred_element_type=jnp.float32)
         + w_ref[R_BLIN:R_BLIN + 1, :])
    y = (jnp.dot(lrelu(y), w_ref[R_WFC:R_WFC + LANES, :],
                 preferred_element_type=jnp.float32)
         + w_ref[R_BFC:R_BFC + 1, :])
    y = (jnp.dot(lrelu(y), w_ref[R_WFC2:R_WFC2 + LANES, :],
                 preferred_element_type=jnp.float32)
         + w_ref[R_BFC2:R_BFC2 + 1, :])
    out_ref[...] = y        # (T*B, 128): every lane holds the prediction for row t*B+b


def all_sequence_model(x, r, w_slab):
    """x: (B, T, D) batch_first, r: unused (kept for API parity), w_slab: packed weights."""
    del r
    B, T, D = x.shape
    assert (B, T, D) == (BATCH, SEQ, INPUT_SIZE)
    tb = T * B
    # time-major, flattened: row index = t*B + b
    x_flat = jnp.transpose(x, (1, 0, 2)).reshape(tb, D)

    out = pl.pallas_call(
        lstm_mlp_kernel,
        grid=(1,),
        in_specs=[pl.BlockSpec((tb, D), lambda i: (0, 0)),
                  pl.BlockSpec((SLAB_ROWS, LANES), lambda i: (0, 0))],
        out_specs=pl.BlockSpec((tb, LANES), lambda i: (0, 0)),
        out_shape=jax.ShapeDtypeStruct((tb, LANES), jnp.float32),
        scratch_shapes=[pltpu.VMEM((tb, 4 * HIDDEN), jnp.float32),   # hoisted x-projection
                        pltpu.VMEM((tb, HIDDEN), jnp.float32)],      # per-step h1 stash
        compiler_params=pltpu.CompilerParams(
            dimension_semantics=("arbitrary",)),
        # NOTE(v7x): with a larger production batch, add a leading batch grid axis
        # marked core-parallel so the second TensorCore runs independent sequences;
        # at B=2 there is not enough work to split.
    )(x_flat, w_slab)

    # column 0 of the lane-dense slab holds the prediction for flattened row t*B+b
    return out[:, 0].reshape(T, B).T[:, :, None]          # (B, T, 1)


# ---- one-time host-side packing of all 12 parameters into one slab ----------
def pack_params(p):
    H, D, l, l2 = HIDDEN, INPUT_SIZE, L, L2

    def ro(w):
        # PyTorch gate blocks [i, f, g, o] along axis 0 -> kernel order [i, f, o, g]
        i, f, g, o = jnp.split(w, 4, axis=0)
        return jnp.concatenate([i, f, o, g], axis=0)

    slab = jnp.zeros((SLAB_ROWS, LANES), jnp.float32)
    updates = [
        (R_WIH0, ro(p["wih0"]).T),                                  # (D, 4H)
        (R_WHH0, ro(p["whh0"]).T),                                  # (H, 4H)
        (R_B0,   ro(p["bih0"] + p["bhh0"])[None, :]),               # (1, 4H)
        (R_WIH1, ro(p["wih1"]).T),                                  # (H, 4H)
        (R_WHH1, ro(p["whh1"]).T),                                  # (H, 4H)
        (R_B1,   ro(p["bih1"] + p["bhh1"])[None, :]),               # (1, 4H)
        (R_WLIN, p["wlin"].T),                                      # (H, l)
        (R_BLIN, p["blin"][None, :]),                               # (1, l)
        (R_WFC,  p["wfc"].T),                                       # (l, l2)
        (R_BFC,  p["bfc"][None, :]),                                # (1, l2)
        (R_WFC2, jnp.broadcast_to(p["wfc2"].T, (l2, LANES))),       # (l2, 128) lane-bcast
        (R_BFC2, jnp.broadcast_to(p["bfc2"][None, :], (1, LANES))), # (1, 128) lane-bcast
    ]
    for row, a in updates:
        slab = slab.at[row:row + a.shape[0], :a.shape[1]].set(a.astype(jnp.float32))
    return slab


# ---- deterministic parameter init (shapes per nn.LSTM / nn.Linear) ----------
def init_params(key):
    H, D, l = HIDDEN, INPUT_SIZE, L
    lstm_bound = 1.0 / np.sqrt(H)
    keys = jax.random.split(key, 16)

    def u(k, shape, bound):
        return jax.random.uniform(k, shape, jnp.float32, -bound, bound)

    return dict(
        wih0=u(keys[0], (4 * H, D), lstm_bound),
        whh0=u(keys[1], (4 * H, H), lstm_bound),
        bih0=u(keys[2], (4 * H,), lstm_bound),
        bhh0=u(keys[3], (4 * H,), lstm_bound),
        wih1=u(keys[4], (4 * H, H), lstm_bound),
        whh1=u(keys[5], (4 * H, H), lstm_bound),
        bih1=u(keys[6], (4 * H,), lstm_bound),
        bhh1=u(keys[7], (4 * H,), lstm_bound),
        wlin=u(keys[8], (l, H), 1.0 / np.sqrt(H)),
        blin=u(keys[9], (l,), 1.0 / np.sqrt(H)),
        wfc=u(keys[10], (l // 2, l), 1.0 / np.sqrt(l)),
        bfc=u(keys[11], (l // 2,), 1.0 / np.sqrt(l)),
        wfc2=u(keys[12], (1, l // 2), 1.0 / np.sqrt(l // 2)),
        bfc2=u(keys[13], (1,), 1.0 / np.sqrt(l // 2)),
    )


# ---- pure-JAX reference (PyTorch layout / gate order) ------------------------
def ref_forward(x, p):
    B, T, D = x.shape
    H = HIDDEN

    def cell(x_t, h, c, wih, whh, bih, bhh):
        gates = x_t @ wih.T + h @ whh.T + bih + bhh
        i = jax.nn.sigmoid(gates[:, 0 * H:1 * H])
        f = jax.nn.sigmoid(gates[:, 1 * H:2 * H])
        g = jnp.tanh(gates[:, 2 * H:3 * H])
        o = jax.nn.sigmoid(gates[:, 3 * H:4 * H])
        c_new = f * c + i * g
        return o * jnp.tanh(c_new), c_new

    def step(carry, x_t):
        h0, c0, h1, c1 = carry
        h0, c0 = cell(x_t, h0, c0, p["wih0"], p["whh0"], p["bih0"], p["bhh0"])
        h1, c1 = cell(h0, h1, c1, p["wih1"], p["whh1"], p["bih1"], p["bhh1"])
        return (h0, c0, h1, c1), h1

    z = jnp.zeros((B, H), jnp.float32)
    _, hs = jax.lax.scan(step, (z, z, z, z), jnp.transpose(x, (1, 0, 2)))
    hs = jnp.transpose(hs, (1, 0, 2))                     # (B, T, H)

    def lrelu(v):
        return jnp.where(v > 0, v, 0.01 * v)

    y = hs @ p["wlin"].T + p["blin"]
    y = lrelu(y) @ p["wfc"].T + p["bfc"]
    y = lrelu(y) @ p["wfc2"].T + p["bfc2"]
    return y


if __name__ == "__main__":
    key = jax.random.PRNGKey(0)
    kx, kr, kp = jax.random.split(key, 3)

    x = jax.random.normal(kx, (BATCH, SEQ, INPUT_SIZE), jnp.float32)
    r = jax.random.normal(kr, (BATCH, SEQ, 1), jnp.float32)   # unused, per forward()
    params = init_params(kp)
    w_slab = pack_params(params)            # one-time weight packing / reorder / padding

    out = all_sequence_model(x, r, w_slab)
    out = jax.block_until_ready(out)

    assert out.shape == (BATCH, SEQ, 1), out.shape
    ref = ref_forward(x, params)
    np.testing.assert_allclose(np.asarray(out), np.asarray(ref), rtol=1e-5, atol=1e-5)

    print("KERNEL_OK")
</pallas_src>

<mosaic_0001>
module attributes {stable_mosaic.version = 11 : i64} {
  func.func @lstm_mlp_kernel(%arg0: i32, %arg1: memref<16x4xf32, #tpu.memory_space<vmem>>, %arg2: memref<432x128xf32, #tpu.memory_space<vmem>>, %arg3: memref<16x128xf32, #tpu.memory_space<vmem>>, %arg4: memref<16x128xf32, #tpu.memory_space<vmem>>, %arg5: memref<16x32xf32, #tpu.memory_space<vmem>>) attributes {dimension_semantics = [#tpu.dimension_semantics<arbitrary>], iteration_bounds = array<i64: 1>, scalar_prefetch = 0 : i64, scratch_operands = 2 : i64, tpu.core_type = #tpu.core_type<tc>, window_params = [{pipeline_mode = #tpu.pipeline_mode<synchronous>, transform_indices = @transform_0, window_bounds = array<i64: 16, 4>}, {pipeline_mode = #tpu.pipeline_mode<synchronous>, transform_indices = @transform_1, window_bounds = array<i64: 432, 128>}, {pipeline_mode = #tpu.pipeline_mode<synchronous>, transform_indices = @transform_2, window_bounds = array<i64: 16, 128>}]} {
    %c0 = arith.constant 0 : index
    %c0_0 = arith.constant 0 : index
    %0 = vector.load %arg1[%c0, %c0_0] : memref<16x4xf32, #tpu.memory_space<vmem>>, vector<16x4xf32>
    %c0_1 = arith.constant 0 : index
    %c0_2 = arith.constant 0 : index
    %1 = vector.load %arg2[%c0_1, %c0_2] : memref<432x128xf32, #tpu.memory_space<vmem>>, vector<4x128xf32>
    %cst = arith.constant dense<0.000000e+00> : vector<16x128xf32>
    %2 = tpu.matmul %0, %1, %cst {dimension_numbers = #tpu.dot_dimension_numbers<[1], [0], [0], [1], [0, 0, 1, 1], [], []>} : vector<16x4xf32>, vector<4x128xf32>, vector<16x128xf32> -> vector<16x128xf32>
    %c40 = arith.constant 40 : index
    %c0_3 = arith.constant 0 : index
    %3 = vector.load %arg2[%c40, %c0_3] : memref<432x128xf32, #tpu.memory_space<vmem>>, vector<1x128xf32>
    %4 = vector.broadcast %3 : vector<1x128xf32> to vector<16x128xf32>
    %5 = arith.addf %2, %4 : vector<16x128xf32>
    %c0_4 = arith.constant 0 : index
    %c0_5 = arith.constant 0 : index
    %6 = vector.load %arg4[%c0_4, %c0_5] : memref<16x128xf32, #tpu.memory_space<vmem>>, vector<16x128xf32>
    tpu.vector_store %arg4[%c0_4, %c0_5], %5 {strides = array<i32>} : memref<16x128xf32, #tpu.memory_space<vmem>>, vector<16x128xf32>,
    %c8 = arith.constant 8 : index
    %c0_6 = arith.constant 0 : index
    %7 = vector.load %arg2[%c8, %c0_6] : memref<432x128xf32, #tpu.memory_space<vmem>>, vector<32x128xf32>
    %c48 = arith.constant 48 : index
    %c0_7 = arith.constant 0 : index
    %8 = vector.load %arg2[%c48, %c0_7] : memref<432x128xf32, #tpu.memory_space<vmem>>, vector<32x128xf32>
    %c80 = arith.constant 80 : index
    %c0_8 = arith.constant 0 : index
    %9 = vector.load %arg2[%c80, %c0_8] : memref<432x128xf32, #tpu.memory_space<vmem>>, vector<32x128xf32>
    %c112 = arith.constant 112 : index
    %c0_9 = arith.constant 0 : index
    %10 = vector.load %arg2[%c112, %c0_9] : memref<432x128xf32, #tpu.memory_space<vmem>>, vector<1x128xf32>
    %cst_10 = arith.constant 0.000000e+00 : f32
    %11 = vector.broadcast %cst_10 : f32 to vector<2x32xf32>
    %c0_11 = arith.constant 0 : index
    %c0_12 = arith.constant 0 : index
    %12 = vector.load %arg4[%c0_11, %c0_12] : memref<16x128xf32, #tpu.memory_space<vmem>>, vector<2x128xf32>
    %cst_13 = arith.constant dense<0.000000e+00> : vector<2x128xf32>
    %13 = tpu.matmul %11, %7, %cst_13 {dimension_numbers = #tpu.dot_dimension_numbers<[1], [0], [0], [1], [0, 0, 1, 1], [], []>} : vector<2x32xf32>, vector<32x128xf32>, vector<2x128xf32> -> vector<2x128xf32>
    %14 = arith.addf %12, %13 : vector<2x128xf32>
    %cst_14 = arith.constant 0.000000e+00 : f32
    %15 = vector.broadcast %cst_14 : f32 to vector<2x128xf32>
    %16 = arith.subf %15, %14 : vector<2x128xf32>
    %17 = math.exp %16 : vector<2x128xf32>
    %cst_15 = arith.constant 1.000000e+00 : f32
    %18 = vector.broadcast %cst_15 : f32 to vector<2x128xf32>
    %19 = arith.addf %18, %17 : vector<2x128xf32>
    %cst_16 = arith.constant 1.000000e+00 : f32
    %20 = vector.broadcast %cst_16 : f32 to vector<2x128xf32>
    %21 = arith.divf %20, %19 : vector<2x128xf32>
    %22 = vector.extract_strided_slice %21 {offsets = [0, 0], sizes = [2, 32], strides = [1, 1]} : vector<2x128xf32> to vector<2x32xf32>
    %23 = vector.extract_strided_slice %21 {offsets = [0, 32], sizes = [2, 32], strides = [1, 1]} : vector<2x128xf32> to vector<2x32xf32>
    %24 = vector.extract_strided_slice %21 {offsets = [0, 64], sizes = [2, 32], strides = [1, 1]} : vector<2x128xf32> to vector<2x32xf32>
    %25 = vector.extract_strided_slice %14 {offsets = [0, 96], sizes = [2, 32], strides = [1, 1]} : vector<2x128xf32> to vector<2x32xf32>
    %26 = math.tanh %25 : vector<2x32xf32>
    %27 = arith.mulf %23, %11 : vector<2x32xf32>
    %28 = arith.mulf %22, %26 : vector<2x32xf32>
    %29 = arith.addf %27, %28 : vector<2x32xf32>
    %30 = math.tanh %29 : vector<2x32xf32>
    %31 = arith.mulf %24, %30 : vector<2x32xf32>
    %cst_17 = arith.constant dense<0.000000e+00> : vector<2x128xf32>
    %32 = tpu.matmul %31, %8, %cst_17 {dimension_numbers = #tpu.dot_dimension_numbers<[1], [0], [0], [1], [0, 0, 1, 1], [], []>} : vector<2x32xf32>, vector<32x128xf32>, vector<2x128xf32> -> vector<2x128xf32>
    %33 = vector.broadcast %10 : vector<1x128xf32> to vector<2x128xf32>
    %34 = arith.addf %32, %33 : vector<2x128xf32>
    %cst_18 = arith.constant dense<0.000000e+00> : vector<2x128xf32>
    %35 = tpu.matmul %11, %9, %cst_18 {dimension_numbers = #tpu.dot_dimension_numbers<[1], [0], [0], [1], [0, 0, 1, 1], [], []>} : vector<2x32xf32>, vector<32x128xf32>, vector<2x128xf32> -> vector<2x128xf32>
    %36 = arith.addf %34, %35 : vector<2x128xf32>
    %cst_19 = arith.constant 0.000000e+00 : f32
    %37 = vector.broadcast %cst_19 : f32 to vector<2x128xf32>
    %38 = arith.subf %37, %36 : vector<2x128xf32>
    %39 = math.exp %38 : vector<2x128xf32>
    %cst_20 = arith.constant 1.000000e+00 : f32
    %40 = vector.broadcast %cst_20 : f32 to vector<2x128xf32>
    %41 = arith.addf %40, %39 : vector<2x128xf32>
    %cst_21 = arith.constant 1.000000e+00 : f32
    %42 = vector.broadcast %cst_21 : f32 to vector<2x128xf32>
    %43 = arith.divf %42, %41 : vector<2x128xf32>
    %44 = vector.extract_strided_slice %43 {offsets = [0, 0], sizes = [2, 32], strides = [1, 1]} : vector<2x128xf32> to vector<2x32xf32>
    %45 = vector.extract_strided_slice %43 {offsets = [0, 32], sizes = [2, 32], strides = [1, 1]} : vector<2x128xf32> to vector<2x32xf32>
    %46 = vector.extract_strided_slice %43 {offsets = [0, 64], sizes = [2, 32], strides = [1, 1]} : vector<2x128xf32> to vector<2x32xf32>
    %47 = vector.extract_strided_slice %36 {offsets = [0, 96], sizes = [2, 32], strides = [1, 1]} : vector<2x128xf32> to vector<2x32xf32>
    %48 = math.tanh %47 : vector<2x32xf32>
    %49 = arith.mulf %45, %11 : vector<2x32xf32>
    %50 = arith.mulf %44, %48 : vector<2x32xf32>
    %51 = arith.addf %49, %50 : vector<2x32xf32>
    %52 = math.tanh %51 : vector<2x32xf32>
    %53 = arith.mulf %46, %52 : vector<2x32xf32>
    %c0_22 = arith.constant 0 : index
    %c0_23 = arith.constant 0 : index
    %54 = vector.load %arg5[%c0_22, %c0_23] : memref<16x32xf32, #tpu.memory_space<vmem>>, vector<2x32xf32>
    tpu.vector_store %arg5[%c0_22, %c0_23], %53 {strides = array<i32>} : memref<16x32xf32, #tpu.memory_space<vmem>>, vector<2x32xf32>,
    %c2 = arith.constant 2 : index
    %c0_24 = arith.constant 0 : index
    %55 = vector.load %arg4[%c2, %c0_24] : memref<16x128xf32, #tpu.memory_space<vmem>>, vector<2x128xf32>
    %cst_25 = arith.constant dense<0.000000e+00> : vector<2x128xf32>
    %56 = tpu.matmul %31, %7, %cst_25 {dimension_numbers = #tpu.dot_dimension_numbers<[1], [0], [0], [1], [0, 0, 1, 1], [], []>} : vector<2x32xf32>, vector<32x128xf32>, vector<2x128xf32> -> vector<2x128xf32>
    %57 = arith.addf %55, %56 : vector<2x128xf32>
    %cst_26 = arith.constant 0.000000e+00 : f32
    %58 = vector.broadcast %cst_26 : f32 to vector<2x128xf32>
    %59 = arith.subf %58, %57 : vector<2x128xf32>
    %60 = math.exp %59 : vector<2x128xf32>
    %cst_27 = arith.constant 1.000000e+00 : f32
    %61 = vector.broadcast %cst_27 : f32 to vector<2x128xf32>
    %62 = arith.addf %61, %60 : vector<2x128xf32>
    %cst_28 = arith.constant 1.000000e+00 : f32
    %63 = vector.broadcast %cst_28 : f32 to vector<2x128xf32>
    %64 = arith.divf %63, %62 : vector<2x128xf32>
    %65 = vector.extract_strided_slice %64 {offsets = [0, 0], sizes = [2, 32], strides = [1, 1]} : vector<2x128xf32> to vector<2x32xf32>
    %66 = vector.extract_strided_slice %64 {offsets = [0, 32], sizes = [2, 32], strides = [1, 1]} : vector<2x128xf32> to vector<2x32xf32>
    %67 = vector.extract_strided_slice %64 {offsets = [0, 64], sizes = [2, 32], strides = [1, 1]} : vector<2x128xf32> to vector<2x32xf32>
    %68 = vector.extract_strided_slice %57 {offsets = [0, 96], sizes = [2, 32], strides = [1, 1]} : vector<2x128xf32> to vector<2x32xf32>
    %69 = math.tanh %68 : vector<2x32xf32>
    %70 = arith.mulf %66, %29 : vector<2x32xf32>
    %71 = arith.mulf %65, %69 : vector<2x32xf32>
    %72 = arith.addf %70, %71 : vector<2x32xf32>
    %73 = math.tanh %72 : vector<2x32xf32>
    %74 = arith.mulf %67, %73 : vector<2x32xf32>
    %cst_29 = arith.constant dense<0.000000e+00> : vector<2x128xf32>
    %75 = tpu.matmul %74, %8, %cst_29 {dimension_numbers = #tpu.dot_dimension_numbers<[1], [0], [0], [1], [0, 0, 1, 1], [], []>} : vector<2x32xf32>, vector<32x128xf32>, vector<2x128xf32> -> vector<2x128xf32>
    %76 = vector.broadcast %10 : vector<1x128xf32> to vector<2x128xf32>
    %77 = arith.addf %75, %76 : vector<2x128xf32>
    %cst_30 = arith.constant dense<0.000000e+00> : vector<2x128xf32>
    %78 = tpu.matmul %53, %9, %cst_30 {dimension_numbers = #tpu.dot_dimension_numbers<[1], [0], [0], [1], [0, 0, 1, 1], [], []>} : vector<2x32xf32>, vector<32x128xf32>, vector<2x128xf32> -> vector<2x128xf32>
    %79 = arith.addf %77, %78 : vector<2x128xf32>
    %cst_31 = arith.constant 0.000000e+00 : f32
    %80 = vector.broadcast %cst_31 : f32 to vector<2x128xf32>
    %81 = arith.subf %80, %79 : vector<2x128xf32>
    %82 = math.exp %81 : vector<2x128xf32>
    %cst_32 = arith.constant 1.000000e+00 : f32
    %83 = vector.broadcast %cst_32 : f32 to vector<2x128xf32>
    %84 = arith.addf %83, %82 : vector<2x128xf32>
    %cst_33 = arith.constant 1.000000e+00 : f32
    %85 = vector.broadcast %cst_33 : f32 to vector<2x128xf32>
    %86 = arith.divf %85, %84 : vector<2x128xf32>
    %87 = vector.extract_strided_slice %86 {offsets = [0, 0], sizes = [2, 32], strides = [1, 1]} : vector<2x128xf32> to vector<2x32xf32>
    %88 = vector.extract_strided_slice %86 {offsets = [0, 32], sizes = [2, 32], strides = [1, 1]} : vector<2x128xf32> to vector<2x32xf32>
    %89 = vector.extract_strided_slice %86 {offsets = [0, 64], sizes = [2, 32], strides = [1, 1]} : vector<2x128xf32> to vector<2x32xf32>
    %90 = vector.extract_strided_slice %79 {offsets = [0, 96], sizes = [2, 32], strides = [1, 1]} : vector<2x128xf32> to vector<2x32xf32>
    %91 = math.tanh %90 : vector<2x32xf32>
    %92 = arith.mulf %88, %51 : vector<2x32xf32>
    %93 = arith.mulf %87, %91 : vector<2x32xf32>
    %94 = arith.addf %92, %93 : vector<2x32xf32>
    %95 = math.tanh %94 : vector<2x32xf32>
    %96 = arith.mulf %89, %95 : vector<2x32xf32>
    %c2_34 = arith.constant 2 : index
    %c0_35 = arith.constant 0 : index
    %97 = vector.load %arg5[%c2_34, %c0_35] : memref<16x32xf32, #tpu.memory_space<vmem>>, vector<2x32xf32>
    tpu.vector_store %arg5[%c2_34, %c0_35], %96 {strides = array<i32>} : memref<16x32xf32, #tpu.memory_space<vmem>>, vector<2x32xf32>,
    %c4 = arith.constant 4 : index
    %c0_36 = arith.constant 0 : index
    %98 = vector.load %arg4[%c4, %c0_36] : memref<16x128xf32, #tpu.memory_space<vmem>>, vector<2x128xf32>
    %cst_37 = arith.constant dense<0.000000e+00> : vector<2x128xf32>
    %99 = tpu.matmul %74, %7, %cst_37 {dimension_numbers = #tpu.dot_dimension_numbers<[1], [0], [0], [1], [0, 0, 1, 1], [], []>} : vector<2x32xf32>, vector<32x128xf32>, vector<2x128xf32> -> vector<2x128xf32>
    %100 = arith.addf %98, %99 : vector<2x128xf32>
    %cst_38 = arith.constant 0.000000e+00 : f32
    %101 = vector.broadcast %cst_38 : f32 to vector<2x128xf32>
    %102 = arith.subf %101, %100 : vector<2x128xf32>
    %103 = math.exp %102 : vector<2x128xf32>
    %cst_39 = arith.constant 1.000000e+00 : f32
    %104 = vector.broadcast %cst_39 : f32 to vector<2x128xf32>
    %105 = arith.addf %104, %103 : vector<2x128xf32>
    %cst_40 = arith.constant 1.000000e+00 : f32
    %106 = vector.broadcast %cst_40 : f32 to vector<2x128xf32>
    %107 = arith.divf %106, %105 : vector<2x128xf32>
    %108 = vector.extract_strided_slice %107 {offsets = [0, 0], sizes = [2, 32], strides = [1, 1]} : vector<2x128xf32> to vector<2x32xf32>
    %109 = vector.extract_strided_slice %107 {offsets = [0, 32], sizes = [2, 32], strides = [1, 1]} : vector<2x128xf32> to vector<2x32xf32>
    %110 = vector.extract_strided_slice %107 {offsets = [0, 64], sizes = [2, 32], strides = [1, 1]} : vector<2x128xf32> to vector<2x32xf32>
    %111 = vector.extract_strided_slice %100 {offsets = [0, 96], sizes = [2, 32], strides = [1, 1]} : vector<2x128xf32> to vector<2x32xf32>
    %112 = math.tanh %111 : vector<2x32xf32>
    %113 = arith.mulf %109, %72 : vector<2x32xf32>
    %114 = arith.mulf %108, %112 : vector<2x32xf32>
    %115 = arith.addf %113, %114 : vector<2x32xf32>
    %116 = math.tanh %115 : vector<2x32xf32>
    %117 = arith.mulf %110, %116 : vector<2x32xf32>
    %cst_41 = arith.constant dense<0.000000e+00> : vector<2x128xf32>
    %118 = tpu.matmul %117, %8, %cst_41 {dimension_numbers = #tpu.dot_dimension_numbers<[1], [0], [0], [1], [0, 0, 1, 1], [], []>} : vector<2x32xf32>, vector<32x128xf32>, vector<2x128xf32> -> vector<2x128xf32>
    %119 = vector.broadcast %10 : vector<1x128xf32> to vector<2x128xf32>
    %120 = arith.addf %118, %119 : vector<2x128xf32>
    %cst_42 = arith.constant dense<0.000000e+00> : vector<2x128xf32>
    %121 = tpu.matmul %96, %9, %cst_42 {dimension_numbers = #tpu.dot_dimension_numbers<[1], [0], [0], [1], [0, 0, 1, 1], [], []>} : vector<2x32xf32>, vector<32x128xf32>, vector<2x128xf32> -> vector<2x128xf32>
    %122 = arith.addf %120, %121 : vector<2x128xf32>
    %cst_43 = arith.constant 0.000000e+00 : f32
    %123 = vector.broadcast %cst_43 : f32 to vector<2x128xf32>
    %124 = arith.subf %123, %122 : vector<2x128xf32>
    %125 = math.exp %124 : vector<2x128xf32>
    %cst_44 = arith.constant 1.000000e+00 : f32
    %126 = vector.broadcast %cst_44 : f32 to vector<2x128xf32>
    %127 = arith.addf %126, %125 : vector<2x128xf32>
    %cst_45 = arith.constant 1.000000e+00 : f32
    %128 = vector.broadcast %cst_45 : f32 to vector<2x128xf32>
    %129 = arith.divf %128, %127 : vector<2x128xf32>
    %130 = vector.extract_strided_slice %129 {offsets = [0, 0], sizes = [2, 32], strides = [1, 1]} : vector<2x128xf32> to vector<2x32xf32>
    %131 = vector.extract_strided_slice %129 {offsets = [0, 32], sizes = [2, 32], strides = [1, 1]} : vector<2x128xf32> to vector<2x32xf32>
    %132 = vector.extract_strided_slice %129 {offsets = [0, 64], sizes = [2, 32], strides = [1, 1]} : vector<2x128xf32> to vector<2x32xf32>
    %133 = vector.extract_strided_slice %122 {offsets = [0, 96], sizes = [2, 32], strides = [1, 1]} : vector<2x128xf32> to vector<2x32xf32>
    %134 = math.tanh %133 : vector<2x32xf32>
    %135 = arith.mulf %131, %94 : vector<2x32xf32>
    %136 = arith.mulf %130, %134 : vector<2x32xf32>
    %137 = arith.addf %135, %136 : vector<2x32xf32>
    %138 = math.tanh %137 : vector<2x32xf32>
    %139 = arith.mulf %132, %138 : vector<2x32xf32>
    %c4_46 = arith.constant 4 : index
    %c0_47 = arith.constant 0 : index
    %140 = vector.load %arg5[%c4_46, %c0_47] : memref<16x32xf32, #tpu.memory_space<vmem>>, vector<2x32xf32>
    tpu.vector_store %arg5[%c4_46, %c0_47], %139 {strides = array<i32>} : memref<16x32xf32, #tpu.memory_space<vmem>>, vector<2x32xf32>,
    %c6 = arith.constant 6 : index
    %c0_48 = arith.constant 0 : index
    %141 = vector.load %arg4[%c6, %c0_48] : memref<16x128xf32, #tpu.memory_space<vmem>>, vector<2x128xf32>
    %cst_49 = arith.constant dense<0.000000e+00> : vector<2x128xf32>
    %142 = tpu.matmul %117, %7, %cst_49 {dimension_numbers = #tpu.dot_dimension_numbers<[1], [0], [0], [1], [0, 0, 1, 1], [], []>} : vector<2x32xf32>, vector<32x128xf32>, vector<2x128xf32> -> vector<2x128xf32>
    %143 = arith.addf %141, %142 : vector<2x128xf32>
    %cst_50 = arith.constant 0.000000e+00 : f32
    %144 = vector.broadcast %cst_50 : f32 to vector<2x128xf32>
    %145 = arith.subf %144, %143 : vector<2x128xf32>
    %146 = math.exp %145 : vector<2x128xf32>
    %cst_51 = arith.constant 1.000000e+00 : f32
    %147 = vector.broadcast %cst_51 : f32 to vector<2x128xf32>
    %148 = arith.addf %147, %146 : vector<2x128xf32>
    %cst_52 = arith.constant 1.000000e+00 : f32
    %149 = vector.broadcast %cst_52 : f32 to vector<2x128xf32>
    %150 = arith.divf %149, %148 : vector<2x128xf32>
    %151 = vector.extract_strided_slice %150 {offsets = [0, 0], sizes = [2, 32], strides = [1, 1]} : vector<2x128xf32> to vector<2x32xf32>
    %152 = vector.extract_strided_slice %150 {offsets = [0, 32], sizes = [2, 32], strides = [1, 1]} : vector<2x128xf32> to vector<2x32xf32>
    %153 = vector.extract_strided_slice %150 {offsets = [0, 64], sizes = [2, 32], strides = [1, 1]} : vector<2x128xf32> to vector<2x32xf32>
    %154 = vector.extract_strided_slice %143 {offsets = [0, 96], sizes = [2, 32], strides = [1, 1]} : vector<2x128xf32> to vector<2x32xf32>
    %155 = math.tanh %154 : vector<2x32xf32>
    %156 = arith.mulf %152, %115 : vector<2x32xf32>
    %157 = arith.mulf %151, %155 : vector<2x32xf32>
    %158 = arith.addf %156, %157 : vector<2x32xf32>
    %159 = math.tanh %158 : vector<2x32xf32>
    %160 = arith.mulf %153, %159 : vector<2x32xf32>
    %cst_53 = arith.constant dense<0.000000e+00> : vector<2x128xf32>
    %161 = tpu.matmul %160, %8, %cst_53 {dimension_numbers = #tpu.dot_dimension_numbers<[1], [0], [0], [1], [0, 0, 1, 1], [], []>} : vector<2x32xf32>, vector<32x128xf32>, vector<2x128xf32> -> vector<2x128xf32>
    %162 = vector.broadcast %10 : vector<1x128xf32> to vector<2x128xf32>
    %163 = arith.addf %161, %162 : vector<2x128xf32>
    %cst_54 = arith.constant dense<0.000000e+00> : vector<2x128xf32>
    %164 = tpu.matmul %139, %9, %cst_54 {dimension_numbers = #tpu.dot_dimension_numbers<[1], [0], [0], [1], [0, 0, 1, 1], [], []>} : vector<2x32xf32>, vector<32x128xf32>, vector<2x128xf32> -> vector<2x128xf32>
    %165 = arith.addf %163, %164 : vector<2x128xf32>
    %cst_55 = arith.constant 0.000000e+00 : f32
    %166 = vector.broadcast %cst_55 : f32 to vector<2x128xf32>
    %167 = arith.subf %166, %165 : vector<2x128xf32>
    %168 = math.exp %167 : vector<2x128xf32>
    %cst_56 = arith.constant 1.000000e+00 : f32
    %169 = vector.broadcast %cst_56 : f32 to vector<2x128xf32>
    %170 = arith.addf %169, %168 : vector<2x128xf32>
    %cst_57 = arith.constant 1.000000e+00 : f32
    %171 = vector.broadcast %cst_57 : f32 to vector<2x128xf32>
    %172 = arith.divf %171, %170 : vector<2x128xf32>
    %173 = vector.extract_strided_slice %172 {offsets = [0, 0], sizes = [2, 32], strides = [1, 1]} : vector<2x128xf32> to vector<2x32xf32>
    %174 = vector.extract_strided_slice %172 {offsets = [0, 32], sizes = [2, 32], strides = [1, 1]} : vector<2x128xf32> to vector<2x32xf32>
    %175 = vector.extract_strided_slice %172 {offsets = [0, 64], sizes = [2, 32], strides = [1, 1]} : vector<2x128xf32> to vector<2x32xf32>
    %176 = vector.extract_strided_slice %165 {offsets = [0, 96], sizes = [2, 32], strides = [1, 1]} : vector<2x128xf32> to vector<2x32xf32>
    %177 = math.tanh %176 : vector<2x32xf32>
    %178 = arith.mulf %174, %137 : vector<2x32xf32>
    %179 = arith.mulf %173, %177 : vector<2x32xf32>
    %180 = arith.addf %178, %179 : vector<2x32xf32>
    %181 = math.tanh %180 : vector<2x32xf32>
    %182 = arith.mulf %175, %181 : vector<2x32xf32>
    %c6_58 = arith.constant 6 : index
    %c0_59 = arith.constant 0 : index
    %183 = vector.load %arg5[%c6_58, %c0_59] : memref<16x32xf32, #tpu.memory_space<vmem>>, vector<2x32xf32>
    tpu.vector_store %arg5[%c6_58, %c0_59], %182 {strides = array<i32>} : memref<16x32xf32, #tpu.memory_space<vmem>>, vector<2x32xf32>,
    %c8_60 = arith.constant 8 : index
    %c0_61 = arith.constant 0 : index
    %184 = vector.load %arg4[%c8_60, %c0_61] : memref<16x128xf32, #tpu.memory_space<vmem>>, vector<2x128xf32>
    %cst_62 = arith.constant dense<0.000000e+00> : vector<2x128xf32>
    %185 = tpu.matmul %160, %7, %cst_62 {dimension_numbers = #tpu.dot_dimension_numbers<[1], [0], [0], [1], [0, 0, 1, 1], [], []>} : vector<2x32xf32>, vector<32x128xf32>, vector<2x128xf32> -> vector<2x128xf32>
    %186 = arith.addf %184, %185 : vector<2x128xf32>
    %cst_63 = arith.constant 0.000000e+00 : f32
    %187 = vector.broadcast %cst_63 : f32 to vector<2x128xf32>
    %188 = arith.subf %187, %186 : vector<2x128xf32>
    %189 = math.exp %188 : vector<2x128xf32>
    %cst_64 = arith.constant 1.000000e+00 : f32
    %190 = vector.broadcast %cst_64 : f32 to vector<2x128xf32>
    %191 = arith.addf %190, %189 : vector<2x128xf32>
    %cst_65 = arith.constant 1.000000e+00 : f32
    %192 = vector.broadcast %cst_65 : f32 to vector<2x128xf32>
    %193 = arith.divf %192, %191 : vector<2x128xf32>
    %194 = vector.extract_strided_slice %193 {offsets = [0, 0], sizes = [2, 32], strides = [1, 1]} : vector<2x128xf32> to vector<2x32xf32>
    %195 = vector.extract_strided_slice %193 {offsets = [0, 32], sizes = [2, 32], strides = [1, 1]} : vector<2x128xf32> to vector<2x32xf32>
    %196 = vector.extract_strided_slice %193 {offsets = [0, 64], sizes = [2, 32], strides = [1, 1]} : vector<2x128xf32> to vector<2x32xf32>
    %197 = vector.extract_strided_slice %186 {offsets = [0, 96], sizes = [2, 32], strides = [1, 1]} : vector<2x128xf32> to vector<2x32xf32>
    %198 = math.tanh %197 : vector<2x32xf32>
    %199 = arith.mulf %195, %158 : vector<2x32xf32>
    %200 = arith.mulf %194, %198 : vector<2x32xf32>
    %201 = arith.addf %199, %200 : vector<2x32xf32>
    %202 = math.tanh %201 : vector<2x32xf32>
    %203 = arith.mulf %196, %202 : vector<2x32xf32>
    %cst_66 = arith.constant dense<0.000000e+00> : vector<2x128xf32>
    %204 = tpu.matmul %203, %8, %cst_66 {dimension_numbers = #tpu.dot_dimension_numbers<[1], [0], [0], [1], [0, 0, 1, 1], [], []>} : vector<2x32xf32>, vector<32x128xf32>, vector<2x128xf32> -> vector<2x128xf32>
    %205 = vector.broadcast %10 : vector<1x128xf32> to vector<2x128xf32>
    %206 = arith.addf %204, %205 : vector<2x128xf32>
    %cst_67 = arith.constant dense<0.000000e+00> : vector<2x128xf32>
    %207 = tpu.matmul %182, %9, %cst_67 {dimension_numbers = #tpu.dot_dimension_numbers<[1], [0], [0], [1], [0, 0, 1, 1], [], []>} : vector<2x32xf32>, vector<32x128xf32>, vector<2x128xf32> -> vector<2x128xf32>
    %208 = arith.addf %206, %207 : vector<2x128xf32>
    %cst_68 = arith.constant 0.000000e+00 : f32
    %209 = vector.broadcast %cst_68 : f32 to vector<2x128xf32>
    %210 = arith.subf %209, %208 : vector<2x128xf32>
    %211 = math.exp %210 : vector<2x128xf32>
    %cst_69 = arith.constant 1.000000e+00 : f32
    %212 = vector.broadcast %cst_69 : f32 to vector<2x128xf32>
    %213 = arith.addf %212, %211 : vector<2x128xf32>
    %cst_70 = arith.constant 1.000000e+00 : f32
    %214 = vector.broadcast %cst_70 : f32 to vector<2x128xf32>
    %215 = arith.divf %214, %213 : vector<2x128xf32>
    %216 = vector.extract_strided_slice %215 {offsets = [0, 0], sizes = [2, 32], strides = [1, 1]} : vector<2x128xf32> to vector<2x32xf32>
    %217 = vector.extract_strided_slice %215 {offsets = [0, 32], sizes = [2, 32], strides = [1, 1]} : vector<2x128xf32> to vector<2x32xf32>
    %218 = vector.extract_strided_slice %215 {offsets = [0, 64], sizes = [2, 32], strides = [1, 1]} : vector<2x128xf32> to vector<2x32xf32>
    %219 = vector.extract_strided_slice %208 {offsets = [0, 96], sizes = [2, 32], strides = [1, 1]} : vector<2x128xf32> to vector<2x32xf32>
    %220 = math.tanh %219 : vector<2x32xf32>
    %221 = arith.mulf %217, %180 : vector<2x32xf32>
    %222 = arith.mulf %216, %220 : vector<2x32xf32>
    %223 = arith.addf %221, %222 : vector<2x32xf32>
    %224 = math.tanh %223 : vector<2x32xf32>
    %225 = arith.mulf %218, %224 : vector<2x32xf32>
    %c8_71 = arith.constant 8 : index
    %c0_72 = arith.constant 0 : index
    %226 = vector.load %arg5[%c8_71, %c0_72] : memref<16x32xf32, #tpu.memory_space<vmem>>, vector<2x32xf32>
    tpu.vector_store %arg5[%c8_71, %c0_72], %225 {strides = array<i32>} : memref<16x32xf32, #tpu.memory_space<vmem>>, vector<2x32xf32>,
    %c10 = arith.constant 10 : index
    %c0_73 = arith.constant 0 : index
    %227 = vector.load %arg4[%c10, %c0_73] : memref<16x128xf32, #tpu.memory_space<vmem>>, vector<2x128xf32>
    %cst_74 = arith.constant dense<0.000000e+00> : vector<2x128xf32>
    %228 = tpu.matmul %203, %7, %cst_74 {dimension_numbers = #tpu.dot_dimension_numbers<[1], [0], [0], [1], [0, 0, 1, 1], [], []>} : vector<2x32xf32>, vector<32x128xf32>, vector<2x128xf32> -> vector<2x128xf32>
    %229 = arith.addf %227, %228 : vector<2x128xf32>
    %cst_75 = arith.constant 0.000000e+00 : f32
    %230 = vector.broadcast %cst_75 : f32 to vector<2x128xf32>
    %231 = arith.subf %230, %229 : vector<2x128xf32>
    %232 = math.exp %231 : vector<2x128xf32>
    %cst_76 = arith.constant 1.000000e+00 : f32
    %233 = vector.broadcast %cst_76 : f32 to vector<2x128xf32>
    %234 = arith.addf %233, %232 : vector<2x128xf32>
    %cst_77 = arith.constant 1.000000e+00 : f32
    %235 = vector.broadcast %cst_77 : f32 to vector<2x128xf32>
    %236 = arith.divf %235, %234 : vector<2x128xf32>
    %237 = vector.extract_strided_slice %236 {offsets = [0, 0], sizes = [2, 32], strides = [1, 1]} : vector<2x128xf32> to vector<2x32xf32>
    %238 = vector.extract_strided_slice %236 {offsets = [0, 32], sizes = [2, 32], strides = [1, 1]} : vector<2x128xf32> to vector<2x32xf32>
    %239 = vector.extract_strided_slice %236 {offsets = [0, 64], sizes = [2, 32], strides = [1, 1]} : vector<2x128xf32> to vector<2x32xf32>
    %240 = vector.extract_strided_slice %229 {offsets = [0, 96], sizes = [2, 32], strides = [1, 1]} : vector<2x128xf32> to vector<2x32xf32>
    %241 = math.tanh %240 : vector<2x32xf32>
    %242 = arith.mulf %238, %201 : vector<2x32xf32>
    %243 = arith.mulf %237, %241 : vector<2x32xf32>
    %244 = arith.addf %242, %243 : vector<2x32xf32>
    %245 = math.tanh %244 : vector<2x32xf32>
    %246 = arith.mulf %239, %245 : vector<2x32xf32>
    %cst_78 = arith.constant dense<0.000000e+00> : vector<2x128xf32>
    %247 = tpu.matmul %246, %8, %cst_78 {dimension_numbers = #tpu.dot_dimension_numbers<[1], [0], [0], [1], [0, 0, 1, 1], [], []>} : vector<2x32xf32>, vector<32x128xf32>, vector<2x128xf32> -> vector<2x128xf32>
    %248 = vector.broadcast %10 : vector<1x128xf32> to vector<2x128xf32>
    %249 = arith.addf %247, %248 : vector<2x128xf32>
    %cst_79 = arith.constant dense<0.000000e+00> : vector<2x128xf32>
    %250 = tpu.matmul %225, %9, %cst_79 {dimension_numbers = #tpu.dot_dimension_numbers<[1], [0], [0], [1], [0, 0, 1, 1], [], []>} : vector<2x32xf32>, vector<32x128xf32>, vector<2x128xf32> -> vector<2x128xf32>
    %251 = arith.addf %249, %250 : vector<2x128xf32>
    %cst_80 = arith.constant 0.000000e+00 : f32
    %252 = vector.broadcast %cst_80 : f32 to vector<2x128xf32>
    %253 = arith.subf %252, %251 : vector<2x128xf32>
    %254 = math.exp %253 : vector<2x128xf32>
    %cst_81 = arith.constant 1.000000e+00 : f32
    %255 = vector.broadcast %cst_81 : f32 to vector<2x128xf32>
    %256 = arith.addf %255, %254 : vector<2x128xf32>
    %cst_82 = arith.constant 1.000000e+00 : f32
    %257 = vector.broadcast %cst_82 : f32 to vector<2x128xf32>
    %258 = arith.divf %257, %256 : vector<2x128xf32>
    %259 = vector.extract_strided_slice %258 {offsets = [0, 0], sizes = [2, 32], strides = [1, 1]} : vector<2x128xf32> to vector<2x32xf32>
    %260 = vector.extract_strided_slice %258 {offsets = [0, 32], sizes = [2, 32], strides = [1, 1]} : vector<2x128xf32> to vector<2x32xf32>
    %261 = vector.extract_strided_slice %258 {offsets = [0, 64], sizes = [2, 32], strides = [1, 1]} : vector<2x128xf32> to vector<2x32xf32>
    %262 = vector.extract_strided_slice %251 {offsets = [0, 96], sizes = [2, 32], strides = [1, 1]} : vector<2x128xf32> to vector<2x32xf32>
    %263 = math.tanh %262 : vector<2x32xf32>
    %264 = arith.mulf %260, %223 : vector<2x32xf32>
    %265 = arith.mulf %259, %263 : vector<2x32xf32>
    %266 = arith.addf %264, %265 : vector<2x32xf32>
    %267 = math.tanh %266 : vector<2x32xf32>
    %268 = arith.mulf %261, %267 : vector<2x32xf32>
    %c10_83 = arith.constant 10 : index
    %c0_84 = arith.constant 0 : index
    %269 = vector.load %arg5[%c10_83, %c0_84] : memref<16x32xf32, #tpu.memory_space<vmem>>, vector<2x32xf32>
    tpu.vector_store %arg5[%c10_83, %c0_84], %268 {strides = array<i32>} : memref<16x32xf32, #tpu.memory_space<vmem>>, vector<2x32xf32>,
    %c12 = arith.constant 12 : index
    %c0_85 = arith.constant 0 : index
    %270 = vector.load %arg4[%c12, %c0_85] : memref<16x128xf32, #tpu.memory_space<vmem>>, vector<2x128xf32>
    %cst_86 = arith.constant dense<0.000000e+00> : vector<2x128xf32>
    %271 = tpu.matmul %246, %7, %cst_86 {dimension_numbers = #tpu.dot_dimension_numbers<[1], [0], [0], [1], [0, 0, 1, 1], [], []>} : vector<2x32xf32>, vector<32x128xf32>, vector<2x128xf32> -> vector<2x128xf32>
    %272 = arith.addf %270, %271 : vector<2x128xf32>
    %cst_87 = arith.constant 0.000000e+00 : f32
    %273 = vector.broadcast %cst_87 : f32 to vector<2x128xf32>
    %274 = arith.subf %273, %272 : vector<2x128xf32>
    %275 = math.exp %274 : vector<2x128xf32>
    %cst_88 = arith.constant 1.000000e+00 : f32
    %276 = vector.broadcast %cst_88 : f32 to vector<2x128xf32>
    %277 = arith.addf %276, %275 : vector<2x128xf32>
    %cst_89 = arith.constant 1.000000e+00 : f32
    %278 = vector.broadcast %cst_89 : f32 to vector<2x128xf32>
    %279 = arith.divf %278, %277 : vector<2x128xf32>
    %280 = vector.extract_strided_slice %279 {offsets = [0, 0], sizes = [2, 32], strides = [1, 1]} : vector<2x128xf32> to vector<2x32xf32>
    %281 = vector.extract_strided_slice %279 {offsets = [0, 32], sizes = [2, 32], strides = [1, 1]} : vector<2x128xf32> to vector<2x32xf32>
    %282 = vector.extract_strided_slice %279 {offsets = [0, 64], sizes = [2, 32], strides = [1, 1]} : vector<2x128xf32> to vector<2x32xf32>
    %283 = vector.extract_strided_slice %272 {offsets = [0, 96], sizes = [2, 32], strides = [1, 1]} : vector<2x128xf32> to vector<2x32xf32>
    %284 = math.tanh %283 : vector<2x32xf32>
    %285 = arith.mulf %281, %244 : vector<2x32xf32>
    %286 = arith.mulf %280, %284 : vector<2x32xf32>
    %287 = arith.addf %285, %286 : vector<2x32xf32>
    %288 = math.tanh %287 : vector<2x32xf32>
    %289 = arith.mulf %282, %288 : vector<2x32xf32>
    %cst_90 = arith.constant dense<0.000000e+00> : vector<2x128xf32>
    %290 = tpu.matmul %289, %8, %cst_90 {dimension_numbers = #tpu.dot_dimension_numbers<[1], [0], [0], [1], [0, 0, 1, 1], [], []>} : vector<2x32xf32>, vector<32x128xf32>, vector<2x128xf32> -> vector<2x128xf32>
    %291 = vector.broadcast %10 : vector<1x128xf32> to vector<2x128xf32>
    %292 = arith.addf %290, %291 : vector<2x128xf32>
    %cst_91 = arith.constant dense<0.000000e+00> : vector<2x128xf32>
    %293 = tpu.matmul %268, %9, %cst_91 {dimension_numbers = #tpu.dot_dimension_numbers<[1], [0], [0], [1], [0, 0, 1, 1], [], []>} : vector<2x32xf32>, vector<32x128xf32>, vector<2x128xf32> -> vector<2x128xf32>
    %294 = arith.addf %292, %293 : vector<2x128xf32>
    %cst_92 = arith.constant 0.000000e+00 : f32
    %295 = vector.broadcast %cst_92 : f32 to vector<2x128xf32>
    %296 = arith.subf %295, %294 : vector<2x128xf32>
    %297 = math.exp %296 : vector<2x128xf32>
    %cst_93 = arith.constant 1.000000e+00 : f32
    %298 = vector.broadcast %cst_93 : f32 to vector<2x128xf32>
    %299 = arith.addf %298, %297 : vector<2x128xf32>
    %cst_94 = arith.constant 1.000000e+00 : f32
    %300 = vector.broadcast %cst_94 : f32 to vector<2x128xf32>
    %301 = arith.divf %300, %299 : vector<2x128xf32>
    %302 = vector.extract_strided_slice %301 {offsets = [0, 0], sizes = [2, 32], strides = [1, 1]} : vector<2x128xf32> to vector<2x32xf32>
    %303 = vector.extract_strided_slice %301 {offsets = [0, 32], sizes = [2, 32], strides = [1, 1]} : vector<2x128xf32> to vector<2x32xf32>
    %304 = vector.extract_strided_slice %301 {offsets = [0, 64], sizes = [2, 32], strides = [1, 1]} : vector<2x128xf32> to vector<2x32xf32>
    %305 = vector.extract_strided_slice %294 {offsets = [0, 96], sizes = [2, 32], strides = [1, 1]} : vector<2x128xf32> to vector<2x32xf32>
    %306 = math.tanh %305 : vector<2x32xf32>
    %307 = arith.mulf %303, %266 : vector<2x32xf32>
    %308 = arith.mulf %302, %306 : vector<2x32xf32>
    %309 = arith.addf %307, %308 : vector<2x32xf32>
    %310 = math.tanh %309 : vector<2x32xf32>
    %311 = arith.mulf %304, %310 : vector<2x32xf32>
    %c12_95 = arith.constant 12 : index
    %c0_96 = arith.constant 0 : index
    %312 = vector.load %arg5[%c12_95, %c0_96] : memref<16x32xf32, #tpu.memory_space<vmem>>, vector<2x32xf32>
    tpu.vector_store %arg5[%c12_95, %c0_96], %311 {strides = array<i32>} : memref<16x32xf32, #tpu.memory_space<vmem>>, vector<2x32xf32>,
    %c14 = arith.constant 14 : index
    %c0_97 = arith.constant 0 : index
    %313 = vector.load %arg4[%c14, %c0_97] : memref<16x128xf32, #tpu.memory_space<vmem>>, vector<2x128xf32>
    %cst_98 = arith.constant dense<0.000000e+00> : vector<2x128xf32>
    %314 = tpu.matmul %289, %7, %cst_98 {dimension_numbers = #tpu.dot_dimension_numbers<[1], [0], [0], [1], [0, 0, 1, 1], [], []>} : vector<2x32xf32>, vector<32x128xf32>, vector<2x128xf32> -> vector<2x128xf32>
    %315 = arith.addf %313, %314 : vector<2x128xf32>
    %cst_99 = arith.constant 0.000000e+00 : f32
    %316 = vector.broadcast %cst_99 : f32 to vector<2x128xf32>
    %317 = arith.subf %316, %315 : vector<2x128xf32>
    %318 = math.exp %317 : vector<2x128xf32>
    %cst_100 = arith.constant 1.000000e+00 : f32
    %319 = vector.broadcast %cst_100 : f32 to vector<2x128xf32>
    %320 = arith.addf %319, %318 : vector<2x128xf32>
    %cst_101 = arith.constant 1.000000e+00 : f32
    %321 = vector.broadcast %cst_101 : f32 to vector<2x128xf32>
    %322 = arith.divf %321, %320 : vector<2x128xf32>
    %323 = vector.extract_strided_slice %322 {offsets = [0, 0], sizes = [2, 32], strides = [1, 1]} : vector<2x128xf32> to vector<2x32xf32>
    %324 = vector.extract_strided_slice %322 {offsets = [0, 32], sizes = [2, 32], strides = [1, 1]} : vector<2x128xf32> to vector<2x32xf32>
    %325 = vector.extract_strided_slice %322 {offsets = [0, 64], sizes = [2, 32], strides = [1, 1]} : vector<2x128xf32> to vector<2x32xf32>
    %326 = vector.extract_strided_slice %315 {offsets = [0, 96], sizes = [2, 32], strides = [1, 1]} : vector<2x128xf32> to vector<2x32xf32>
    %327 = math.tanh %326 : vector<2x32xf32>
    %328 = arith.mulf %324, %287 : vector<2x32xf32>
    %329 = arith.mulf %323, %327 : vector<2x32xf32>
    %330 = arith.addf %328, %329 : vector<2x32xf32>
    %331 = math.tanh %330 : vector<2x32xf32>
    %332 = arith.mulf %325, %331 : vector<2x32xf32>
    %cst_102 = arith.constant dense<0.000000e+00> : vector<2x128xf32>
    %333 = tpu.matmul %332, %8, %cst_102 {dimension_numbers = #tpu.dot_dimension_numbers<[1], [0], [0], [1], [0, 0, 1, 1], [], []>} : vector<2x32xf32>, vector<32x128xf32>, vector<2x128xf32> -> vector<2x128xf32>
    %334 = vector.broadcast %10 : vector<1x128xf32> to vector<2x128xf32>
    %335 = arith.addf %333, %334 : vector<2x128xf32>
    %cst_103 = arith.constant dense<0.000000e+00> : vector<2x128xf32>
    %336 = tpu.matmul %311, %9, %cst_103 {dimension_numbers = #tpu.dot_dimension_numbers<[1], [0], [0], [1], [0, 0, 1, 1], [], []>} : vector<2x32xf32>, vector<32x128xf32>, vector<2x128xf32> -> vector<2x128xf32>
    %337 = arith.addf %335, %336 : vector<2x128xf32>
    %cst_104 = arith.constant 0.000000e+00 : f32
    %338 = vector.broadcast %cst_104 : f32 to vector<2x128xf32>
    %339 = arith.subf %338, %337 : vector<2x128xf32>
    %340 = math.exp %339 : vector<2x128xf32>
    %cst_105 = arith.constant 1.000000e+00 : f32
    %341 = vector.broadcast %cst_105 : f32 to vector<2x128xf32>
    %342 = arith.addf %341, %340 : vector<2x128xf32>
    %cst_106 = arith.constant 1.000000e+00 : f32
    %343 = vector.broadcast %cst_106 : f32 to vector<2x128xf32>
    %344 = arith.divf %343, %342 : vector<2x128xf32>
    %345 = vector.extract_strided_slice %344 {offsets = [0, 0], sizes = [2, 32], strides = [1, 1]} : vector<2x128xf32> to vector<2x32xf32>
    %346 = vector.extract_strided_slice %344 {offsets = [0, 32], sizes = [2, 32], strides = [1, 1]} : vector<2x128xf32> to vector<2x32xf32>
    %347 = vector.extract_strided_slice %344 {offsets = [0, 64], sizes = [2, 32], strides = [1, 1]} : vector<2x128xf32> to vector<2x32xf32>
    %348 = vector.extract_strided_slice %337 {offsets = [0, 96], sizes = [2, 32], strides = [1, 1]} : vector<2x128xf32> to vector<2x32xf32>
    %349 = math.tanh %348 : vector<2x32xf32>
    %350 = arith.mulf %346, %309 : vector<2x32xf32>
    %351 = arith.mulf %345, %349 : vector<2x32xf32>
    %352 = arith.addf %350, %351 : vector<2x32xf32>
    %353 = math.tanh %352 : vector<2x32xf32>
    %354 = arith.mulf %347, %353 : vector<2x32xf32>
    %c14_107 = arith.constant 14 : index
    %c0_108 = arith.constant 0 : index
    %355 = vector.load %arg5[%c14_107, %c0_108] : memref<16x32xf32, #tpu.memory_space<vmem>>, vector<2x32xf32>
    tpu.vector_store %arg5[%c14_107, %c0_108], %354 {strides = array<i32>} : memref<16x32xf32, #tpu.memory_space<vmem>>, vector<2x32xf32>,
    %c0_109 = arith.constant 0 : index
    %c0_110 = arith.constant 0 : index
    %356 = vector.load %arg5[%c0_109, %c0_110] : memref<16x32xf32, #tpu.memory_space<vmem>>, vector<16x32xf32>
    %c120 = arith.constant 120 : index
    %c0_111 = arith.constant 0 : index
    %357 = vector.load %arg2[%c120, %c0_111] : memref<432x128xf32, #tpu.memory_space<vmem>>, vector<32x128xf32>
    %cst_112 = arith.constant dense<0.000000e+00> : vector<16x128xf32>
    %358 = tpu.matmul %356, %357, %cst_112 {dimension_numbers = #tpu.dot_dimension_numbers<[1], [0], [0], [1], [0, 0, 1, 1], [], []>} : vector<16x32xf32>, vector<32x128xf32>, vector<16x128xf32> -> vector<16x128xf32>
    %c152 = arith.constant 152 : index
    %c0_113 = arith.constant 0 : index
    %359 = vector.load %arg2[%c152, %c0_113] : memref<432x128xf32, #tpu.memory_space<vmem>>, vector<1x128xf32>
    %360 = vector.broadcast %359 : vector<1x128xf32> to vector<16x128xf32>
    %361 = arith.addf %358, %360 : vector<16x128xf32>
    %cst_114 = arith.constant 0.000000e+00 : f32
    %362 = vector.broadcast %cst_114 : f32 to vector<16x128xf32>
    %363 = arith.cmpf ogt, %361, %362 : vector<16x128xf32>
    %cst_115 = arith.constant 0.00999999977 : f32
    %364 = vector.broadcast %cst_115 : f32 to vector<16x128xf32>
    %365 = arith.mulf %364, %361 : vector<16x128xf32>
    %366 = arith.select %363, %361, %365 : vector<16x128xi1>, vector<16x128xf32>
    %c160 = arith.constant 160 : index
    %c0_116 = arith.constant 0 : index
    %367 = vector.load %arg2[%c160, %c0_116] : memref<432x128xf32, #tpu.memory_space<vmem>>, vector<128x128xf32>
    %cst_117 = arith.constant dense<0.000000e+00> : vector<16x128xf32>
    %368 = tpu.matmul %366, %367, %cst_117 {dimension_numbers = #tpu.dot_dimension_numbers<[1], [0], [0], [1], [0, 0, 1, 1], [], []>} : vector<16x128xf32>, vector<128x128xf32>, vector<16x128xf32> -> vector<16x128xf32>
    %c288 = arith.constant 288 : index
    %c0_118 = arith.constant 0 : index
    %369 = vector.load %arg2[%c288, %c0_118] : memref<432x128xf32, #tpu.memory_space<vmem>>, vector<1x128xf32>
    %370 = vector.broadcast %369 : vector<1x128xf32> to vector<16x128xf32>
    %371 = arith.addf %368, %370 : vector<16x128xf32>
    %cst_119 = arith.constant 0.000000e+00 : f32
    %372 = vector.broadcast %cst_119 : f32 to vector<16x128xf32>
    %373 = arith.cmpf ogt, %371, %372 : vector<16x128xf32>
    %cst_120 = arith.constant 0.00999999977 : f32
    %374 = vector.broadcast %cst_120 : f32 to vector<16x128xf32>
    %375 = arith.mulf %374, %371 : vector<16x128xf32>
    %376 = arith.select %373, %371, %375 : vector<16x128xi1>, vector<16x128xf32>
    %c296 = arith.constant 296 : index
    %c0_121 = arith.constant 0 : index
    %377 = vector.load %arg2[%c296, %c0_121] : memref<432x128xf32, #tpu.memory_space<vmem>>, vector<128x128xf32>
    %cst_122 = arith.constant dense<0.000000e+00> : vector<16x128xf32>
    %378 = tpu.matmul %376, %377, %cst_122 {dimension_numbers = #tpu.dot_dimension_numbers<[1], [0], [0], [1], [0, 0, 1, 1], [], []>} : vector<16x128xf32>, vector<128x128xf32>, vector<16x128xf32> -> vector<16x128xf32>
    %c424 = arith.constant 424 : index
    %c0_123 = arith.constant 0 : index
    %379 = vector.load %arg2[%c424, %c0_123] : memref<432x128xf32, #tpu.memory_space<vmem>>, vector<1x128xf32>
    %380 = vector.broadcast %379 : vector<1x128xf32> to vector<16x128xf32>
    %381 = arith.addf %378, %380 : vector<16x128xf32>
    %c0_124 = arith.constant 0 : index
    %c0_125 = arith.constant 0 : index
    %382 = vector.load %arg3[%c0_124, %c0_125] : memref<16x128xf32, #tpu.memory_space<vmem>>, vector<16x128xf32>
    tpu.vector_store %arg3[%c0_124, %c0_125], %381 {strides = array<i32>} : memref<16x128xf32, #tpu.memory_space<vmem>>, vector<16x128xf32>,
    return
  }
  func.func @transform_0(%arg0: i32) -> (i32, i32) {
    %c0_i32 = arith.constant 0 : i32
    %c0_i32_0 = arith.constant 0 : i32
    %c0_i32_1 = arith.constant 0 : i32
    return %c0_i32, %c0_i32_0 : i32, i32
  }
  func.func @transform_1(%arg0: i32) -> (i32, i32) {
    %c0_i32 = arith.constant 0 : i32
    %c0_i32_0 = arith.constant 0 : i32
    %c0_i32_1 = arith.constant 0 : i32
    return %c0_i32, %c0_i32_0 : i32, i32
  }
  func.func @transform_2(%arg0: i32) -> (i32, i32) {
    %c0_i32 = arith.constant 0 : i32
    %c0_i32_0 = arith.constant 0 : i32
    %c0_i32_1 = arith.constant 0 : i32
    return %c0_i32, %c0_i32_0 : i32, i32
  }
}

</mosaic_0001>

<llo_original>
// kernel: tpu_custom_call.1
$region0: #{tpu_custom_call.1}
  #allocation0 [shape = 'u32[]', space=smem, size = 0x4, offset = 0x4, fixed_abs, tag = 'smem constant byte address 0x4 - core index']
  #allocation1 [shape = 'u32[144,128]{1,0:T(1,128)}', space=vmem, size = 0x12000, scoped, tag = 'internal scratch']
  #allocation2 [shape = 'f32[16,128]{1,0:T(8,128)}', space=vmem, size = 0x2000, scoped, tag = 'scratch operand']
  #allocation3 [shape = 'f32[16,32]{1,0:T(8,128)}', space=vmem, size = 0x2000, scoped, tag = 'scratch operand']
  %s0 = inlined_call_operand.vmem [shape: f32[16,4], index: 0, kind: input, shape index: {}]
  %s1 = inlined_call_operand.hbm [shape: f32[432,128], index: 1, kind: input, shape index: {}]
  %s2 = inlined_call_operand.hbm [shape: f32[16,128], index: 2, kind: output, shape index: {}]
  %s3 = sld [smem:[#allocation0]]
  $region22: #{tpu_custom_call.1} parent=0
    _
  %s5 = ssub.s32 1, %s3
  %s6 = scalar_select 0, %s5, %s3
  $region1: #{tpu_custom_call.1} parent=0
    #allocation4 [shape = 'u8[221184]{0}', space=vmem, size = 0x36000, scoped, tag = 'input window, operand 1, single buffered']
    #allocation5 [shape = 's32[1]{0}', space=sflag, size = 0x4, scoped, tag = 'scoped memory for tpu_custom_call.1']
    #allocation6 [shape = 's32[1]{0}', space=sflag, size = 0x4, scoped, tag = 'scoped memory for tpu_custom_call.1']
    #allocation7 [shape = 'u8[8192]{0}', space=vmem, size = 0x2000, scoped, tag = 'output window, operand 0, single buffered']
    %7 = vsyncpa [#allocation5], 0
    %8 = vsyncpa [#allocation6], 0
    // Predicated region
    $region2: #{tpu_custom_call.1} parent=1 // pred_check
      _
    $region3: #{tpu_custom_call.1} parent=1 // pred_check_branch
      %10 = sbr.rel (0) target = $region5
    $region4: #{tpu_custom_call.1} parent=1 // pred_region
      _
    $region5: #{tpu_custom_call.1} parent=1 // pred_fallthru
      _
    // Predicated region
    $region6: #{tpu_custom_call.1} parent=1 // pred_check
      _
    $region7: #{tpu_custom_call.1} parent=1 // pred_check_branch
      %12 = sbr.rel (0) target = $region9
    $region8: #{tpu_custom_call.1} parent=1 // pred_region
      %s14 = ssub.s32 6912, 6912
      %15 = vsyncadd [#allocation5], %s14
      %s16 = sshll.u32 [#allocation4], 4
      %s17 = int_to_ptr.vmem [resolvable:$true] %s16
      %22 = dma.hbm_to_vmem [thread:$0]  %s1, 6912, %s17, [#allocation5], 128, 128, 8
    $region9: #{tpu_custom_call.1} parent=1 // pred_fallthru
      _
    // Predicated region
    $region10: #{tpu_custom_call.1} parent=1 // pred_check
      _
    $region11: #{tpu_custom_call.1} parent=1 // pred_check_branch
      %24 = sbr.rel (0) target = $region13
    $region12: #{tpu_custom_call.1} parent=1 // pred_region
      %25 = dma.done [#allocation5], 6912
    $region13: #{tpu_custom_call.1} parent=1 // pred_fallthru
      _
    %v26 = vld [vmem:[%s0] sm:$0xff]
    %v27 = vld [vmem:[%s0 + $0x8] sm:$0xff]
    %v28 = vld [vmem:[#allocation4] sm:$0xf]
    %v29 = vld [vmem:[#allocation4 + $0x28] sm:$0x1]
    %v30 = vlaneseq
    %v31 = vshrl.u32 %v30, 7
    %v32 = vsub.s32 0, %v31
    %v33 = vrot.slane %v29, %v32
    %vm34 = vcmask 31744
    %v36 = vsel %vm34, %v26, 0
    %v39 = vsel %vm34, %v27, 0
    %vm41 = vcmask 1043456
    %v43 = vsel %vm41, %v28, 0
    %45 = vmatprep.subr.mxu0 0.0
    %46 = vmatpush1.msra.mxu0 %v43
    %47 = vmatprep.subr.mxu0 0.0
    %48 = vmatpush1.msra.mxu0 0.0
    %49 = vmatprep.subr.mxu0 0.0
    %50 = vmatpush1.msra.mxu0 0.0
    %51 = vmatprep.subr.mxu0 0.0
    %52 = vmatpush1.msra.mxu0 0.0
    %53 = vmatprep.subr.mxu0 0.0
    %54 = vmatpush1.msra.mxu0 0.0
    %55 = vmatprep.subr.mxu0 0.0
    %56 = vmatpush1.msra.mxu0 0.0
    %57 = vmatprep.subr.mxu0 0.0
    %58 = vmatpush1.msra.mxu0 0.0
    %59 = vmatprep.subr.mxu0 0.0
    %60 = vmatpush1.msra.mxu0 0.0
    %61 = vmatprep.subr.mxu0 0.0
    %62 = vmatpush1.msra.mxu0 0.0
    %63 = vmatprep.subr.mxu0 0.0
    %64 = vmatpush1.msra.mxu0 0.0
    %65 = vmatprep.subr.mxu0 0.0
    %66 = vmatpush1.msra.mxu0 0.0
    %67 = vmatprep.subr.mxu0 0.0
    %68 = vmatpush1.msra.mxu0 0.0
    %69 = vmatprep.subr.mxu0 0.0
    %70 = vmatpush1.msra.mxu0 0.0
    %71 = vmatprep.subr.mxu0 0.0
    %72 = vmatpush1.msra.mxu0 0.0
    %73 = vmatprep.subr.mxu0 0.0
    %74 = vmatpush1.msra.mxu0 0.0
    %75 = vmatprep.subr.mxu0 0.0
    %76 = vmatpush1.msra.mxu0 0.0
    %77 = vmatprep.subr.mxu0 0.0
    %78 = vmatpush1.msra.mxu0 0.0
    %79 = vmatprep.subr.mxu0 0.0
    %80 = vmatpush1.msra.mxu0 0.0
    %81 = vmatprep.subr.mxu0 0.0
    %82 = vmatpush1.msra.mxu0 0.0
    %83 = vmatprep.subr.mxu0 0.0
    %84 = vmatpush1.msra.mxu0 0.0
    %85 = vmatprep.subr.mxu0 0.0
    %86 = vmatpush1.msra.mxu0 0.0
    %87 = vmatprep.subr.mxu0 0.0
    %88 = vmatpush1.msra.mxu0 0.0
    %89 = vmatprep.subr.mxu0 0.0
    %90 = vmatpush1.msra.mxu0 0.0
    %91 = vmatprep.subr.mxu0 0.0
    %92 = vmatpush1.msra.mxu0 0.0
    %93 = vmatprep.subr.mxu0 0.0
    %94 = vmatpush1.msra.mxu0 0.0
    %95 = vmatprep.subr.mxu0 0.0
    %96 = vmatpush1.msra.mxu0 0.0
    %97 = vmatprep.subr.mxu0 0.0
    %98 = vmatpush1.msra.mxu0 0.0
    %99 = vmatprep.subr.mxu0 0.0
    %100 = vmatpush1.msra.mxu0 0.0
    %101 = vmatprep.subr.mxu0 0.0
    %102 = vmatpush1.msra.mxu0 0.0
    %103 = vmatprep.subr.mxu0 0.0
    %104 = vmatpush1.msra.mxu0 0.0
    %105 = vmatprep.subr.mxu0 0.0
    %106 = vmatpush1.msra.mxu0 0.0
    %107 = vmatprep.subr.mxu0 0.0
    %108 = vmatpush1.msra.mxu0 0.0
    %109 = vmatprep.mubr.f32.mxu0 0.0
    %110 = vmatmul.mubr.f32.gmra.mrb[0].mxu0 %v36
    %v111 = vpop.f32.mrb[0].mxu0
    %v112 = vadd.f32 %v33, %v111
    %v113 = vpop.f32.mrb[0].mxu0
    %114 = vmatprep.mubr.f32.mxu0 0.0
    %115 = vmatmul.mubr.f32.gmra.mrb[0].mxu0 %v39
    %v116 = vpop.f32.mrb[0].mxu0
    %v117 = vadd.f32 %v33, %v116
    %v118 = vpop.f32.mrb[0].mxu0
    %119 = vdwg.mxu0
    %120 = vst [vmem:[#allocation2] sm:$0xff] %v112
    %121 = vst [vmem:[#allocation2 + $0x8] sm:$0xff] %v117
    %v122 = vld [vmem:[#allocation4 + $0x8] sm:$0xff]
    %v123 = vld [vmem:[#allocation4 + $0x10] sm:$0xff]
    %v124 = vld [vmem:[#allocation4 + $0x18] sm:$0xff]
    %v125 = vld [vmem:[#allocation4 + $0x20] sm:$0xff]
    %v126 = vld [vmem:[#allocation4 + $0x30] sm:$0xff]
    %v127 = vld [vmem:[#allocation4 + $0x38] sm:$0xff]
    %v128 = vld [vmem:[#allocation4 + $0x40] sm:$0xff]
    %v129 = vld [vmem:[#allocation4 + $0x48] sm:$0xff]
    %v130 = vld [vmem:[#allocation4 + $0x50] sm:$0xff]
    %v131 = vld [vmem:[#allocation4 + $0x58] sm:$0xff]
    %v132 = vld [vmem:[#allocation4 + $0x60] sm:$0xff]
    %v133 = vld [vmem:[#allocation4 + $0x68] sm:$0xff]
    %v134 = vld [vmem:[#allocation4 + $0x70] sm:$0x1]
    %v135 = vld [vmem:[#allocation2] sm:$0x3]
    %vm136 = vcmask 261120
    %v138 = vsel %vm136, 0.0, 0
    %140 = vmatprep.subr.mxu0 0.0
    %141 = vmatpush1.msra.mxu0 %v122
    %142 = vmatprep.subr.mxu0 0.0
    %143 = vmatpush1.msra.mxu0 %v123
    %144 = vmatprep.subr.mxu0 0.0
    %145 = vmatpush1.msra.mxu0 %v124
    %146 = vmatprep.subr.mxu0 0.0
    %147 = vmatpush1.msra.mxu0 %v125
    %148 = vmatprep.subr.mxu0 0.0
    %149 = vmatpush1.msra.mxu0 0.0
    %150 = vmatprep.subr.mxu0 0.0
    %151 = vmatpush1.msra.mxu0 0.0
    %152 = vmatprep.subr.mxu0 0.0
    %153 = vmatpush1.msra.mxu0 0.0
    %154 = vmatprep.subr.mxu0 0.0
    %155 = vmatpush1.msra.mxu0 0.0
    %156 = vmatprep.subr.mxu0 0.0
    %157 = vmatpush1.msra.mxu0 0.0
    %158 = vmatprep.subr.mxu0 0.0
    %159 = vmatpush1.msra.mxu0 0.0
    %160 = vmatprep.subr.mxu0 0.0
    %161 = vmatpush1.msra.mxu0 0.0
    %162 = vmatprep.subr.mxu0 0.0
    %163 = vmatpush1.msra.mxu0 0.0
    %164 = vmatprep.subr.mxu0 0.0
    %165 = vmatpush1.msra.mxu0 0.0
    %166 = vmatprep.subr.mxu0 0.0
    %167 = vmatpush1.msra.mxu0 0.0
    %168 = vmatprep.subr.mxu0 0.0
    %169 = vmatpush1.msra.mxu0 0.0
    %170 = vmatprep.subr.mxu0 0.0
    %171 = vmatpush1.msra.mxu0 0.0
    %172 = vmatprep.subr.mxu0 0.0
    %173 = vmatpush1.msra.mxu0 0.0
    %174 = vmatprep.subr.mxu0 0.0
    %175 = vmatpush1.msra.mxu0 0.0
    %176 = vmatprep.subr.mxu0 0.0
    %177 = vmatpush1.msra.mxu0 0.0
    %178 = vmatprep.subr.mxu0 0.0
    %179 = vmatpush1.msra.mxu0 0.0
    %180 = vmatprep.subr.mxu0 0.0
    %181 = vmatpush1.msra.mxu0 0.0
    %182 = vmatprep.subr.mxu0 0.0
    %183 = vmatpush1.msra.mxu0 0.0
    %184 = vmatprep.subr.mxu0 0.0
    %185 = vmatpush1.msra.mxu0 0.0
    %186 = vmatprep.subr.mxu0 0.0
    %187 = vmatpush1.msra.mxu0 0.0
    %188 = vmatprep.subr.mxu0 0.0
    %189 = vmatpush1.msra.mxu0 0.0
    %190 = vmatprep.subr.mxu0 0.0
    %191 = vmatpush1.msra.mxu0 0.0
    %192 = vmatprep.subr.mxu0 0.0
    %193 = vmatpush1.msra.mxu0 0.0
    %194 = vmatprep.subr.mxu0 0.0
    %195 = vmatpush1.msra.mxu0 0.0
    %196 = vmatprep.subr.mxu0 0.0
    %197 = vmatpush1.msra.mxu0 0.0
    %198 = vmatprep.subr.mxu0 0.0
    %199 = vmatpush1.msra.mxu0 0.0
    %200 = vmatprep.subr.mxu0 0.0
    %201 = vmatpush1.msra.mxu0 0.0
    %202 = vmatprep.subr.mxu0 0.0
    %203 = vmatpush1.msra.mxu0 0.0
    %204 = vmatprep.mubr.f32.mxu0 0.0
    %205 = vmatmul.mubr.f32.gmra.mrb[0].mxu0 %v138
    %v206 = vpop.f32.mrb[0].mxu0
    %v207 = vadd.f32 0.0, %v206
    %v208 = vpop.f32.mrb[0].mxu0
    %209 = vdwg.mxu0
    %v210 = vadd.f32 %v135, %v207
    %v211 = vsub.f32 0.0, %v210
    %v212 = vmul.f32 %v211, 1.442695
    %v213 = vpow.pop %v212
    %v214 = vadd.f32 %v213, 1.0
    %v215 = vrcp.pop %v214
    %v216 = vmul.f32 1.0, %v215
    %v217 = vtanh.pop %v210
    %v218 = vmul.f32 %v216, 0.0
    %220 = vrot.lane.b32.xlu0 %v217, 32
    %v221 = vpop.permute.xlu0 %220
    %v223 = vmul.f32 %v216, %v221
    %225 = vrot.lane.b32.xlu0 %v223, 32
    %v226 = vpop.permute.xlu0 %225
    %v228 = vadd.f32 %v218, %v226
    %v229 = vtanh.pop %v228
    %231 = vrot.lane.b32.xlu0 %v229, 32
    %v232 = vpop.permute.xlu0 %231
    %v234 = vmul.f32 %v216, %v232
    %v235 = vlaneseq
    %v236 = vshrl.u32 %v235, 7
    %v237 = vsub.s32 0, %v236
    %v238 = vrot.slane %v134, %v237
    %240 = vrot.lane.b32.xlu0 %v234, 64
    %v241 = vpop.permute.xlu0 %240
    %v242 = vsel %vm136, %v241, 0
    %244 = vmatprep.subr.mxu0 0.0
    %245 = vmatpush1.msra.mxu0 %v126
    %246 = vmatprep.subr.mxu0 0.0
    %247 = vmatpush1.msra.mxu0 %v127
    %248 = vmatprep.subr.mxu0 0.0
    %249 = vmatpush1.msra.mxu0 %v128
    %250 = vmatprep.subr.mxu0 0.0
    %251 = vmatpush1.msra.mxu0 %v129
    %252 = vmatprep.subr.mxu0 0.0
    %253 = vmatpush1.msra.mxu0 0.0
    %254 = vmatprep.subr.mxu0 0.0
    %255 = vmatpush1.msra.mxu0 0.0
    %256 = vmatprep.subr.mxu0 0.0
    %257 = vmatpush1.msra.mxu0 0.0
    %258 = vmatprep.subr.mxu0 0.0
    %259 = vmatpush1.msra.mxu0 0.0
    %260 = vmatprep.subr.mxu0 0.0
    %261 = vmatpush1.msra.mxu0 0.0
    %262 = vmatprep.subr.mxu0 0.0
    %263 = vmatpush1.msra.mxu0 0.0
    %264 = vmatprep.subr.mxu0 0.0
    %265 = vmatpush1.msra.mxu0 0.0
    %266 = vmatprep.subr.mxu0 0.0
    %267 = vmatpush1.msra.mxu0 0.0
    %268 = vmatprep.subr.mxu0 0.0
    %269 = vmatpush1.msra.mxu0 0.0
    %270 = vmatprep.subr.mxu0 0.0
    %271 = vmatpush1.msra.mxu0 0.0
    %272 = vmatprep.subr.mxu0 0.0
    %273 = vmatpush1.msra.mxu0 0.0
    %274 = vmatprep.subr.mxu0 0.0
    %275 = vmatpush1.msra.mxu0 0.0
    %276 = vmatprep.subr.mxu0 0.0
    %277 = vmatpush1.msra.mxu0 0.0
    %278 = vmatprep.subr.mxu0 0.0
    %279 = vmatpush1.msra.mxu0 0.0
    %280 = vmatprep.subr.mxu0 0.0
    %281 = vmatpush1.msra.mxu0 0.0
    %282 = vmatprep.subr.mxu0 0.0
    %283 = vmatpush1.msra.mxu0 0.0
    %284 = vmatprep.subr.mxu0 0.0
    %285 = vmatpush1.msra.mxu0 0.0
    %286 = vmatprep.subr.mxu0 0.0
    %287 = vmatpush1.msra.mxu0 0.0
    %288 = vmatprep.subr.mxu0 0.0
    %289 = vmatpush1.msra.mxu0 0.0
    %290 = vmatprep.subr.mxu0 0.0
    %291 = vmatpush1.msra.mxu0 0.0
    %292 = vmatprep.subr.mxu0 0.0
    %293 = vmatpush1.msra.mxu0 0.0
    %294 = vmatprep.subr.mxu0 0.0
    %295 = vmatpush1.msra.mxu0 0.0
    %296 = vmatprep.subr.mxu0 0.0
    %297 = vmatpush1.msra.mxu0 0.0
    %298 = vmatprep.subr.mxu0 0.0
    %299 = vmatpush1.msra.mxu0 0.0
    %300 = vmatprep.subr.mxu0 0.0
    %301 = vmatpush1.msra.mxu0 0.0
    %302 = vmatprep.subr.mxu0 0.0
    %303 = vmatpush1.msra.mxu0 0.0
    %304 = vmatprep.subr.mxu0 0.0
    %305 = vmatpush1.msra.mxu0 0.0
    %306 = vmatprep.subr.mxu0 0.0
    %307 = vmatpush1.msra.mxu0 0.0
    %308 = vmatprep.mubr.f32.mxu0 0.0
    %309 = vmatmul.mubr.f32.gmra.mrb[0].mxu0 %v242
    %v310 = vpop.f32.mrb[0].mxu0
    %v311 = vadd.f32 %v238, %v310
    %v312 = vpop.f32.mrb[0].mxu0
    %313 = vdwg.mxu0
    %314 = vmatprep.subr.mxu0 0.0
    %315 = vmatpush1.msra.mxu0 %v130
    %316 = vmatprep.subr.mxu0 0.0
    %317 = vmatpush1.msra.mxu0 %v131
    %318 = vmatprep.subr.mxu0 0.0
    %319 = vmatpush1.msra.mxu0 %v132
    %320 = vmatprep.subr.mxu0 0.0
    %321 = vmatpush1.msra.mxu0 %v133
    %322 = vmatprep.subr.mxu0 0.0
    %323 = vmatpush1.msra.mxu0 0.0
    %324 = vmatprep.subr.mxu0 0.0
    %325 = vmatpush1.msra.mxu0 0.0
    %326 = vmatprep.subr.mxu0 0.0
    %327 = vmatpush1.msra.mxu0 0.0
    %328 = vmatprep.subr.mxu0 0.0
    %329 = vmatpush1.msra.mxu0 0.0
    %330 = vmatprep.subr.mxu0 0.0
    %331 = vmatpush1.msra.mxu0 0.0
    %332 = vmatprep.subr.mxu0 0.0
    %333 = vmatpush1.msra.mxu0 0.0
    %334 = vmatprep.subr.mxu0 0.0
    %335 = vmatpush1.msra.mxu0 0.0
    %336 = vmatprep.subr.mxu0 0.0
    %337 = vmatpush1.msra.mxu0 0.0
    %338 = vmatprep.subr.mxu0 0.0
    %339 = vmatpush1.msra.mxu0 0.0
    %340 = vmatprep.subr.mxu0 0.0
    %341 = vmatpush1.msra.mxu0 0.0
    %342 = vmatprep.subr.mxu0 0.0
    %343 = vmatpush1.msra.mxu0 0.0
    %344 = vmatprep.subr.mxu0 0.0
    %345 = vmatpush1.msra.mxu0 0.0
    %346 = vmatprep.subr.mxu0 0.0
    %347 = vmatpush1.msra.mxu0 0.0
    %348 = vmatprep.subr.mxu0 0.0
    %349 = vmatpush1.msra.mxu0 0.0
    %350 = vmatprep.subr.mxu0 0.0
    %351 = vmatpush1.msra.mxu0 0.0
    %352 = vmatprep.subr.mxu0 0.0
    %353 = vmatpush1.msra.mxu0 0.0
    %354 = vmatprep.subr.mxu0 0.0
    %355 = vmatpush1.msra.mxu0 0.0
    %356 = vmatprep.subr.mxu0 0.0
    %357 = vmatpush1.msra.mxu0 0.0
    %358 = vmatprep.subr.mxu0 0.0
    %359 = vmatpush1.msra.mxu0 0.0
    %360 = vmatprep.subr.mxu0 0.0
    %361 = vmatpush1.msra.mxu0 0.0
    %362 = vmatprep.subr.mxu0 0.0
    %363 = vmatpush1.msra.mxu0 0.0
    %364 = vmatprep.subr.mxu0 0.0
    %365 = vmatpush1.msra.mxu0 0.0
    %366 = vmatprep.subr.mxu0 0.0
    %367 = vmatpush1.msra.mxu0 0.0
    %368 = vmatprep.subr.mxu0 0.0
    %369 = vmatpush1.msra.mxu0 0.0
    %370 = vmatprep.subr.mxu0 0.0
    %371 = vmatpush1.msra.mxu0 0.0
    %372 = vmatprep.subr.mxu0 0.0
    %373 = vmatpush1.msra.mxu0 0.0
    %374 = vmatprep.subr.mxu0 0.0
    %375 = vmatpush1.msra.mxu0 0.0
    %376 = vmatprep.subr.mxu0 0.0
    %377 = vmatpush1.msra.mxu0 0.0
    %378 = vmatprep.mubr.f32.mxu0 0.0
    %379 = vmatmul.mubr.f32.gmra.mrb[0].mxu0 %v138
    %v380 = vpop.f32.mrb[0].mxu0
    %v381 = vadd.f32 0.0, %v380
    %v382 = vpop.f32.mrb[0].mxu0
    %383 = vdwg.mxu0
    %v384 = vadd.f32 %v311, %v381
    %v385 = vsub.f32 0.0, %v384
    %v386 = vmul.f32 %v385, 1.442695
    %v387 = vpow.pop %v386
    %v388 = vadd.f32 %v387, 1.0
    %v389 = vrcp.pop %v388
    %v390 = vmul.f32 1.0, %v389
    %v391 = vtanh.pop %v384
    %v392 = vmul.f32 %v390, 0.0
    %394 = vrot.lane.b32.xlu0 %v391, 32
    %v395 = vpop.permute.xlu0 %394
    %v397 = vmul.f32 %v390, %v395
    %399 = vrot.lane.b32.xlu0 %v397, 32
    %v400 = vpop.permute.xlu0 %399
    %v402 = vadd.f32 %v392, %v400
    %v403 = vtanh.pop %v402
    %405 = vrot.lane.b32.xlu0 %v403, 32
    %v406 = vpop.permute.xlu0 %405
    %v408 = vmul.f32 %v390, %v406
    %410 = vrot.lane.b32.xlu0 %v408, 64
    %v411 = vpop.permute.xlu0 %410
    %vm413 = vcmask 254976
    %414 = vst.msk [vmem:[#allocation3] sm:$0x3] %vm413, %v411
    %v415 = vld [vmem:[#allocation2 + $0x2] sm:$0x3]
    %416 = vmatprep.subr.mxu0 0.0
    %417 = vmatpush1.msra.mxu0 %v122
    %418 = vmatprep.subr.mxu0 0.0
    %419 = vmatpush1.msra.mxu0 %v123
    %420 = vmatprep.subr.mxu0 0.0
    %421 = vmatpush1.msra.mxu0 %v124
    %422 = vmatprep.subr.mxu0 0.0
    %423 = vmatpush1.msra.mxu0 %v125
    %424 = vmatprep.subr.mxu0 0.0
    %425 = vmatpush1.msra.mxu0 0.0
    %426 = vmatprep.subr.mxu0 0.0
    %427 = vmatpush1.msra.mxu0 0.0
    %428 = vmatprep.subr.mxu0 0.0
    %429 = vmatpush1.msra.mxu0 0.0
    %430 = vmatprep.subr.mxu0 0.0
    %431 = vmatpush1.msra.mxu0 0.0
    %432 = vmatprep.subr.mxu0 0.0
    %433 = vmatpush1.msra.mxu0 0.0
    %434 = vmatprep.subr.mxu0 0.0
    %435 = vmatpush1.msra.mxu0 0.0
    %436 = vmatprep.subr.mxu0 0.0
    %437 = vmatpush1.msra.mxu0 0.0
    %438 = vmatprep.subr.mxu0 0.0
    %439 = vmatpush1.msra.mxu0 0.0
    %440 = vmatprep.subr.mxu0 0.0
    %441 = vmatpush1.msra.mxu0 0.0
    %442 = vmatprep.subr.mxu0 0.0
    %443 = vmatpush1.msra.mxu0 0.0
    %444 = vmatprep.subr.mxu0 0.0
    %445 = vmatpush1.msra.mxu0 0.0
    %446 = vmatprep.subr.mxu0 0.0
    %447 = vmatpush1.msra.mxu0 0.0
    %448 = vmatprep.subr.mxu0 0.0
    %449 = vmatpush1.msra.mxu0 0.0
    %450 = vmatprep.subr.mxu0 0.0
    %451 = vmatpush1.msra.mxu0 0.0
    %452 = vmatprep.subr.mxu0 0.0
    %453 = vmatpush1.msra.mxu0 0.0
    %454 = vmatprep.subr.mxu0 0.0
    %455 = vmatpush1.msra.mxu0 0.0
    %456 = vmatprep.subr.mxu0 0.0
    %457 = vmatpush1.msra.mxu0 0.0
    %458 = vmatprep.subr.mxu0 0.0
    %459 = vmatpush1.msra.mxu0 0.0
    %460 = vmatprep.subr.mxu0 0.0
    %461 = vmatpush1.msra.mxu0 0.0
    %462 = vmatprep.subr.mxu0 0.0
    %463 = vmatpush1.msra.mxu0 0.0
    %464 = vmatprep.subr.mxu0 0.0
    %465 = vmatpush1.msra.mxu0 0.0
    %466 = vmatprep.subr.mxu0 0.0
    %467 = vmatpush1.msra.mxu0 0.0
    %468 = vmatprep.subr.mxu0 0.0
    %469 = vmatpush1.msra.mxu0 0.0
    %470 = vmatprep.subr.mxu0 0.0
    %471 = vmatpush1.msra.mxu0 0.0
    %472 = vmatprep.subr.mxu0 0.0
    %473 = vmatpush1.msra.mxu0 0.0
    %474 = vmatprep.subr.mxu0 0.0
    %475 = vmatpush1.msra.mxu0 0.0
    %476 = vmatprep.subr.mxu0 0.0
    %477 = vmatpush1.msra.mxu0 0.0
    %478 = vmatprep.subr.mxu0 0.0
    %479 = vmatpush1.msra.mxu0 0.0
    %480 = vmatprep.mubr.f32.mxu0 0.0
    %481 = vmatmul.mubr.f32.gmra.mrb[0].mxu0 %v242
    %v482 = vpop.f32.mrb[0].mxu0
    %v483 = vadd.f32 0.0, %v482
    %v484 = vpop.f32.mrb[0].mxu0
    %485 = vdwg.mxu0
    %v486 = vadd.f32 %v415, %v483
    %v487 = vsub.f32 0.0, %v486
    %v488 = vmul.f32 %v487, 1.442695
    %v489 = vpow.pop %v488
    %v490 = vadd.f32 %v489, 1.0
    %v491 = vrcp.pop %v490
    %v492 = vmul.f32 1.0, %v491
    %v493 = vtanh.pop %v486
    %v494 = vmul.f32 %v492, %v228
    %496 = vrot.lane.b32.xlu0 %v493, 32
    %v497 = vpop.permute.xlu0 %496
    %v499 = vmul.f32 %v492, %v497
    %501 = vrot.lane.b32.xlu0 %v499, 32
    %v502 = vpop.permute.xlu0 %501
    %v504 = vadd.f32 %v494, %v502
    %v505 = vtanh.pop %v504
    %507 = vrot.lane.b32.xlu0 %v505, 32
    %v508 = vpop.permute.xlu0 %507
    %v510 = vmul.f32 %v492, %v508
    %512 = vrot.lane.b32.xlu0 %v510, 64
    %v513 = vpop.permute.xlu0 %512
    %v514 = vsel %vm136, %v513, 0
    %516 = vmatprep.subr.mxu0 0.0
    %517 = vmatpush1.msra.mxu0 %v126
    %518 = vmatprep.subr.mxu0 0.0
    %519 = vmatpush1.msra.mxu0 %v127
    %520 = vmatprep.subr.mxu0 0.0
    %521 = vmatpush1.msra.mxu0 %v128
    %522 = vmatprep.subr.mxu0 0.0
    %523 = vmatpush1.msra.mxu0 %v129
    %524 = vmatprep.subr.mxu0 0.0
    %525 = vmatpush1.msra.mxu0 0.0
    %526 = vmatprep.subr.mxu0 0.0
    %527 = vmatpush1.msra.mxu0 0.0
    %528 = vmatprep.subr.mxu0 0.0
    %529 = vmatpush1.msra.mxu0 0.0
    %530 = vmatprep.subr.mxu0 0.0
    %531 = vmatpush1.msra.mxu0 0.0
    %532 = vmatprep.subr.mxu0 0.0
    %533 = vmatpush1.msra.mxu0 0.0
    %534 = vmatprep.subr.mxu0 0.0
    %535 = vmatpush1.msra.mxu0 0.0
    %536 = vmatprep.subr.mxu0 0.0
    %537 = vmatpush1.msra.mxu0 0.0
    %538 = vmatprep.subr.mxu0 0.0
    %539 = vmatpush1.msra.mxu0 0.0
    %540 = vmatprep.subr.mxu0 0.0
    %541 = vmatpush1.msra.mxu0 0.0
    %542 = vmatprep.subr.mxu0 0.0
    %543 = vmatpush1.msra.mxu0 0.0
    %544 = vmatprep.subr.mxu0 0.0
    %545 = vmatpush1.msra.mxu0 0.0
    %546 = vmatprep.subr.mxu0 0.0
    %547 = vmatpush1.msra.mxu0 0.0
    %548 = vmatprep.subr.mxu0 0.0
    %549 = vmatpush1.msra.mxu0 0.0
    %550 = vmatprep.subr.mxu0 0.0
    %551 = vmatpush1.msra.mxu0 0.0
    %552 = vmatprep.subr.mxu0 0.0
    %553 = vmatpush1.msra.mxu0 0.0
    %554 = vmatprep.subr.mxu0 0.0
    %555 = vmatpush1.msra.mxu0 0.0
    %556 = vmatprep.subr.mxu0 0.0
    %557 = vmatpush1.msra.mxu0 0.0
    %558 = vmatprep.subr.mxu0 0.0
    %559 = vmatpush1.msra.mxu0 0.0
    %560 = vmatprep.subr.mxu0 0.0
    %561 = vmatpush1.msra.mxu0 0.0
    %562 = vmatprep.subr.mxu0 0.0
    %563 = vmatpush1.msra.mxu0 0.0
    %564 = vmatprep.subr.mxu0 0.0
    %565 = vmatpush1.msra.mxu0 0.0
    %566 = vmatprep.subr.mxu0 0.0
    %567 = vmatpush1.msra.mxu0 0.0
    %568 = vmatprep.subr.mxu0 0.0
    %569 = vmatpush1.msra.mxu0 0.0
    %570 = vmatprep.subr.mxu0 0.0
    %571 = vmatpush1.msra.mxu0 0.0
    %572 = vmatprep.subr.mxu0 0.0
    %573 = vmatpush1.msra.mxu0 0.0
    %574 = vmatprep.subr.mxu0 0.0
    %575 = vmatpush1.msra.mxu0 0.0
    %576 = vmatprep.subr.mxu0 0.0
    %577 = vmatpush1.msra.mxu0 0.0
    %578 = vmatprep.subr.mxu0 0.0
    %579 = vmatpush1.msra.mxu0 0.0
    %580 = vmatprep.mubr.f32.mxu0 0.0
    %581 = vmatmul.mubr.f32.gmra.mrb[0].mxu0 %v514
    %v582 = vpop.f32.mrb[0].mxu0
    %v583 = vadd.f32 %v238, %v582
    %v584 = vpop.f32.mrb[0].mxu0
    %585 = vdwg.mxu0
    %v586 = vsel %vm136, %v411, 0
    %588 = vmatprep.subr.mxu0 0.0
    %589 = vmatpush1.msra.mxu0 %v130
    %590 = vmatprep.subr.mxu0 0.0
    %591 = vmatpush1.msra.mxu0 %v131
    %592 = vmatprep.subr.mxu0 0.0
    %593 = vmatpush1.msra.mxu0 %v132
    %594 = vmatprep.subr.mxu0 0.0
    %595 = vmatpush1.msra.mxu0 %v133
    %596 = vmatprep.subr.mxu0 0.0
    %597 = vmatpush1.msra.mxu0 0.0
    %598 = vmatprep.subr.mxu0 0.0
    %599 = vmatpush1.msra.mxu0 0.0
    %600 = vmatprep.subr.mxu0 0.0
    %601 = vmatpush1.msra.mxu0 0.0
    %602 = vmatprep.subr.mxu0 0.0
    %603 = vmatpush1.msra.mxu0 0.0
    %604 = vmatprep.subr.mxu0 0.0
    %605 = vmatpush1.msra.mxu0 0.0
    %606 = vmatprep.subr.mxu0 0.0
    %607 = vmatpush1.msra.mxu0 0.0
    %608 = vmatprep.subr.mxu0 0.0
    %609 = vmatpush1.msra.mxu0 0.0
    %610 = vmatprep.subr.mxu0 0.0
    %611 = vmatpush1.msra.mxu0 0.0
    %612 = vmatprep.subr.mxu0 0.0
    %613 = vmatpush1.msra.mxu0 0.0
    %614 = vmatprep.subr.mxu0 0.0
    %615 = vmatpush1.msra.mxu0 0.0
    %616 = vmatprep.subr.mxu0 0.0
    %617 = vmatpush1.msra.mxu0 0.0
    %618 = vmatprep.subr.mxu0 0.0
    %619 = vmatpush1.msra.mxu0 0.0
    %620 = vmatprep.subr.mxu0 0.0
    %621 = vmatpush1.msra.mxu0 0.0
    %622 = vmatprep.subr.mxu0 0.0
    %623 = vmatpush1.msra.mxu0 0.0
    %624 = vmatprep.subr.mxu0 0.0
    %625 = vmatpush1.msra.mxu0 0.0
    %626 = vmatprep.subr.mxu0 0.0
    %627 = vmatpush1.msra.mxu0 0.0
    %628 = vmatprep.subr.mxu0 0.0
    %629 = vmatpush1.msra.mxu0 0.0
    %630 = vmatprep.subr.mxu0 0.0
    %631 = vmatpush1.msra.mxu0 0.0
    %632 = vmatprep.subr.mxu0 0.0
    %633 = vmatpush1.msra.mxu0 0.0
    %634 = vmatprep.subr.mxu0 0.0
    %635 = vmatpush1.msra.mxu0 0.0
    %636 = vmatprep.subr.mxu0 0.0
    %637 = vmatpush1.msra.mxu0 0.0
    %638 = vmatprep.subr.mxu0 0.0
    %639 = vmatpush1.msra.mxu0 0.0
    %640 = vmatprep.subr.mxu0 0.0
    %641 = vmatpush1.msra.mxu0 0.0
    %642 = vmatprep.subr.mxu0 0.0
    %643 = vmatpush1.msra.mxu0 0.0
    %644 = vmatprep.subr.mxu0 0.0
    %645 = vmatpush1.msra.mxu0 0.0
    %646 = vmatprep.subr.mxu0 0.0
    %647 = vmatpush1.msra.mxu0 0.0
    %648 = vmatprep.subr.mxu0 0.0
    %649 = vmatpush1.msra.mxu0 0.0
    %650 = vmatprep.subr.mxu0 0.0
    %651 = vmatpush1.msra.mxu0 0.0
    %652 = vmatprep.mubr.f32.mxu0 0.0
    %653 = vmatmul.mubr.f32.gmra.mrb[0].mxu0 %v586
    %v654 = vpop.f32.mrb[0].mxu0
    %v655 = vadd.f32 0.0, %v654
    %v656 = vpop.f32.mrb[0].mxu0
    %657 = vdwg.mxu0
    %v658 = vadd.f32 %v583, %v655
    %v659 = vsub.f32 0.0, %v658
    %v660 = vmul.f32 %v659, 1.442695
    %v661 = vpow.pop %v660
    %v662 = vadd.f32 %v661, 1.0
    %v663 = vrcp.pop %v662
    %v664 = vmul.f32 1.0, %v663
    %v665 = vtanh.pop %v658
    %v666 = vmul.f32 %v664, %v402
    %668 = vrot.lane.b32.xlu0 %v665, 32
    %v669 = vpop.permute.xlu0 %668
    %v671 = vmul.f32 %v664, %v669
    %673 = vrot.lane.b32.xlu0 %v671, 32
    %v674 = vpop.permute.xlu0 %673
    %v676 = vadd.f32 %v666, %v674
    %v677 = vtanh.pop %v676
    %679 = vrot.lane.b32.xlu0 %v677, 32
    %v680 = vpop.permute.xlu0 %679
    %v682 = vmul.f32 %v664, %v680
    %684 = vrot.lane.b32.xlu0 %v682, 64
    %v685 = vpop.permute.xlu0 %684
    %687 = vst.msk [vmem:[#allocation3 + $0x2] sm:$0x3] %vm413, %v685
    %v688 = vld [vmem:[#allocation2 + $0x4] sm:$0x3]
    %689 = vmatprep.subr.mxu0 0.0
    %690 = vmatpush1.msra.mxu0 %v122
    %691 = vmatprep.subr.mxu0 0.0
    %692 = vmatpush1.msra.mxu0 %v123
    %693 = vmatprep.subr.mxu0 0.0
    %694 = vmatpush1.msra.mxu0 %v124
    %695 = vmatprep.subr.mxu0 0.0
    %696 = vmatpush1.msra.mxu0 %v125
    %697 = vmatprep.subr.mxu0 0.0
    %698 = vmatpush1.msra.mxu0 0.0
    %699 = vmatprep.subr.mxu0 0.0
    %700 = vmatpush1.msra.mxu0 0.0
    %701 = vmatprep.subr.mxu0 0.0
    %702 = vmatpush1.msra.mxu0 0.0
    %703 = vmatprep.subr.mxu0 0.0
    %704 = vmatpush1.msra.mxu0 0.0
    %705 = vmatprep.subr.mxu0 0.0
    %706 = vmatpush1.msra.mxu0 0.0
    %707 = vmatprep.subr.mxu0 0.0
    %708 = vmatpush1.msra.mxu0 0.0
    %709 = vmatprep.subr.mxu0 0.0
    %710 = vmatpush1.msra.mxu0 0.0
    %711 = vmatprep.subr.mxu0 0.0
    %712 = vmatpush1.msra.mxu0 0.0
    %713 = vmatprep.subr.mxu0 0.0
    %714 = vmatpush1.msra.mxu0 0.0
    %715 = vmatprep.subr.mxu0 0.0
    %716 = vmatpush1.msra.mxu0 0.0
    %717 = vmatprep.subr.mxu0 0.0
    %718 = vmatpush1.msra.mxu0 0.0
    %719 = vmatprep.subr.mxu0 0.0
    %720 = vmatpush1.msra.mxu0 0.0
    %721 = vmatprep.subr.mxu0 0.0
    %722 = vmatpush1.msra.mxu0 0.0
    %723 = vmatprep.subr.mxu0 0.0
    %724 = vmatpush1.msra.mxu0 0.0
    %725 = vmatprep.subr.mxu0 0.0
    %726 = vmatpush1.msra.mxu0 0.0
    %727 = vmatprep.subr.mxu0 0.0
    %728 = vmatpush1.msra.mxu0 0.0
    %729 = vmatprep.subr.mxu0 0.0
    %730 = vmatpush1.msra.mxu0 0.0
    %731 = vmatprep.subr.mxu0 0.0
    %732 = vmatpush1.msra.mxu0 0.0
    %733 = vmatprep.subr.mxu0 0.0
    %734 = vmatpush1.msra.mxu0 0.0
    %735 = vmatprep.subr.mxu0 0.0
    %736 = vmatpush1.msra.mxu0 0.0
    %737 = vmatprep.subr.mxu0 0.0
    %738 = vmatpush1.msra.mxu0 0.0
    %739 = vmatprep.subr.mxu0 0.0
    %740 = vmatpush1.msra.mxu0 0.0
    %741 = vmatprep.subr.mxu0 0.0
    %742 = vmatpush1.msra.mxu0 0.0
    %743 = vmatprep.subr.mxu0 0.0
    %744 = vmatpush1.msra.mxu0 0.0
    %745 = vmatprep.subr.mxu0 0.0
    %746 = vmatpush1.msra.mxu0 0.0
    %747 = vmatprep.subr.mxu0 0.0
    %748 = vmatpush1.msra.mxu0 0.0
    %749 = vmatprep.subr.mxu0 0.0
    %750 = vmatpush1.msra.mxu0 0.0
    %751 = vmatprep.subr.mxu0 0.0
    %752 = vmatpush1.msra.mxu0 0.0
    %753 = vmatprep.mubr.f32.mxu0 0.0
    %754 = vmatmul.mubr.f32.gmra.mrb[0].mxu0 %v514
    %v755 = vpop.f32.mrb[0].mxu0
    %v756 = vadd.f32 0.0, %v755
    %v757 = vpop.f32.mrb[0].mxu0
    %758 = vdwg.mxu0
    %v759 = vadd.f32 %v688, %v756
    %v760 = vsub.f32 0.0, %v759
    %v761 = vmul.f32 %v760, 1.442695
    %v762 = vpow.pop %v761
    %v763 = vadd.f32 %v762, 1.0
    %v764 = vrcp.pop %v763
    %v765 = vmul.f32 1.0, %v764
    %v766 = vtanh.pop %v759
    %v767 = vmul.f32 %v765, %v504
    %769 = vrot.lane.b32.xlu0 %v766, 32
    %v770 = vpop.permute.xlu0 %769
    %v772 = vmul.f32 %v765, %v770
    %774 = vrot.lane.b32.xlu0 %v772, 32
    %v775 = vpop.permute.xlu0 %774
    %v777 = vadd.f32 %v767, %v775
    %v778 = vtanh.pop %v777
    %780 = vrot.lane.b32.xlu0 %v778, 32
    %v781 = vpop.permute.xlu0 %780
    %v783 = vmul.f32 %v765, %v781
    %785 = vrot.lane.b32.xlu0 %v783, 64
    %v786 = vpop.permute.xlu0 %785
    %v787 = vsel %vm136, %v786, 0
    %789 = vmatprep.subr.mxu0 0.0
    %790 = vmatpush1.msra.mxu0 %v126
    %791 = vmatprep.subr.mxu0 0.0
    %792 = vmatpush1.msra.mxu0 %v127
    %793 = vmatprep.subr.mxu0 0.0
    %794 = vmatpush1.msra.mxu0 %v128
    %795 = vmatprep.subr.mxu0 0.0
    %796 = vmatpush1.msra.mxu0 %v129
    %797 = vmatprep.subr.mxu0 0.0
    %798 = vmatpush1.msra.mxu0 0.0
    %799 = vmatprep.subr.mxu0 0.0
    %800 = vmatpush1.msra.mxu0 0.0
    %801 = vmatprep.subr.mxu0 0.0
    %802 = vmatpush1.msra.mxu0 0.0
    %803 = vmatprep.subr.mxu0 0.0
    %804 = vmatpush1.msra.mxu0 0.0
    %805 = vmatprep.subr.mxu0 0.0
    %806 = vmatpush1.msra.mxu0 0.0
    %807 = vmatprep.subr.mxu0 0.0
    %808 = vmatpush1.msra.mxu0 0.0
    %809 = vmatprep.subr.mxu0 0.0
    %810 = vmatpush1.msra.mxu0 0.0
    %811 = vmatprep.subr.mxu0 0.0
    %812 = vmatpush1.msra.mxu0 0.0
    %813 = vmatprep.subr.mxu0 0.0
    %814 = vmatpush1.msra.mxu0 0.0
    %815 = vmatprep.subr.mxu0 0.0
    %816 = vmatpush1.msra.mxu0 0.0
    %817 = vmatprep.subr.mxu0 0.0
    %818 = vmatpush1.msra.mxu0 0.0
    %819 = vmatprep.subr.mxu0 0.0
    %820 = vmatpush1.msra.mxu0 0.0
    %821 = vmatprep.subr.mxu0 0.0
    %822 = vmatpush1.msra.mxu0 0.0
    %823 = vmatprep.subr.mxu0 0.0
    %824 = vmatpush1.msra.mxu0 0.0
    %825 = vmatprep.subr.mxu0 0.0
    %826 = vmatpush1.msra.mxu0 0.0
    %827 = vmatprep.subr.mxu0 0.0
    %828 = vmatpush1.msra.mxu0 0.0
    %829 = vmatprep.subr.mxu0 0.0
    %830 = vmatpush1.msra.mxu0 0.0
    %831 = vmatprep.subr.mxu0 0.0
    %832 = vmatpush1.msra.mxu0 0.0
    %833 = vmatprep.subr.mxu0 0.0
    %834 = vmatpush1.msra.mxu0 0.0
    %835 = vmatprep.subr.mxu0 0.0
    %836 = vmatpush1.msra.mxu0 0.0
    %837 = vmatprep.subr.mxu0 0.0
    %838 = vmatpush1.msra.mxu0 0.0
    %839 = vmatprep.subr.mxu0 0.0
    %840 = vmatpush1.msra.mxu0 0.0
    %841 = vmatprep.subr.mxu0 0.0
    %842 = vmatpush1.msra.mxu0 0.0
    %843 = vmatprep.subr.mxu0 0.0
    %844 = vmatpush1.msra.mxu0 0.0
    %845 = vmatprep.subr.mxu0 0.0
    %846 = vmatpush1.msra.mxu0 0.0
    %847 = vmatprep.subr.mxu0 0.0
    %848 = vmatpush1.msra.mxu0 0.0
    %849 = vmatprep.subr.mxu0 0.0
    %850 = vmatpush1.msra.mxu0 0.0
    %851 = vmatprep.subr.mxu0 0.0
    %852 = vmatpush1.msra.mxu0 0.0
    %853 = vmatprep.mubr.f32.mxu0 0.0
    %854 = vmatmul.mubr.f32.gmra.mrb[0].mxu0 %v787
    %v855 = vpop.f32.mrb[0].mxu0
    %v856 = vadd.f32 %v238, %v855
    %v857 = vpop.f32.mrb[0].mxu0
    %858 = vdwg.mxu0
    %v859 = vsel %vm136, %v685, 0
    %861 = vmatprep.subr.mxu0 0.0
    %862 = vmatpush1.msra.mxu0 %v130
    %863 = vmatprep.subr.mxu0 0.0
    %864 = vmatpush1.msra.mxu0 %v131
    %865 = vmatprep.subr.mxu0 0.0
    %866 = vmatpush1.msra.mxu0 %v132
    %867 = vmatprep.subr.mxu0 0.0
    %868 = vmatpush1.msra.mxu0 %v133
    %869 = vmatprep.subr.mxu0 0.0
    %870 = vmatpush1.msra.mxu0 0.0
    %871 = vmatprep.subr.mxu0 0.0
    %872 = vmatpush1.msra.mxu0 0.0
    %873 = vmatprep.subr.mxu0 0.0
    %874 = vmatpush1.msra.mxu0 0.0
    %875 = vmatprep.subr.mxu0 0.0
    %876 = vmatpush1.msra.mxu0 0.0
    %877 = vmatprep.subr.mxu0 0.0
    %878 = vmatpush1.msra.mxu0 0.0
    %879 = vmatprep.subr.mxu0 0.0
    %880 = vmatpush1.msra.mxu0 0.0
    %881 = vmatprep.subr.mxu0 0.0
    %882 = vmatpush1.msra.mxu0 0.0
    %883 = vmatprep.subr.mxu0 0.0
    %884 = vmatpush1.msra.mxu0 0.0
    %885 = vmatprep.subr.mxu0 0.0
    %886 = vmatpush1.msra.mxu0 0.0
    %887 = vmatprep.subr.mxu0 0.0
    %888 = vmatpush1.msra.mxu0 0.0
    %889 = vmatprep.subr.mxu0 0.0
    %890 = vmatpush1.msra.mxu0 0.0
    %891 = vmatprep.subr.mxu0 0.0
    %892 = vmatpush1.msra.mxu0 0.0
    %893 = vmatprep.subr.mxu0 0.0
    %894 = vmatpush1.msra.mxu0 0.0
    %895 = vmatprep.subr.mxu0 0.0
    %896 = vmatpush1.msra.mxu0 0.0
    %897 = vmatprep.subr.mxu0 0.0
    %898 = vmatpush1.msra.mxu0 0.0
    %899 = vmatprep.subr.mxu0 0.0
    %900 = vmatpush1.msra.mxu0 0.0
    %901 = vmatprep.subr.mxu0 0.0
    %902 = vmatpush1.msra.mxu0 0.0
    %903 = vmatprep.subr.mxu0 0.0
    %904 = vmatpush1.msra.mxu0 0.0
    %905 = vmatprep.subr.mxu0 0.0
    %906 = vmatpush1.msra.mxu0 0.0
    %907 = vmatprep.subr.mxu0 0.0
    %908 = vmatpush1.msra.mxu0 0.0
    %909 = vmatprep.subr.mxu0 0.0
    %910 = vmatpush1.msra.mxu0 0.0
    %911 = vmatprep.subr.mxu0 0.0
    %912 = vmatpush1.msra.mxu0 0.0
    %913 = vmatprep.subr.mxu0 0.0
    %914 = vmatpush1.msra.mxu0 0.0
    %915 = vmatprep.subr.mxu0 0.0
    %916 = vmatpush1.msra.mxu0 0.0
    %917 = vmatprep.subr.mxu0 0.0
    %918 = vmatpush1.msra.mxu0 0.0
    %919 = vmatprep.subr.mxu0 0.0
    %920 = vmatpush1.msra.mxu0 0.0
    %921 = vmatprep.subr.mxu0 0.0
    %922 = vmatpush1.msra.mxu0 0.0
    %923 = vmatprep.subr.mxu0 0.0
    %924 = vmatpush1.msra.mxu0 0.0
    %925 = vmatprep.mubr.f32.mxu0 0.0
    %926 = vmatmul.mubr.f32.gmra.mrb[0].mxu0 %v859
    %v927 = vpop.f32.mrb[0].mxu0
    %v928 = vadd.f32 0.0, %v927
    %v929 = vpop.f32.mrb[0].mxu0
    %930 = vdwg.mxu0
    %v931 = vadd.f32 %v856, %v928
    %v932 = vsub.f32 0.0, %v931
    %v933 = vmul.f32 %v932, 1.442695
    %v934 = vpow.pop %v933
    %v935 = vadd.f32 %v934, 1.0
    %v936 = vrcp.pop %v935
    %v937 = vmul.f32 1.0, %v936
    %v938 = vtanh.pop %v931
    %v939 = vmul.f32 %v937, %v676
    %941 = vrot.lane.b32.xlu0 %v938, 32
    %v942 = vpop.permute.xlu0 %941
    %v944 = vmul.f32 %v937, %v942
    %946 = vrot.lane.b32.xlu0 %v944, 32
    %v947 = vpop.permute.xlu0 %946
    %v949 = vadd.f32 %v939, %v947
    %v950 = vtanh.pop %v949
    %952 = vrot.lane.b32.xlu0 %v950, 32
    %v953 = vpop.permute.xlu0 %952
    %v955 = vmul.f32 %v937, %v953
    %957 = vrot.lane.b32.xlu0 %v955, 64
    %v958 = vpop.permute.xlu0 %957
    %960 = vst.msk [vmem:[#allocation3 + $0x4] sm:$0x3] %vm413, %v958
    %v961 = vld [vmem:[#allocation2 + $0x6] sm:$0x3]
    %962 = vmatprep.subr.mxu0 0.0
    %963 = vmatpush1.msra.mxu0 %v122
    %964 = vmatprep.subr.mxu0 0.0
    %965 = vmatpush1.msra.mxu0 %v123
    %966 = vmatprep.subr.mxu0 0.0
    %967 = vmatpush1.msra.mxu0 %v124
    %968 = vmatprep.subr.mxu0 0.0
    %969 = vmatpush1.msra.mxu0 %v125
    %970 = vmatprep.subr.mxu0 0.0
    %971 = vmatpush1.msra.mxu0 0.0
    %972 = vmatprep.subr.mxu0 0.0
    %973 = vmatpush1.msra.mxu0 0.0
    %974 = vmatprep.subr.mxu0 0.0
    %975 = vmatpush1.msra.mxu0 0.0
    %976 = vmatprep.subr.mxu0 0.0
    %977 = vmatpush1.msra.mxu0 0.0
    %978 = vmatprep.subr.mxu0 0.0
    %979 = vmatpush1.msra.mxu0 0.0
    %980 = vmatprep.subr.mxu0 0.0
    %981 = vmatpush1.msra.mxu0 0.0
    %982 = vmatprep.subr.mxu0 0.0
    %983 = vmatpush1.msra.mxu0 0.0
    %984 = vmatprep.subr.mxu0 0.0
    %985 = vmatpush1.msra.mxu0 0.0
    %986 = vmatprep.subr.mxu0 0.0
    %987 = vmatpush1.msra.mxu0 0.0
    %988 = vmatprep.subr.mxu0 0.0
    %989 = vmatpush1.msra.mxu0 0.0
    %990 = vmatprep.subr.mxu0 0.0
    %991 = vmatpush1.msra.mxu0 0.0
    %992 = vmatprep.subr.mxu0 0.0
    %993 = vmatpush1.msra.mxu0 0.0
    %994 = vmatprep.subr.mxu0 0.0
    %995 = vmatpush1.msra.mxu0 0.0
    %996 = vmatprep.subr.mxu0 0.0
    %997 = vmatpush1.msra.mxu0 0.0
    %998 = vmatprep.subr.mxu0 0.0
    %999 = vmatpush1.msra.mxu0 0.0
    %1000 = vmatprep.subr.mxu0 0.0
    %1001 = vmatpush1.msra.mxu0 0.0
    %1002 = vmatprep.subr.mxu0 0.0
    %1003 = vmatpush1.msra.mxu0 0.0
    %1004 = vmatprep.subr.mxu0 0.0
    %1005 = vmatpush1.msra.mxu0 0.0
    %1006 = vmatprep.subr.mxu0 0.0
    %1007 = vmatpush1.msra.mxu0 0.0
    %1008 = vmatprep.subr.mxu0 0.0
    %1009 = vmatpush1.msra.mxu0 0.0
    %1010 = vmatprep.subr.mxu0 0.0
    %1011 = vmatpush1.msra.mxu0 0.0
    %1012 = vmatprep.subr.mxu0 0.0
    %1013 = vmatpush1.msra.mxu0 0.0
    %1014 = vmatprep.subr.mxu0 0.0
    %1015 = vmatpush1.msra.mxu0 0.0
    %1016 = vmatprep.subr.mxu0 0.0
    %1017 = vmatpush1.msra.mxu0 0.0
    %1018 = vmatprep.subr.mxu0 0.0
    %1019 = vmatpush1.msra.mxu0 0.0
    %1020 = vmatprep.subr.mxu0 0.0
    %1021 = vmatpush1.msra.mxu0 0.0
    %1022 = vmatprep.subr.mxu0 0.0
    %1023 = vmatpush1.msra.mxu0 0.0
    %1024 = vmatprep.subr.mxu0 0.0
    %1025 = vmatpush1.msra.mxu0 0.0
    %1026 = vmatprep.mubr.f32.mxu0 0.0
    %1027 = vmatmul.mubr.f32.gmra.mrb[0].mxu0 %v787
    %v1028 = vpop.f32.mrb[0].mxu0
    %v1029 = vadd.f32 0.0, %v1028
    %v1030 = vpop.f32.mrb[0].mxu0
    %1031 = vdwg.mxu0
    %v1032 = vadd.f32 %v961, %v1029
    %v1033 = vsub.f32 0.0, %v1032
    %v1034 = vmul.f32 %v1033, 1.442695
    %v1035 = vpow.pop %v1034
    %v1036 = vadd.f32 %v1035, 1.0
    %v1037 = vrcp.pop %v1036
    %v1038 = vmul.f32 1.0, %v1037
    %v1039 = vtanh.pop %v1032
    %v1040 = vmul.f32 %v1038, %v777
    %1042 = vrot.lane.b32.xlu0 %v1039, 32
    %v1043 = vpop.permute.xlu0 %1042
    %v1045 = vmul.f32 %v1038, %v1043
    %1047 = vrot.lane.b32.xlu0 %v1045, 32
    %v1048 = vpop.permute.xlu0 %1047
    %v1050 = vadd.f32 %v1040, %v1048
    %v1051 = vtanh.pop %v1050
    %1053 = vrot.lane.b32.xlu0 %v1051, 32
    %v1054 = vpop.permute.xlu0 %1053
    %v1056 = vmul.f32 %v1038, %v1054
    %1058 = vrot.lane.b32.xlu0 %v1056, 64
    %v1059 = vpop.permute.xlu0 %1058
    %v1060 = vsel %vm136, %v1059, 0
    %1062 = vmatprep.subr.mxu0 0.0
    %1063 = vmatpush1.msra.mxu0 %v126
    %1064 = vmatprep.subr.mxu0 0.0
    %1065 = vmatpush1.msra.mxu0 %v127
    %1066 = vmatprep.subr.mxu0 0.0
    %1067 = vmatpush1.msra.mxu0 %v128
    %1068 = vmatprep.subr.mxu0 0.0
    %1069 = vmatpush1.msra.mxu0 %v129
    %1070 = vmatprep.subr.mxu0 0.0
    %1071 = vmatpush1.msra.mxu0 0.0
    %1072 = vmatprep.subr.mxu0 0.0
    %1073 = vmatpush1.msra.mxu0 0.0
    %1074 = vmatprep.subr.mxu0 0.0
    %1075 = vmatpush1.msra.mxu0 0.0
    %1076 = vmatprep.subr.mxu0 0.0
    %1077 = vmatpush1.msra.mxu0 0.0
    %1078 = vmatprep.subr.mxu0 0.0
    %1079 = vmatpush1.msra.mxu0 0.0
    %1080 = vmatprep.subr.mxu0 0.0
    %1081 = vmatpush1.msra.mxu0 0.0
    %1082 = vmatprep.subr.mxu0 0.0
    %1083 = vmatpush1.msra.mxu0 0.0
    %1084 = vmatprep.subr.mxu0 0.0
    %1085 = vmatpush1.msra.mxu0 0.0
    %1086 = vmatprep.subr.mxu0 0.0
    %1087 = vmatpush1.msra.mxu0 0.0
    %1088 = vmatprep.subr.mxu0 0.0
    %1089 = vmatpush1.msra.mxu0 0.0
    %1090 = vmatprep.subr.mxu0 0.0
    %1091 = vmatpush1.msra.mxu0 0.0
    %1092 = vmatprep.subr.mxu0 0.0
    %1093 = vmatpush1.msra.mxu0 0.0
    %1094 = vmatprep.subr.mxu0 0.0
    %1095 = vmatpush1.msra.mxu0 0.0
    %1096 = vmatprep.subr.mxu0 0.0
    %1097 = vmatpush1.msra.mxu0 0.0
    %1098 = vmatprep.subr.mxu0 0.0
    %1099 = vmatpush1.msra.mxu0 0.0
    %1100 = vmatprep.subr.mxu0 0.0
    %1101 = vmatpush1.msra.mxu0 0.0
    %1102 = vmatprep.subr.mxu0 0.0
    %1103 = vmatpush1.msra.mxu0 0.0
    %1104 = vmatprep.subr.mxu0 0.0
    %1105 = vmatpush1.msra.mxu0 0.0
    %1106 = vmatprep.subr.mxu0 0.0
    %1107 = vmatpush1.msra.mxu0 0.0
    %1108 = vmatprep.subr.mxu0 0.0
    %1109 = vmatpush1.msra.mxu0 0.0
    %1110 = vmatprep.subr.mxu0 0.0
    %1111 = vmatpush1.msra.mxu0 0.0
    %1112 = vmatprep.subr.mxu0 0.0
    %1113 = vmatpush1.msra.mxu0 0.0
    %1114 = vmatprep.subr.mxu0 0.0
    %1115 = vmatpush1.msra.mxu0 0.0
    %1116 = vmatprep.subr.mxu0 0.0
    %1117 = vmatpush1.msra.mxu0 0.0
    %1118 = vmatprep.subr.mxu0 0.0
    %1119 = vmatpush1.msra.mxu0 0.0
    %1120 = vmatprep.subr.mxu0 0.0
    %1121 = vmatpush1.msra.mxu0 0.0
    %1122 = vmatprep.subr.mxu0 0.0
    %1123 = vmatpush1.msra.mxu0 0.0
    %1124 = vmatprep.subr.mxu0 0.0
    %1125 = vmatpush1.msra.mxu0 0.0
    %1126 = vmatprep.mubr.f32.mxu0 0.0
    %1127 = vmatmul.mubr.f32.gmra.mrb[0].mxu0 %v1060
    %v1128 = vpop.f32.mrb[0].mxu0
    %v1129 = vadd.f32 %v238, %v1128
    %v1130 = vpop.f32.mrb[0].mxu0
    %1131 = vdwg.mxu0
    %v1132 = vsel %vm136, %v958, 0
    %1134 = vmatprep.subr.mxu0 0.0
    %1135 = vmatpush1.msra.mxu0 %v130
    %1136 = vmatprep.subr.mxu0 0.0
    %1137 = vmatpush1.msra.mxu0 %v131
    %1138 = vmatprep.subr.mxu0 0.0
    %1139 = vmatpush1.msra.mxu0 %v132
    %1140 = vmatprep.subr.mxu0 0.0
    %1141 = vmatpush1.msra.mxu0 %v133
    %1142 = vmatprep.subr.mxu0 0.0
    %1143 = vmatpush1.msra.mxu0 0.0
    %1144 = vmatprep.subr.mxu0 0.0
    %1145 = vmatpush1.msra.mxu0 0.0
    %1146 = vmatprep.subr.mxu0 0.0
    %1147 = vmatpush1.msra.mxu0 0.0
    %1148 = vmatprep.subr.mxu0 0.0
    %1149 = vmatpush1.msra.mxu0 0.0
    %1150 = vmatprep.subr.mxu0 0.0
    %1151 = vmatpush1.msra.mxu0 0.0
    %1152 = vmatprep.subr.mxu0 0.0
    %1153 = vmatpush1.msra.mxu0 0.0
    %1154 = vmatprep.subr.mxu0 0.0
    %1155 = vmatpush1.msra.mxu0 0.0
    %1156 = vmatprep.subr.mxu0 0.0
    %1157 = vmatpush1.msra.mxu0 0.0
    %1158 = vmatprep.subr.mxu0 0.0
    %1159 = vmatpush1.msra.mxu0 0.0
    %1160 = vmatprep.subr.mxu0 0.0
    %1161 = vmatpush1.msra.mxu0 0.0
    %1162 = vmatprep.subr.mxu0 0.0
    %1163 = vmatpush1.msra.mxu0 0.0
    %1164 = vmatprep.subr.mxu0 0.0
    %1165 = vmatpush1.msra.mxu0 0.0
    %1166 = vmatprep.subr.mxu0 0.0
    %1167 = vmatpush1.msra.mxu0 0.0
    %1168 = vmatprep.subr.mxu0 0.0
    %1169 = vmatpush1.msra.mxu0 0.0
    %1170 = vmatprep.subr.mxu0 0.0
    %1171 = vmatpush1.msra.mxu0 0.0
    %1172 = vmatprep.subr.mxu0 0.0
    %1173 = vmatpush1.msra.mxu0 0.0
    %1174 = vmatprep.subr.mxu0 0.0
    %1175 = vmatpush1.msra.mxu0 0.0
    %1176 = vmatprep.subr.mxu0 0.0
    %1177 = vmatpush1.msra.mxu0 0.0
    %1178 = vmatprep.subr.mxu0 0.0
    %1179 = vmatpush1.msra.mxu0 0.0
    %1180 = vmatprep.subr.mxu0 0.0
    %1181 = vmatpush1.msra.mxu0 0.0
    %1182 = vmatprep.subr.mxu0 0.0
    %1183 = vmatpush1.msra.mxu0 0.0
    %1184 = vmatprep.subr.mxu0 0.0
    %1185 = vmatpush1.msra.mxu0 0.0
    %1186 = vmatprep.subr.mxu0 0.0
    %1187 = vmatpush1.msra.mxu0 0.0
    %1188 = vmatprep.subr.mxu0 0.0
    %1189 = vmatpush1.msra.mxu0 0.0
    %1190 = vmatprep.subr.mxu0 0.0
    %1191 = vmatpush1.msra.mxu0 0.0
    %1192 = vmatprep.subr.mxu0 0.0
    %1193 = vmatpush1.msra.mxu0 0.0
    %1194 = vmatprep.subr.mxu0 0.0
    %1195 = vmatpush1.msra.mxu0 0.0
    %1196 = vmatprep.subr.mxu0 0.0
    %1197 = vmatpush1.msra.mxu0 0.0
    %1198 = vmatprep.mubr.f32.mxu0 0.0
    %1199 = vmatmul.mubr.f32.gmra.mrb[0].mxu0 %v1132
    %v1200 = vpop.f32.mrb[0].mxu0
    %v1201 = vadd.f32 0.0, %v1200
    %v1202 = vpop.f32.mrb[0].mxu0
    %1203 = vdwg.mxu0
    %v1204 = vadd.f32 %v1129, %v1201
    %v1205 = vsub.f32 0.0, %v1204
    %v1206 = vmul.f32 %v1205, 1.442695
    %v1207 = vpow.pop %v1206
    %v1208 = vadd.f32 %v1207, 1.0
    %v1209 = vrcp.pop %v1208
    %v1210 = vmul.f32 1.0, %v1209
    %v1211 = vtanh.pop %v1204
    %v1212 = vmul.f32 %v1210, %v949
    %1214 = vrot.lane.b32.xlu0 %v1211, 32
    %v1215 = vpop.permute.xlu0 %1214
    %v1217 = vmul.f32 %v1210, %v1215
    %1219 = vrot.lane.b32.xlu0 %v1217, 32
    %v1220 = vpop.permute.xlu0 %1219
    %v1222 = vadd.f32 %v1212, %v1220
    %v1223 = vtanh.pop %v1222
    %1225 = vrot.lane.b32.xlu0 %v1223, 32
    %v1226 = vpop.permute.xlu0 %1225
    %v1228 = vmul.f32 %v1210, %v1226
    %1230 = vrot.lane.b32.xlu0 %v1228, 64
    %v1231 = vpop.permute.xlu0 %1230
    %1233 = vst.msk [vmem:[#allocation3 + $0x6] sm:$0x3] %vm413, %v1231
    %v1234 = vld [vmem:[#allocation2 + $0x8] sm:$0x3]
    %1235 = vmatprep.subr.mxu0 0.0
    %1236 = vmatpush1.msra.mxu0 %v122
    %1237 = vmatprep.subr.mxu0 0.0
    %1238 = vmatpush1.msra.mxu0 %v123
    %1239 = vmatprep.subr.mxu0 0.0
    %1240 = vmatpush1.msra.mxu0 %v124
    %1241 = vmatprep.subr.mxu0 0.0
    %1242 = vmatpush1.msra.mxu0 %v125
    %1243 = vmatprep.subr.mxu0 0.0
    %1244 = vmatpush1.msra.mxu0 0.0
    %1245 = vmatprep.subr.mxu0 0.0
    %1246 = vmatpush1.msra.mxu0 0.0
    %1247 = vmatprep.subr.mxu0 0.0
    %1248 = vmatpush1.msra.mxu0 0.0
    %1249 = vmatprep.subr.mxu0 0.0
    %1250 = vmatpush1.msra.mxu0 0.0
    %1251 = vmatprep.subr.mxu0 0.0
    %1252 = vmatpush1.msra.mxu0 0.0
    %1253 = vmatprep.subr.mxu0 0.0
    %1254 = vmatpush1.msra.mxu0 0.0
    %1255 = vmatprep.subr.mxu0 0.0
    %1256 = vmatpush1.msra.mxu0 0.0
    %1257 = vmatprep.subr.mxu0 0.0
    %1258 = vmatpush1.msra.mxu0 0.0
    %1259 = vmatprep.subr.mxu0 0.0
    %1260 = vmatpush1.msra.mxu0 0.0
    %1261 = vmatprep.subr.mxu0 0.0
    %1262 = vmatpush1.msra.mxu0 0.0
    %1263 = vmatprep.subr.mxu0 0.0
    %1264 = vmatpush1.msra.mxu0 0.0
    %1265 = vmatprep.subr.mxu0 0.0
    %1266 = vmatpush1.msra.mxu0 0.0
    %1267 = vmatprep.subr.mxu0 0.0
    %1268 = vmatpush1.msra.mxu0 0.0
    %1269 = vmatprep.subr.mxu0 0.0
    %1270 = vmatpush1.msra.mxu0 0.0
    %1271 = vmatprep.subr.mxu0 0.0
    %1272 = vmatpush1.msra.mxu0 0.0
    %1273 = vmatprep.subr.mxu0 0.0
    %1274 = vmatpush1.msra.mxu0 0.0
    %1275 = vmatprep.subr.mxu0 0.0
    %1276 = vmatpush1.msra.mxu0 0.0
    %1277 = vmatprep.subr.mxu0 0.0
    %1278 = vmatpush1.msra.mxu0 0.0
    %1279 = vmatprep.subr.mxu0 0.0
    %1280 = vmatpush1.msra.mxu0 0.0
    %1281 = vmatprep.subr.mxu0 0.0
    %1282 = vmatpush1.msra.mxu0 0.0
    %1283 = vmatprep.subr.mxu0 0.0
    %1284 = vmatpush1.msra.mxu0 0.0
    %1285 = vmatprep.subr.mxu0 0.0
    %1286 = vmatpush1.msra.mxu0 0.0
    %1287 = vmatprep.subr.mxu0 0.0
    %1288 = vmatpush1.msra.mxu0 0.0
    %1289 = vmatprep.subr.mxu0 0.0
    %1290 = vmatpush1.msra.mxu0 0.0
    %1291 = vmatprep.subr.mxu0 0.0
    %1292 = vmatpush1.msra.mxu0 0.0
    %1293 = vmatprep.subr.mxu0 0.0
    %1294 = vmatpush1.msra.mxu0 0.0
    %1295 = vmatprep.subr.mxu0 0.0
    %1296 = vmatpush1.msra.mxu0 0.0
    %1297 = vmatprep.subr.mxu0 0.0
    %1298 = vmatpush1.msra.mxu0 0.0
    %1299 = vmatprep.mubr.f32.mxu0 0.0
    %1300 = vmatmul.mubr.f32.gmra.mrb[0].mxu0 %v1060
    %v1301 = vpop.f32.mrb[0].mxu0
    %v1302 = vadd.f32 0.0, %v1301
    %v1303 = vpop.f32.mrb[0].mxu0
    %1304 = vdwg.mxu0
    %v1305 = vadd.f32 %v1234, %v1302
    %v1306 = vsub.f32 0.0, %v1305
    %v1307 = vmul.f32 %v1306, 1.442695
    %v1308 = vpow.pop %v1307
    %v1309 = vadd.f32 %v1308, 1.0
    %v1310 = vrcp.pop %v1309
    %v1311 = vmul.f32 1.0, %v1310
    %v1312 = vtanh.pop %v1305
    %v1313 = vmul.f32 %v1311, %v1050
    %1315 = vrot.lane.b32.xlu0 %v1312, 32
    %v1316 = vpop.permute.xlu0 %1315
    %v1318 = vmul.f32 %v1311, %v1316
    %1320 = vrot.lane.b32.xlu0 %v1318, 32
    %v1321 = vpop.permute.xlu0 %1320
    %v1323 = vadd.f32 %v1313, %v1321
    %v1324 = vtanh.pop %v1323
    %1326 = vrot.lane.b32.xlu0 %v1324, 32
    %v1327 = vpop.permute.xlu0 %1326
    %v1329 = vmul.f32 %v1311, %v1327
    %1331 = vrot.lane.b32.xlu0 %v1329, 64
    %v1332 = vpop.permute.xlu0 %1331
    %v1333 = vsel %vm136, %v1332, 0
    %1335 = vmatprep.subr.mxu0 0.0
    %1336 = vmatpush1.msra.mxu0 %v126
    %1337 = vmatprep.subr.mxu0 0.0
    %1338 = vmatpush1.msra.mxu0 %v127
    %1339 = vmatprep.subr.mxu0 0.0
    %1340 = vmatpush1.msra.mxu0 %v128
    %1341 = vmatprep.subr.mxu0 0.0
    %1342 = vmatpush1.msra.mxu0 %v129
    %1343 = vmatprep.subr.mxu0 0.0
    %1344 = vmatpush1.msra.mxu0 0.0
    %1345 = vmatprep.subr.mxu0 0.0
    %1346 = vmatpush1.msra.mxu0 0.0
    %1347 = vmatprep.subr.mxu0 0.0
    %1348 = vmatpush1.msra.mxu0 0.0
    %1349 = vmatprep.subr.mxu0 0.0
    %1350 = vmatpush1.msra.mxu0 0.0
    %1351 = vmatprep.subr.mxu0 0.0
    %1352 = vmatpush1.msra.mxu0 0.0
    %1353 = vmatprep.subr.mxu0 0.0
    %1354 = vmatpush1.msra.mxu0 0.0
    %1355 = vmatprep.subr.mxu0 0.0
    %1356 = vmatpush1.msra.mxu0 0.0
    %1357 = vmatprep.subr.mxu0 0.0
    %1358 = vmatpush1.msra.mxu0 0.0
    %1359 = vmatprep.subr.mxu0 0.0
    %1360 = vmatpush1.msra.mxu0 0.0
    %1361 = vmatprep.subr.mxu0 0.0
    %1362 = vmatpush1.msra.mxu0 0.0
    %1363 = vmatprep.subr.mxu0 0.0
    %1364 = vmatpush1.msra.mxu0 0.0
    %1365 = vmatprep.subr.mxu0 0.0
    %1366 = vmatpush1.msra.mxu0 0.0
    %1367 = vmatprep.subr.mxu0 0.0
    %1368 = vmatpush1.msra.mxu0 0.0
    %1369 = vmatprep.subr.mxu0 0.0
    %1370 = vmatpush1.msra.mxu0 0.0
    %1371 = vmatprep.subr.mxu0 0.0
    %1372 = vmatpush1.msra.mxu0 0.0
    %1373 = vmatprep.subr.mxu0 0.0
    %1374 = vmatpush1.msra.mxu0 0.0
    %1375 = vmatprep.subr.mxu0 0.0
    %1376 = vmatpush1.msra.mxu0 0.0
    %1377 = vmatprep.subr.mxu0 0.0
    %1378 = vmatpush1.msra.mxu0 0.0
    %1379 = vmatprep.subr.mxu0 0.0
    %1380 = vmatpush1.msra.mxu0 0.0
    %1381 = vmatprep.subr.mxu0 0.0
    %1382 = vmatpush1.msra.mxu0 0.0
    %1383 = vmatprep.subr.mxu0 0.0
    %1384 = vmatpush1.msra.mxu0 0.0
    %1385 = vmatprep.subr.mxu0 0.0
    %1386 = vmatpush1.msra.mxu0 0.0
    %1387 = vmatprep.subr.mxu0 0.0
    %1388 = vmatpush1.msra.mxu0 0.0
    %1389 = vmatprep.subr.mxu0 0.0
    %1390 = vmatpush1.msra.mxu0 0.0
    %1391 = vmatprep.subr.mxu0 0.0
    %1392 = vmatpush1.msra.mxu0 0.0
    %1393 = vmatprep.subr.mxu0 0.0
    %1394 = vmatpush1.msra.mxu0 0.0
    %1395 = vmatprep.subr.mxu0 0.0
    %1396 = vmatpush1.msra.mxu0 0.0
    %1397 = vmatprep.subr.mxu0 0.0
    %1398 = vmatpush1.msra.mxu0 0.0
    %1399 = vmatprep.mubr.f32.mxu0 0.0
    %1400 = vmatmul.mubr.f32.gmra.mrb[0].mxu0 %v1333
    %v1401 = vpop.f32.mrb[0].mxu0
    %v1402 = vadd.f32 %v238, %v1401
    %v1403 = vpop.f32.mrb[0].mxu0
    %1404 = vdwg.mxu0
    %v1405 = vsel %vm136, %v1231, 0
    %1407 = vmatprep.subr.mxu0 0.0
    %1408 = vmatpush1.msra.mxu0 %v130
    %1409 = vmatprep.subr.mxu0 0.0
    %1410 = vmatpush1.msra.mxu0 %v131
    %1411 = vmatprep.subr.mxu0 0.0
    %1412 = vmatpush1.msra.mxu0 %v132
    %1413 = vmatprep.subr.mxu0 0.0
    %1414 = vmatpush1.msra.mxu0 %v133
    %1415 = vmatprep.subr.mxu0 0.0
    %1416 = vmatpush1.msra.mxu0 0.0
    %1417 = vmatprep.subr.mxu0 0.0
    %1418 = vmatpush1.msra.mxu0 0.0
    %1419 = vmatprep.subr.mxu0 0.0
    %1420 = vmatpush1.msra.mxu0 0.0
    %1421 = vmatprep.subr.mxu0 0.0
    %1422 = vmatpush1.msra.mxu0 0.0
    %1423 = vmatprep.subr.mxu0 0.0
    %1424 = vmatpush1.msra.mxu0 0.0
    %1425 = vmatprep.subr.mxu0 0.0
    %1426 = vmatpush1.msra.mxu0 0.0
    %1427 = vmatprep.subr.mxu0 0.0
    %1428 = vmatpush1.msra.mxu0 0.0
    %1429 = vmatprep.subr.mxu0 0.0
    %1430 = vmatpush1.msra.mxu0 0.0
    %1431 = vmatprep.subr.mxu0 0.0
    %1432 = vmatpush1.msra.mxu0 0.0
    %1433 = vmatprep.subr.mxu0 0.0
    %1434 = vmatpush1.msra.mxu0 0.0
    %1435 = vmatprep.subr.mxu0 0.0
    %1436 = vmatpush1.msra.mxu0 0.0
    %1437 = vmatprep.subr.mxu0 0.0
    %1438 = vmatpush1.msra.mxu0 0.0
    %1439 = vmatprep.subr.mxu0 0.0
    %1440 = vmatpush1.msra.mxu0 0.0
    %1441 = vmatprep.subr.mxu0 0.0
    %1442 = vmatpush1.msra.mxu0 0.0
    %1443 = vmatprep.subr.mxu0 0.0
    %1444 = vmatpush1.msra.mxu0 0.0
    %1445 = vmatprep.subr.mxu0 0.0
    %1446 = vmatpush1.msra.mxu0 0.0
    %1447 = vmatprep.subr.mxu0 0.0
    %1448 = vmatpush1.msra.mxu0 0.0
    %1449 = vmatprep.subr.mxu0 0.0
    %1450 = vmatpush1.msra.mxu0 0.0
    %1451 = vmatprep.subr.mxu0 0.0
    %1452 = vmatpush1.msra.mxu0 0.0
    %1453 = vmatprep.subr.mxu0 0.0
    %1454 = vmatpush1.msra.mxu0 0.0
    %1455 = vmatprep.subr.mxu0 0.0
    %1456 = vmatpush1.msra.mxu0 0.0
    %1457 = vmatprep.subr.mxu0 0.0
    %1458 = vmatpush1.msra.mxu0 0.0
    %1459 = vmatprep.subr.mxu0 0.0
    %1460 = vmatpush1.msra.mxu0 0.0
    %1461 = vmatprep.subr.mxu0 0.0
    %1462 = vmatpush1.msra.mxu0 0.0
    %1463 = vmatprep.subr.mxu0 0.0
    %1464 = vmatpush1.msra.mxu0 0.0
    %1465 = vmatprep.subr.mxu0 0.0
    %1466 = vmatpush1.msra.mxu0 0.0
    %1467 = vmatprep.subr.mxu0 0.0
    %1468 = vmatpush1.msra.mxu0 0.0
    %1469 = vmatprep.subr.mxu0 0.0
    %1470 = vmatpush1.msra.mxu0 0.0
    %1471 = vmatprep.mubr.f32.mxu0 0.0
    %1472 = vmatmul.mubr.f32.gmra.mrb[0].mxu0 %v1405
    %v1473 = vpop.f32.mrb[0].mxu0
    %v1474 = vadd.f32 0.0, %v1473
    %v1475 = vpop.f32.mrb[0].mxu0
    %1476 = vdwg.mxu0
    %v1477 = vadd.f32 %v1402, %v1474
    %v1478 = vsub.f32 0.0, %v1477
    %v1479 = vmul.f32 %v1478, 1.442695
    %v1480 = vpow.pop %v1479
    %v1481 = vadd.f32 %v1480, 1.0
    %v1482 = vrcp.pop %v1481
    %v1483 = vmul.f32 1.0, %v1482
    %v1484 = vtanh.pop %v1477
    %v1485 = vmul.f32 %v1483, %v1222
    %1487 = vrot.lane.b32.xlu0 %v1484, 32
    %v1488 = vpop.permute.xlu0 %1487
    %v1490 = vmul.f32 %v1483, %v1488
    %1492 = vrot.lane.b32.xlu0 %v1490, 32
    %v1493 = vpop.permute.xlu0 %1492
    %v1495 = vadd.f32 %v1485, %v1493
    %v1496 = vtanh.pop %v1495
    %1498 = vrot.lane.b32.xlu0 %v1496, 32
    %v1499 = vpop.permute.xlu0 %1498
    %v1501 = vmul.f32 %v1483, %v1499
    %1503 = vrot.lane.b32.xlu0 %v1501, 64
    %v1504 = vpop.permute.xlu0 %1503
    %1506 = vst.msk [vmem:[#allocation3 + $0x8] sm:$0x3] %vm413, %v1504
    %v1507 = vld [vmem:[#allocation2 + $0xa] sm:$0x3]
    %1508 = vmatprep.subr.mxu0 0.0
    %1509 = vmatpush1.msra.mxu0 %v122
    %1510 = vmatprep.subr.mxu0 0.0
    %1511 = vmatpush1.msra.mxu0 %v123
    %1512 = vmatprep.subr.mxu0 0.0
    %1513 = vmatpush1.msra.mxu0 %v124
    %1514 = vmatprep.subr.mxu0 0.0
    %1515 = vmatpush1.msra.mxu0 %v125
    %1516 = vmatprep.subr.mxu0 0.0
    %1517 = vmatpush1.msra.mxu0 0.0
    %1518 = vmatprep.subr.mxu0 0.0
    %1519 = vmatpush1.msra.mxu0 0.0
    %1520 = vmatprep.subr.mxu0 0.0
    %1521 = vmatpush1.msra.mxu0 0.0
    %1522 = vmatprep.subr.mxu0 0.0
    %1523 = vmatpush1.msra.mxu0 0.0
    %1524 = vmatprep.subr.mxu0 0.0
    %1525 = vmatpush1.msra.mxu0 0.0
    %1526 = vmatprep.subr.mxu0 0.0
    %1527 = vmatpush1.msra.mxu0 0.0
    %1528 = vmatprep.subr.mxu0 0.0
    %1529 = vmatpush1.msra.mxu0 0.0
    %1530 = vmatprep.subr.mxu0 0.0
    %1531 = vmatpush1.msra.mxu0 0.0
    %1532 = vmatprep.subr.mxu0 0.0
    %1533 = vmatpush1.msra.mxu0 0.0
    %1534 = vmatprep.subr.mxu0 0.0
    %1535 = vmatpush1.msra.mxu0 0.0
    %1536 = vmatprep.subr.mxu0 0.0
    %1537 = vmatpush1.msra.mxu0 0.0
    %1538 = vmatprep.subr.mxu0 0.0
    %1539 = vmatpush1.msra.mxu0 0.0
    %1540 = vmatprep.subr.mxu0 0.0
    %1541 = vmatpush1.msra.mxu0 0.0
    %1542 = vmatprep.subr.mxu0 0.0
    %1543 = vmatpush1.msra.mxu0 0.0
    %1544 = vmatprep.subr.mxu0 0.0
    %1545 = vmatpush1.msra.mxu0 0.0
    %1546 = vmatprep.subr.mxu0 0.0
    %1547 = vmatpush1.msra.mxu0 0.0
    %1548 = vmatprep.subr.mxu0 0.0
    %1549 = vmatpush1.msra.mxu0 0.0
    %1550 = vmatprep.subr.mxu0 0.0
    %1551 = vmatpush1.msra.mxu0 0.0
    %1552 = vmatprep.subr.mxu0 0.0
    %1553 = vmatpush1.msra.mxu0 0.0
    %1554 = vmatprep.subr.mxu0 0.0
    %1555 = vmatpush1.msra.mxu0 0.0
    %1556 = vmatprep.subr.mxu0 0.0
    %1557 = vmatpush1.msra.mxu0 0.0
    %1558 = vmatprep.subr.mxu0 0.0
    %1559 = vmatpush1.msra.mxu0 0.0
    %1560 = vmatprep.subr.mxu0 0.0
    %1561 = vmatpush1.msra.mxu0 0.0
    %1562 = vmatprep.subr.mxu0 0.0
    %1563 = vmatpush1.msra.mxu0 0.0
    %1564 = vmatprep.subr.mxu0 0.0
    %1565 = vmatpush1.msra.mxu0 0.0
    %1566 = vmatprep.subr.mxu0 0.0
    %1567 = vmatpush1.msra.mxu0 0.0
    %1568 = vmatprep.subr.mxu0 0.0
    %1569 = vmatpush1.msra.mxu0 0.0
    %1570 = vmatprep.subr.mxu0 0.0
    %1571 = vmatpush1.msra.mxu0 0.0
    %1572 = vmatprep.mubr.f32.mxu0 0.0
    %1573 = vmatmul.mubr.f32.gmra.mrb[0].mxu0 %v1333
    %v1574 = vpop.f32.mrb[0].mxu0
    %v1575 = vadd.f32 0.0, %v1574
    %v1576 = vpop.f32.mrb[0].mxu0
    %1577 = vdwg.mxu0
    %v1578 = vadd.f32 %v1507, %v1575
    %v1579 = vsub.f32 0.0, %v1578
    %v1580 = vmul.f32 %v1579, 1.442695
    %v1581 = vpow.pop %v1580
    %v1582 = vadd.f32 %v1581, 1.0
    %v1583 = vrcp.pop %v1582
    %v1584 = vmul.f32 1.0, %v1583
    %v1585 = vtanh.pop %v1578
    %v1586 = vmul.f32 %v1584, %v1323
    %1588 = vrot.lane.b32.xlu0 %v1585, 32
    %v1589 = vpop.permute.xlu0 %1588
    %v1591 = vmul.f32 %v1584, %v1589
    %1593 = vrot.lane.b32.xlu0 %v1591, 32
    %v1594 = vpop.permute.xlu0 %1593
    %v1596 = vadd.f32 %v1586, %v1594
    %v1597 = vtanh.pop %v1596
    %1599 = vrot.lane.b32.xlu0 %v1597, 32
    %v1600 = vpop.permute.xlu0 %1599
    %v1602 = vmul.f32 %v1584, %v1600
    %1604 = vrot.lane.b32.xlu0 %v1602, 64
    %v1605 = vpop.permute.xlu0 %1604
    %v1606 = vsel %vm136, %v1605, 0
    %1608 = vmatprep.subr.mxu0 0.0
    %1609 = vmatpush1.msra.mxu0 %v126
    %1610 = vmatprep.subr.mxu0 0.0
    %1611 = vmatpush1.msra.mxu0 %v127
    %1612 = vmatprep.subr.mxu0 0.0
    %1613 = vmatpush1.msra.mxu0 %v128
    %1614 = vmatprep.subr.mxu0 0.0
    %1615 = vmatpush1.msra.mxu0 %v129
    %1616 = vmatprep.subr.mxu0 0.0
    %1617 = vmatpush1.msra.mxu0 0.0
    %1618 = vmatprep.subr.mxu0 0.0
    %1619 = vmatpush1.msra.mxu0 0.0
    %1620 = vmatprep.subr.mxu0 0.0
    %1621 = vmatpush1.msra.mxu0 0.0
    %1622 = vmatprep.subr.mxu0 0.0
    %1623 = vmatpush1.msra.mxu0 0.0
    %1624 = vmatprep.subr.mxu0 0.0
    %1625 = vmatpush1.msra.mxu0 0.0
    %1626 = vmatprep.subr.mxu0 0.0
    %1627 = vmatpush1.msra.mxu0 0.0
    %1628 = vmatprep.subr.mxu0 0.0
    %1629 = vmatpush1.msra.mxu0 0.0
    %1630 = vmatprep.subr.mxu0 0.0
    %1631 = vmatpush1.msra.mxu0 0.0
    %1632 = vmatprep.subr.mxu0 0.0
    %1633 = vmatpush1.msra.mxu0 0.0
    %1634 = vmatprep.subr.mxu0 0.0
    %1635 = vmatpush1.msra.mxu0 0.0
    %1636 = vmatprep.subr.mxu0 0.0
    %1637 = vmatpush1.msra.mxu0 0.0
    %1638 = vmatprep.subr.mxu0 0.0
    %1639 = vmatpush1.msra.mxu0 0.0
    %1640 = vmatprep.subr.mxu0 0.0
    %1641 = vmatpush1.msra.mxu0 0.0
    %1642 = vmatprep.subr.mxu0 0.0
    %1643 = vmatpush1.msra.mxu0 0.0
    %1644 = vmatprep.subr.mxu0 0.0
    %1645 = vmatpush1.msra.mxu0 0.0
    %1646 = vmatprep.subr.mxu0 0.0
    %1647 = vmatpush1.msra.mxu0 0.0
    %1648 = vmatprep.subr.mxu0 0.0
    %1649 = vmatpush1.msra.mxu0 0.0
    %1650 = vmatprep.subr.mxu0 0.0
    %1651 = vmatpush1.msra.mxu0 0.0
    %1652 = vmatprep.subr.mxu0 0.0
    %1653 = vmatpush1.msra.mxu0 0.0
    %1654 = vmatprep.subr.mxu0 0.0
    %1655 = vmatpush1.msra.mxu0 0.0
    %1656 = vmatprep.subr.mxu0 0.0
    %1657 = vmatpush1.msra.mxu0 0.0
    %1658 = vmatprep.subr.mxu0 0.0
    %1659 = vmatpush1.msra.mxu0 0.0
    %1660 = vmatprep.subr.mxu0 0.0
    %1661 = vmatpush1.msra.mxu0 0.0
    %1662 = vmatprep.subr.mxu0 0.0
    %1663 = vmatpush1.msra.mxu0 0.0
    %1664 = vmatprep.subr.mxu0 0.0
    %1665 = vmatpush1.msra.mxu0 0.0
    %1666 = vmatprep.subr.mxu0 0.0
    %1667 = vmatpush1.msra.mxu0 0.0
    %1668 = vmatprep.subr.mxu0 0.0
    %1669 = vmatpush1.msra.mxu0 0.0
    %1670 = vmatprep.subr.mxu0 0.0
    %1671 = vmatpush1.msra.mxu0 0.0
    %1672 = vmatprep.mubr.f32.mxu0 0.0
    %1673 = vmatmul.mubr.f32.gmra.mrb[0].mxu0 %v1606
    %v1674 = vpop.f32.mrb[0].mxu0
    %v1675 = vadd.f32 %v238, %v1674
    %v1676 = vpop.f32.mrb[0].mxu0
    %1677 = vdwg.mxu0
    %v1678 = vsel %vm136, %v1504, 0
    %1680 = vmatprep.subr.mxu0 0.0
    %1681 = vmatpush1.msra.mxu0 %v130
    %1682 = vmatprep.subr.mxu0 0.0
    %1683 = vmatpush1.msra.mxu0 %v131
    %1684 = vmatprep.subr.mxu0 0.0
    %1685 = vmatpush1.msra.mxu0 %v132
    %1686 = vmatprep.subr.mxu0 0.0
    %1687 = vmatpush1.msra.mxu0 %v133
    %1688 = vmatprep.subr.mxu0 0.0
    %1689 = vmatpush1.msra.mxu0 0.0
    %1690 = vmatprep.subr.mxu0 0.0
    %1691 = vmatpush1.msra.mxu0 0.0
    %1692 = vmatprep.subr.mxu0 0.0
    %1693 = vmatpush1.msra.mxu0 0.0
    %1694 = vmatprep.subr.mxu0 0.0
    %1695 = vmatpush1.msra.mxu0 0.0
    %1696 = vmatprep.subr.mxu0 0.0
    %1697 = vmatpush1.msra.mxu0 0.0
    %1698 = vmatprep.subr.mxu0 0.0
    %1699 = vmatpush1.msra.mxu0 0.0
    %1700 = vmatprep.subr.mxu0 0.0
    %1701 = vmatpush1.msra.mxu0 0.0
    %1702 = vmatprep.subr.mxu0 0.0
    %1703 = vmatpush1.msra.mxu0 0.0
    %1704 = vmatprep.subr.mxu0 0.0
    %1705 = vmatpush1.msra.mxu0 0.0
    %1706 = vmatprep.subr.mxu0 0.0
    %1707 = vmatpush1.msra.mxu0 0.0
    %1708 = vmatprep.subr.mxu0 0.0
    %1709 = vmatpush1.msra.mxu0 0.0
    %1710 = vmatprep.subr.mxu0 0.0
    %1711 = vmatpush1.msra.mxu0 0.0
    %1712 = vmatprep.subr.mxu0 0.0
    %1713 = vmatpush1.msra.mxu0 0.0
    %1714 = vmatprep.subr.mxu0 0.0
    %1715 = vmatpush1.msra.mxu0 0.0
    %1716 = vmatprep.subr.mxu0 0.0
    %1717 = vmatpush1.msra.mxu0 0.0
    %1718 = vmatprep.subr.mxu0 0.0
    %1719 = vmatpush1.msra.mxu0 0.0
    %1720 = vmatprep.subr.mxu0 0.0
    %1721 = vmatpush1.msra.mxu0 0.0
    %1722 = vmatprep.subr.mxu0 0.0
    %1723 = vmatpush1.msra.mxu0 0.0
    %1724 = vmatprep.subr.mxu0 0.0
    %1725 = vmatpush1.msra.mxu0 0.0
    %1726 = vmatprep.subr.mxu0 0.0
    %1727 = vmatpush1.msra.mxu0 0.0
    %1728 = vmatprep.subr.mxu0 0.0
    %1729 = vmatpush1.msra.mxu0 0.0
    %1730 = vmatprep.subr.mxu0 0.0
    %1731 = vmatpush1.msra.mxu0 0.0
    %1732 = vmatprep.subr.mxu0 0.0
    %1733 = vmatpush1.msra.mxu0 0.0
    %1734 = vmatprep.subr.mxu0 0.0
    %1735 = vmatpush1.msra.mxu0 0.0
    %1736 = vmatprep.subr.mxu0 0.0
    %1737 = vmatpush1.msra.mxu0 0.0
    %1738 = vmatprep.subr.mxu0 0.0
    %1739 = vmatpush1.msra.mxu0 0.0
    %1740 = vmatprep.subr.mxu0 0.0
    %1741 = vmatpush1.msra.mxu0 0.0
    %1742 = vmatprep.subr.mxu0 0.0
    %1743 = vmatpush1.msra.mxu0 0.0
    %1744 = vmatprep.mubr.f32.mxu0 0.0
    %1745 = vmatmul.mubr.f32.gmra.mrb[0].mxu0 %v1678
    %v1746 = vpop.f32.mrb[0].mxu0
    %v1747 = vadd.f32 0.0, %v1746
    %v1748 = vpop.f32.mrb[0].mxu0
    %1749 = vdwg.mxu0
    %v1750 = vadd.f32 %v1675, %v1747
    %v1751 = vsub.f32 0.0, %v1750
    %v1752 = vmul.f32 %v1751, 1.442695
    %v1753 = vpow.pop %v1752
    %v1754 = vadd.f32 %v1753, 1.0
    %v1755 = vrcp.pop %v1754
    %v1756 = vmul.f32 1.0, %v1755
    %v1757 = vtanh.pop %v1750
    %v1758 = vmul.f32 %v1756, %v1495
    %1760 = vrot.lane.b32.xlu0 %v1757, 32
    %v1761 = vpop.permute.xlu0 %1760
    %v1763 = vmul.f32 %v1756, %v1761
    %1765 = vrot.lane.b32.xlu0 %v1763, 32
    %v1766 = vpop.permute.xlu0 %1765
    %v1768 = vadd.f32 %v1758, %v1766
    %v1769 = vtanh.pop %v1768
    %1771 = vrot.lane.b32.xlu0 %v1769, 32
    %v1772 = vpop.permute.xlu0 %1771
    %v1774 = vmul.f32 %v1756, %v1772
    %1776 = vrot.lane.b32.xlu0 %v1774, 64
    %v1777 = vpop.permute.xlu0 %1776
    %1779 = vst.msk [vmem:[#allocation3 + $0xa] sm:$0x3] %vm413, %v1777
    %v1780 = vld [vmem:[#allocation2 + $0xc] sm:$0x3]
    %1781 = vmatprep.subr.mxu0 0.0
    %1782 = vmatpush1.msra.mxu0 %v122
    %1783 = vmatprep.subr.mxu0 0.0
    %1784 = vmatpush1.msra.mxu0 %v123
    %1785 = vmatprep.subr.mxu0 0.0
    %1786 = vmatpush1.msra.mxu0 %v124
    %1787 = vmatprep.subr.mxu0 0.0
    %1788 = vmatpush1.msra.mxu0 %v125
    %1789 = vmatprep.subr.mxu0 0.0
    %1790 = vmatpush1.msra.mxu0 0.0
    %1791 = vmatprep.subr.mxu0 0.0
    %1792 = vmatpush1.msra.mxu0 0.0
    %1793 = vmatprep.subr.mxu0 0.0
    %1794 = vmatpush1.msra.mxu0 0.0
    %1795 = vmatprep.subr.mxu0 0.0
    %1796 = vmatpush1.msra.mxu0 0.0
    %1797 = vmatprep.subr.mxu0 0.0
    %1798 = vmatpush1.msra.mxu0 0.0
    %1799 = vmatprep.subr.mxu0 0.0
    %1800 = vmatpush1.msra.mxu0 0.0
    %1801 = vmatprep.subr.mxu0 0.0
    %1802 = vmatpush1.msra.mxu0 0.0
    %1803 = vmatprep.subr.mxu0 0.0
    %1804 = vmatpush1.msra.mxu0 0.0
    %1805 = vmatprep.subr.mxu0 0.0
    %1806 = vmatpush1.msra.mxu0 0.0
    %1807 = vmatprep.subr.mxu0 0.0
    %1808 = vmatpush1.msra.mxu0 0.0
    %1809 = vmatprep.subr.mxu0 0.0
    %1810 = vmatpush1.msra.mxu0 0.0
    %1811 = vmatprep.subr.mxu0 0.0
    %1812 = vmatpush1.msra.mxu0 0.0
    %1813 = vmatprep.subr.mxu0 0.0
    %1814 = vmatpush1.msra.mxu0 0.0
    %1815 = vmatprep.subr.mxu0 0.0
    %1816 = vmatpush1.msra.mxu0 0.0
    %1817 = vmatprep.subr.mxu0 0.0
    %1818 = vmatpush1.msra.mxu0 0.0
    %1819 = vmatprep.subr.mxu0 0.0
    %1820 = vmatpush1.msra.mxu0 0.0
    %1821 = vmatprep.subr.mxu0 0.0
    %1822 = vmatpush1.msra.mxu0 0.0
    %1823 = vmatprep.subr.mxu0 0.0
    %1824 = vmatpush1.msra.mxu0 0.0
    %1825 = vmatprep.subr.mxu0 0.0
    %1826 = vmatpush1.msra.mxu0 0.0
    %1827 = vmatprep.subr.mxu0 0.0
    %1828 = vmatpush1.msra.mxu0 0.0
    %1829 = vmatprep.subr.mxu0 0.0
    %1830 = vmatpush1.msra.mxu0 0.0
    %1831 = vmatprep.subr.mxu0 0.0
    %1832 = vmatpush1.msra.mxu0 0.0
    %1833 = vmatprep.subr.mxu0 0.0
    %1834 = vmatpush1.msra.mxu0 0.0
    %1835 = vmatprep.subr.mxu0 0.0
    %1836 = vmatpush1.msra.mxu0 0.0
    %1837 = vmatprep.subr.mxu0 0.0
    %1838 = vmatpush1.msra.mxu0 0.0
    %1839 = vmatprep.subr.mxu0 0.0
    %1840 = vmatpush1.msra.mxu0 0.0
    %1841 = vmatprep.subr.mxu0 0.0
    %1842 = vmatpush1.msra.mxu0 0.0
    %1843 = vmatprep.subr.mxu0 0.0
    %1844 = vmatpush1.msra.mxu0 0.0
    %1845 = vmatprep.mubr.f32.mxu0 0.0
    %1846 = vmatmul.mubr.f32.gmra.mrb[0].mxu0 %v1606
    %v1847 = vpop.f32.mrb[0].mxu0
    %v1848 = vadd.f32 0.0, %v1847
    %v1849 = vpop.f32.mrb[0].mxu0
    %1850 = vdwg.mxu0
    %v1851 = vadd.f32 %v1780, %v1848
    %v1852 = vsub.f32 0.0, %v1851
    %v1853 = vmul.f32 %v1852, 1.442695
    %v1854 = vpow.pop %v1853
    %v1855 = vadd.f32 %v1854, 1.0
    %v1856 = vrcp.pop %v1855
    %v1857 = vmul.f32 1.0, %v1856
    %v1858 = vtanh.pop %v1851
    %v1859 = vmul.f32 %v1857, %v1596
    %1861 = vrot.lane.b32.xlu0 %v1858, 32
    %v1862 = vpop.permute.xlu0 %1861
    %v1864 = vmul.f32 %v1857, %v1862
    %1866 = vrot.lane.b32.xlu0 %v1864, 32
    %v1867 = vpop.permute.xlu0 %1866
    %v1869 = vadd.f32 %v1859, %v1867
    %v1870 = vtanh.pop %v1869
    %1872 = vrot.lane.b32.xlu0 %v1870, 32
    %v1873 = vpop.permute.xlu0 %1872
    %v1875 = vmul.f32 %v1857, %v1873
    %1877 = vrot.lane.b32.xlu0 %v1875, 64
    %v1878 = vpop.permute.xlu0 %1877
    %v1879 = vsel %vm136, %v1878, 0
    %1881 = vmatprep.subr.mxu0 0.0
    %1882 = vmatpush1.msra.mxu0 %v126
    %1883 = vmatprep.subr.mxu0 0.0
    %1884 = vmatpush1.msra.mxu0 %v127
    %1885 = vmatprep.subr.mxu0 0.0
    %1886 = vmatpush1.msra.mxu0 %v128
    %1887 = vmatprep.subr.mxu0 0.0
    %1888 = vmatpush1.msra.mxu0 %v129
    %1889 = vmatprep.subr.mxu0 0.0
    %1890 = vmatpush1.msra.mxu0 0.0
    %1891 = vmatprep.subr.mxu0 0.0
    %1892 = vmatpush1.msra.mxu0 0.0
    %1893 = vmatprep.subr.mxu0 0.0
    %1894 = vmatpush1.msra.mxu0 0.0
    %1895 = vmatprep.subr.mxu0 0.0
    %1896 = vmatpush1.msra.mxu0 0.0
    %1897 = vmatprep.subr.mxu0 0.0
    %1898 = vmatpush1.msra.mxu0 0.0
    %1899 = vmatprep.subr.mxu0 0.0
    %1900 = vmatpush1.msra.mxu0 0.0
    %1901 = vmatprep.subr.mxu0 0.0
    %1902 = vmatpush1.msra.mxu0 0.0
    %1903 = vmatprep.subr.mxu0 0.0
    %1904 = vmatpush1.msra.mxu0 0.0
    %1905 = vmatprep.subr.mxu0 0.0
    %1906 = vmatpush1.msra.mxu0 0.0
    %1907 = vmatprep.subr.mxu0 0.0
    %1908 = vmatpush1.msra.mxu0 0.0
    %1909 = vmatprep.subr.mxu0 0.0
    %1910 = vmatpush1.msra.mxu0 0.0
    %1911 = vmatprep.subr.mxu0 0.0
    %1912 = vmatpush1.msra.mxu0 0.0
    %1913 = vmatprep.subr.mxu0 0.0
    %1914 = vmatpush1.msra.mxu0 0.0
    %1915 = vmatprep.subr.mxu0 0.0
    %1916 = vmatpush1.msra.mxu0 0.0
    %1917 = vmatprep.subr.mxu0 0.0
    %1918 = vmatpush1.msra.mxu0 0.0
    %1919 = vmatprep.subr.mxu0 0.0
    %1920 = vmatpush1.msra.mxu0 0.0
    %1921 = vmatprep.subr.mxu0 0.0
    %1922 = vmatpush1.msra.mxu0 0.0
    %1923 = vmatprep.subr.mxu0 0.0
    %1924 = vmatpush1.msra.mxu0 0.0
    %1925 = vmatprep.subr.mxu0 0.0
    %1926 = vmatpush1.msra.mxu0 0.0
    %1927 = vmatprep.subr.mxu0 0.0
    %1928 = vmatpush1.msra.mxu0 0.0
    %1929 = vmatprep.subr.mxu0 0.0
    %1930 = vmatpush1.msra.mxu0 0.0
    %1931 = vmatprep.subr.mxu0 0.0
    %1932 = vmatpush1.msra.mxu0 0.0
    %1933 = vmatprep.subr.mxu0 0.0
    %1934 = vmatpush1.msra.mxu0 0.0
    %1935 = vmatprep.subr.mxu0 0.0
    %1936 = vmatpush1.msra.mxu0 0.0
    %1937 = vmatprep.subr.mxu0 0.0
    %1938 = vmatpush1.msra.mxu0 0.0
    %1939 = vmatprep.subr.mxu0 0.0
    %1940 = vmatpush1.msra.mxu0 0.0
    %1941 = vmatprep.subr.mxu0 0.0
    %1942 = vmatpush1.msra.mxu0 0.0
    %1943 = vmatprep.subr.mxu0 0.0
    %1944 = vmatpush1.msra.mxu0 0.0
    %1945 = vmatprep.mubr.f32.mxu0 0.0
    %1946 = vmatmul.mubr.f32.gmra.mrb[0].mxu0 %v1879
    %v1947 = vpop.f32.mrb[0].mxu0
    %v1948 = vadd.f32 %v238, %v1947
    %v1949 = vpop.f32.mrb[0].mxu0
    %1950 = vdwg.mxu0
    %v1951 = vsel %vm136, %v1777, 0
    %1953 = vmatprep.subr.mxu0 0.0
    %1954 = vmatpush1.msra.mxu0 %v130
    %1955 = vmatprep.subr.mxu0 0.0
    %1956 = vmatpush1.msra.mxu0 %v131
    %1957 = vmatprep.subr.mxu0 0.0
    %1958 = vmatpush1.msra.mxu0 %v132
    %1959 = vmatprep.subr.mxu0 0.0
    %1960 = vmatpush1.msra.mxu0 %v133
    %1961 = vmatprep.subr.mxu0 0.0
    %1962 = vmatpush1.msra.mxu0 0.0
    %1963 = vmatprep.subr.mxu0 0.0
    %1964 = vmatpush1.msra.mxu0 0.0
    %1965 = vmatprep.subr.mxu0 0.0
    %1966 = vmatpush1.msra.mxu0 0.0
    %1967 = vmatprep.subr.mxu0 0.0
    %1968 = vmatpush1.msra.mxu0 0.0
    %1969 = vmatprep.subr.mxu0 0.0
    %1970 = vmatpush1.msra.mxu0 0.0
    %1971 = vmatprep.subr.mxu0 0.0
    %1972 = vmatpush1.msra.mxu0 0.0
    %1973 = vmatprep.subr.mxu0 0.0
    %1974 = vmatpush1.msra.mxu0 0.0
    %1975 = vmatprep.subr.mxu0 0.0
    %1976 = vmatpush1.msra.mxu0 0.0
    %1977 = vmatprep.subr.mxu0 0.0
    %1978 = vmatpush1.msra.mxu0 0.0
    %1979 = vmatprep.subr.mxu0 0.0
    %1980 = vmatpush1.msra.mxu0 0.0
    %1981 = vmatprep.subr.mxu0 0.0
    %1982 = vmatpush1.msra.mxu0 0.0
    %1983 = vmatprep.subr.mxu0 0.0
    %1984 = vmatpush1.msra.mxu0 0.0
    %1985 = vmatprep.subr.mxu0 0.0
    %1986 = vmatpush1.msra.mxu0 0.0
    %1987 = vmatprep.subr.mxu0 0.0
    %1988 = vmatpush1.msra.mxu0 0.0
    %1989 = vmatprep.subr.mxu0 0.0
    %1990 = vmatpush1.msra.mxu0 0.0
    %1991 = vmatprep.subr.mxu0 0.0
    %1992 = vmatpush1.msra.mxu0 0.0
    %1993 = vmatprep.subr.mxu0 0.0
    %1994 = vmatpush1.msra.mxu0 0.0
    %1995 = vmatprep.subr.mxu0 0.0
    %1996 = vmatpush1.msra.mxu0 0.0
    %1997 = vmatprep.subr.mxu0 0.0
    %1998 = vmatpush1.msra.mxu0 0.0
    %1999 = vmatprep.subr.mxu0 0.0
    %2000 = vmatpush1.msra.mxu0 0.0
    %2001 = vmatprep.subr.mxu0 0.0
    %2002 = vmatpush1.msra.mxu0 0.0
    %2003 = vmatprep.subr.mxu0 0.0
    %2004 = vmatpush1.msra.mxu0 0.0
    %2005 = vmatprep.subr.mxu0 0.0
    %2006 = vmatpush1.msra.mxu0 0.0
    %2007 = vmatprep.subr.mxu0 0.0
    %2008 = vmatpush1.msra.mxu0 0.0
    %2009 = vmatprep.subr.mxu0 0.0
    %2010 = vmatpush1.msra.mxu0 0.0
    %2011 = vmatprep.subr.mxu0 0.0
    %2012 = vmatpush1.msra.mxu0 0.0
    %2013 = vmatprep.subr.mxu0 0.0
    %2014 = vmatpush1.msra.mxu0 0.0
    %2015 = vmatprep.subr.mxu0 0.0
    %2016 = vmatpush1.msra.mxu0 0.0
    %2017 = vmatprep.mubr.f32.mxu0 0.0
    %2018 = vmatmul.mubr.f32.gmra.mrb[0].mxu0 %v1951
    %v2019 = vpop.f32.mrb[0].mxu0
    %v2020 = vadd.f32 0.0, %v2019
    %v2021 = vpop.f32.mrb[0].mxu0
    %2022 = vdwg.mxu0
    %v2023 = vadd.f32 %v1948, %v2020
    %v2024 = vsub.f32 0.0, %v2023
    %v2025 = vmul.f32 %v2024, 1.442695
    %v2026 = vpow.pop %v2025
    %v2027 = vadd.f32 %v2026, 1.0
    %v2028 = vrcp.pop %v2027
    %v2029 = vmul.f32 1.0, %v2028
    %v2030 = vtanh.pop %v2023
    %v2031 = vmul.f32 %v2029, %v1768
    %2033 = vrot.lane.b32.xlu0 %v2030, 32
    %v2034 = vpop.permute.xlu0 %2033
    %v2036 = vmul.f32 %v2029, %v2034
    %2038 = vrot.lane.b32.xlu0 %v2036, 32
    %v2039 = vpop.permute.xlu0 %2038
    %v2041 = vadd.f32 %v2031, %v2039
    %v2042 = vtanh.pop %v2041
    %2044 = vrot.lane.b32.xlu0 %v2042, 32
    %v2045 = vpop.permute.xlu0 %2044
    %v2047 = vmul.f32 %v2029, %v2045
    %2049 = vrot.lane.b32.xlu0 %v2047, 64
    %v2050 = vpop.permute.xlu0 %2049
    %2052 = vst.msk [vmem:[#allocation3 + $0xc] sm:$0x3] %vm413, %v2050
    %v2053 = vld [vmem:[#allocation2 + $0xe] sm:$0x3]
    %2054 = vmatprep.subr.mxu0 0.0
    %2055 = vmatpush1.msra.mxu0 %v122
    %2056 = vmatprep.subr.mxu0 0.0
    %2057 = vmatpush1.msra.mxu0 %v123
    %2058 = vmatprep.subr.mxu0 0.0
    %2059 = vmatpush1.msra.mxu0 %v124
    %2060 = vmatprep.subr.mxu0 0.0
    %2061 = vmatpush1.msra.mxu0 %v125
    %2062 = vmatprep.subr.mxu0 0.0
    %2063 = vmatpush1.msra.mxu0 0.0
    %2064 = vmatprep.subr.mxu0 0.0
    %2065 = vmatpush1.msra.mxu0 0.0
    %2066 = vmatprep.subr.mxu0 0.0
    %2067 = vmatpush1.msra.mxu0 0.0
    %2068 = vmatprep.subr.mxu0 0.0
    %2069 = vmatpush1.msra.mxu0 0.0
    %2070 = vmatprep.subr.mxu0 0.0
    %2071 = vmatpush1.msra.mxu0 0.0
    %2072 = vmatprep.subr.mxu0 0.0
    %2073 = vmatpush1.msra.mxu0 0.0
    %2074 = vmatprep.subr.mxu0 0.0
    %2075 = vmatpush1.msra.mxu0 0.0
    %2076 = vmatprep.subr.mxu0 0.0
    %2077 = vmatpush1.msra.mxu0 0.0
    %2078 = vmatprep.subr.mxu0 0.0
    %2079 = vmatpush1.msra.mxu0 0.0
    %2080 = vmatprep.subr.mxu0 0.0
    %2081 = vmatpush1.msra.mxu0 0.0
    %2082 = vmatprep.subr.mxu0 0.0
    %2083 = vmatpush1.msra.mxu0 0.0
    %2084 = vmatprep.subr.mxu0 0.0
    %2085 = vmatpush1.msra.mxu0 0.0
    %2086 = vmatprep.subr.mxu0 0.0
    %2087 = vmatpush1.msra.mxu0 0.0
    %2088 = vmatprep.subr.mxu0 0.0
    %2089 = vmatpush1.msra.mxu0 0.0
    %2090 = vmatprep.subr.mxu0 0.0
    %2091 = vmatpush1.msra.mxu0 0.0
    %2092 = vmatprep.subr.mxu0 0.0
    %2093 = vmatpush1.msra.mxu0 0.0
    %2094 = vmatprep.subr.mxu0 0.0
    %2095 = vmatpush1.msra.mxu0 0.0
    %2096 = vmatprep.subr.mxu0 0.0
    %2097 = vmatpush1.msra.mxu0 0.0
    %2098 = vmatprep.subr.mxu0 0.0
    %2099 = vmatpush1.msra.mxu0 0.0
    %2100 = vmatprep.subr.mxu0 0.0
    %2101 = vmatpush1.msra.mxu0 0.0
    %2102 = vmatprep.subr.mxu0 0.0
    %2103 = vmatpush1.msra.mxu0 0.0
    %2104 = vmatprep.subr.mxu0 0.0
    %2105 = vmatpush1.msra.mxu0 0.0
    %2106 = vmatprep.subr.mxu0 0.0
    %2107 = vmatpush1.msra.mxu0 0.0
    %2108 = vmatprep.subr.mxu0 0.0
    %2109 = vmatpush1.msra.mxu0 0.0
    %2110 = vmatprep.subr.mxu0 0.0
    %2111 = vmatpush1.msra.mxu0 0.0
    %2112 = vmatprep.subr.mxu0 0.0
    %2113 = vmatpush1.msra.mxu0 0.0
    %2114 = vmatprep.subr.mxu0 0.0
    %2115 = vmatpush1.msra.mxu0 0.0
    %2116 = vmatprep.subr.mxu0 0.0
    %2117 = vmatpush1.msra.mxu0 0.0
    %2118 = vmatprep.mubr.f32.mxu0 0.0
    %2119 = vmatmul.mubr.f32.gmra.mrb[0].mxu0 %v1879
    %v2120 = vpop.f32.mrb[0].mxu0
    %v2121 = vadd.f32 0.0, %v2120
    %v2122 = vpop.f32.mrb[0].mxu0
    %2123 = vdwg.mxu0
    %v2124 = vadd.f32 %v2053, %v2121
    %v2125 = vsub.f32 0.0, %v2124
    %v2126 = vmul.f32 %v2125, 1.442695
    %v2127 = vpow.pop %v2126
    %v2128 = vadd.f32 %v2127, 1.0
    %v2129 = vrcp.pop %v2128
    %v2130 = vmul.f32 1.0, %v2129
    %v2131 = vtanh.pop %v2124
    %v2132 = vmul.f32 %v2130, %v1869
    %2134 = vrot.lane.b32.xlu0 %v2131, 32
    %v2135 = vpop.permute.xlu0 %2134
    %v2137 = vmul.f32 %v2130, %v2135
    %2139 = vrot.lane.b32.xlu0 %v2137, 32
    %v2140 = vpop.permute.xlu0 %2139
    %v2142 = vadd.f32 %v2132, %v2140
    %v2143 = vtanh.pop %v2142
    %2145 = vrot.lane.b32.xlu0 %v2143, 32
    %v2146 = vpop.permute.xlu0 %2145
    %v2148 = vmul.f32 %v2130, %v2146
    %2150 = vrot.lane.b32.xlu0 %v2148, 64
    %v2151 = vpop.permute.xlu0 %2150
    %v2152 = vsel %vm136, %v2151, 0
    %2154 = vmatprep.subr.mxu0 0.0
    %2155 = vmatpush1.msra.mxu0 %v126
    %2156 = vmatprep.subr.mxu0 0.0
    %2157 = vmatpush1.msra.mxu0 %v127
    %2158 = vmatprep.subr.mxu0 0.0
    %2159 = vmatpush1.msra.mxu0 %v128
    %2160 = vmatprep.subr.mxu0 0.0
    %2161 = vmatpush1.msra.mxu0 %v129
    %2162 = vmatprep.subr.mxu0 0.0
    %2163 = vmatpush1.msra.mxu0 0.0
    %2164 = vmatprep.subr.mxu0 0.0
    %2165 = vmatpush1.msra.mxu0 0.0
    %2166 = vmatprep.subr.mxu0 0.0
    %2167 = vmatpush1.msra.mxu0 0.0
    %2168 = vmatprep.subr.mxu0 0.0
    %2169 = vmatpush1.msra.mxu0 0.0
    %2170 = vmatprep.subr.mxu0 0.0
    %2171 = vmatpush1.msra.mxu0 0.0
    %2172 = vmatprep.subr.mxu0 0.0
    %2173 = vmatpush1.msra.mxu0 0.0
    %2174 = vmatprep.subr.mxu0 0.0
    %2175 = vmatpush1.msra.mxu0 0.0
    %2176 = vmatprep.subr.mxu0 0.0
    %2177 = vmatpush1.msra.mxu0 0.0
    %2178 = vmatprep.subr.mxu0 0.0
    %2179 = vmatpush1.msra.mxu0 0.0
    %2180 = vmatprep.subr.mxu0 0.0
    %2181 = vmatpush1.msra.mxu0 0.0
    %2182 = vmatprep.subr.mxu0 0.0
    %2183 = vmatpush1.msra.mxu0 0.0
    %2184 = vmatprep.subr.mxu0 0.0
    %2185 = vmatpush1.msra.mxu0 0.0
    %2186 = vmatprep.subr.mxu0 0.0
    %2187 = vmatpush1.msra.mxu0 0.0
    %2188 = vmatprep.subr.mxu0 0.0
    %2189 = vmatpush1.msra.mxu0 0.0
    %2190 = vmatprep.subr.mxu0 0.0
    %2191 = vmatpush1.msra.mxu0 0.0
    %2192 = vmatprep.subr.mxu0 0.0
    %2193 = vmatpush1.msra.mxu0 0.0
    %2194 = vmatprep.subr.mxu0 0.0
    %2195 = vmatpush1.msra.mxu0 0.0
    %2196 = vmatprep.subr.mxu0 0.0
    %2197 = vmatpush1.msra.mxu0 0.0
    %2198 = vmatprep.subr.mxu0 0.0
    %2199 = vmatpush1.msra.mxu0 0.0
    %2200 = vmatprep.subr.mxu0 0.0
    %2201 = vmatpush1.msra.mxu0 0.0
    %2202 = vmatprep.subr.mxu0 0.0
    %2203 = vmatpush1.msra.mxu0 0.0
    %2204 = vmatprep.subr.mxu0 0.0
    %2205 = vmatpush1.msra.mxu0 0.0
    %2206 = vmatprep.subr.mxu0 0.0
    %2207 = vmatpush1.msra.mxu0 0.0
    %2208 = vmatprep.subr.mxu0 0.0
    %2209 = vmatpush1.msra.mxu0 0.0
    %2210 = vmatprep.subr.mxu0 0.0
    %2211 = vmatpush1.msra.mxu0 0.0
    %2212 = vmatprep.subr.mxu0 0.0
    %2213 = vmatpush1.msra.mxu0 0.0
    %2214 = vmatprep.subr.mxu0 0.0
    %2215 = vmatpush1.msra.mxu0 0.0
    %2216 = vmatprep.subr.mxu0 0.0
    %2217 = vmatpush1.msra.mxu0 0.0
    %2218 = vmatprep.mubr.f32.mxu0 0.0
    %2219 = vmatmul.mubr.f32.gmra.mrb[0].mxu0 %v2152
    %v2220 = vpop.f32.mrb[0].mxu0
    %v2221 = vadd.f32 %v238, %v2220
    %v2222 = vpop.f32.mrb[0].mxu0
    %2223 = vdwg.mxu0
    %v2224 = vsel %vm136, %v2050, 0
    %2226 = vmatprep.subr.mxu0 0.0
    %2227 = vmatpush1.msra.mxu0 %v130
    %2228 = vmatprep.subr.mxu0 0.0
    %2229 = vmatpush1.msra.mxu0 %v131
    %2230 = vmatprep.subr.mxu0 0.0
    %2231 = vmatpush1.msra.mxu0 %v132
    %2232 = vmatprep.subr.mxu0 0.0
    %2233 = vmatpush1.msra.mxu0 %v133
    %2234 = vmatprep.subr.mxu0 0.0
    %2235 = vmatpush1.msra.mxu0 0.0
    %2236 = vmatprep.subr.mxu0 0.0
    %2237 = vmatpush1.msra.mxu0 0.0
    %2238 = vmatprep.subr.mxu0 0.0
    %2239 = vmatpush1.msra.mxu0 0.0
    %2240 = vmatprep.subr.mxu0 0.0
    %2241 = vmatpush1.msra.mxu0 0.0
    %2242 = vmatprep.subr.mxu0 0.0
    %2243 = vmatpush1.msra.mxu0 0.0
    %2244 = vmatprep.subr.mxu0 0.0
    %2245 = vmatpush1.msra.mxu0 0.0
    %2246 = vmatprep.subr.mxu0 0.0
    %2247 = vmatpush1.msra.mxu0 0.0
    %2248 = vmatprep.subr.mxu0 0.0
    %2249 = vmatpush1.msra.mxu0 0.0
    %2250 = vmatprep.subr.mxu0 0.0
    %2251 = vmatpush1.msra.mxu0 0.0
    %2252 = vmatprep.subr.mxu0 0.0
    %2253 = vmatpush1.msra.mxu0 0.0
    %2254 = vmatprep.subr.mxu0 0.0
    %2255 = vmatpush1.msra.mxu0 0.0
    %2256 = vmatprep.subr.mxu0 0.0
    %2257 = vmatpush1.msra.mxu0 0.0
    %2258 = vmatprep.subr.mxu0 0.0
    %2259 = vmatpush1.msra.mxu0 0.0
    %2260 = vmatprep.subr.mxu0 0.0
    %2261 = vmatpush1.msra.mxu0 0.0
    %2262 = vmatprep.subr.mxu0 0.0
    %2263 = vmatpush1.msra.mxu0 0.0
    %2264 = vmatprep.subr.mxu0 0.0
    %2265 = vmatpush1.msra.mxu0 0.0
    %2266 = vmatprep.subr.mxu0 0.0
    %2267 = vmatpush1.msra.mxu0 0.0
    %2268 = vmatprep.subr.mxu0 0.0
    %2269 = vmatpush1.msra.mxu0 0.0
    %2270 = vmatprep.subr.mxu0 0.0
    %2271 = vmatpush1.msra.mxu0 0.0
    %2272 = vmatprep.subr.mxu0 0.0
    %2273 = vmatpush1.msra.mxu0 0.0
    %2274 = vmatprep.subr.mxu0 0.0
    %2275 = vmatpush1.msra.mxu0 0.0
    %2276 = vmatprep.subr.mxu0 0.0
    %2277 = vmatpush1.msra.mxu0 0.0
    %2278 = vmatprep.subr.mxu0 0.0
    %2279 = vmatpush1.msra.mxu0 0.0
    %2280 = vmatprep.subr.mxu0 0.0
    %2281 = vmatpush1.msra.mxu0 0.0
    %2282 = vmatprep.subr.mxu0 0.0
    %2283 = vmatpush1.msra.mxu0 0.0
    %2284 = vmatprep.subr.mxu0 0.0
    %2285 = vmatpush1.msra.mxu0 0.0
    %2286 = vmatprep.subr.mxu0 0.0
    %2287 = vmatpush1.msra.mxu0 0.0
    %2288 = vmatprep.subr.mxu0 0.0
    %2289 = vmatpush1.msra.mxu0 0.0
    %2290 = vmatprep.mubr.f32.mxu0 0.0
    %2291 = vmatmul.mubr.f32.gmra.mrb[0].mxu0 %v2224
    %v2292 = vpop.f32.mrb[0].mxu0
    %v2293 = vadd.f32 0.0, %v2292
    %v2294 = vpop.f32.mrb[0].mxu0
    %2295 = vdwg.mxu0
    %v2296 = vadd.f32 %v2221, %v2293
    %v2297 = vsub.f32 0.0, %v2296
    %v2298 = vmul.f32 %v2297, 1.442695
    %v2299 = vpow.pop %v2298
    %v2300 = vadd.f32 %v2299, 1.0
    %v2301 = vrcp.pop %v2300
    %v2302 = vmul.f32 1.0, %v2301
    %v2303 = vtanh.pop %v2296
    %v2304 = vmul.f32 %v2302, %v2041
    %2306 = vrot.lane.b32.xlu0 %v2303, 32
    %v2307 = vpop.permute.xlu0 %2306
    %v2309 = vmul.f32 %v2302, %v2307
    %2311 = vrot.lane.b32.xlu0 %v2309, 32
    %v2312 = vpop.permute.xlu0 %2311
    %v2314 = vadd.f32 %v2304, %v2312
    %v2315 = vtanh.pop %v2314
    %2317 = vrot.lane.b32.xlu0 %v2315, 32
    %v2318 = vpop.permute.xlu0 %2317
    %v2320 = vmul.f32 %v2302, %v2318
    %2322 = vrot.lane.b32.xlu0 %v2320, 64
    %v2323 = vpop.permute.xlu0 %2322
    %2325 = vst.msk [vmem:[#allocation3 + $0xe] sm:$0x3] %vm413, %v2323
    %v2326 = vld [vmem:[#allocation3] sm:$0xff]
    %v2327 = vld [vmem:[#allocation3 + $0x8] sm:$0xff]
    %v2328 = vld [vmem:[#allocation4 + $0x78] sm:$0xff]
    %v2329 = vld [vmem:[#allocation4 + $0x80] sm:$0xff]
    %v2330 = vld [vmem:[#allocation4 + $0x88] sm:$0xff]
    %v2331 = vld [vmem:[#allocation4 + $0x90] sm:$0xff]
    %v2332 = vld [vmem:[#allocation4 + $0x98] sm:$0x1]
    %v2333 = vlaneseq
    %v2334 = vshrl.u32 %v2333, 7
    %v2335 = vsub.s32 0, %v2334
    %v2336 = vrot.slane %v2332, %v2335
    %v2338 = vsel %vm136, %v2326, 0
    %v2341 = vsel %vm136, %v2327, 0
    %2343 = vmatprep.subr.mxu0 0.0
    %2344 = vmatpush1.msra.mxu0 %v2328
    %2345 = vmatprep.subr.mxu0 0.0
    %2346 = vmatpush1.msra.mxu0 %v2329
    %2347 = vmatprep.subr.mxu0 0.0
    %2348 = vmatpush1.msra.mxu0 %v2330
    %2349 = vmatprep.subr.mxu0 0.0
    %2350 = vmatpush1.msra.mxu0 %v2331
    %2351 = vmatprep.subr.mxu0 0.0
    %2352 = vmatpush1.msra.mxu0 0.0
    %2353 = vmatprep.subr.mxu0 0.0
    %2354 = vmatpush1.msra.mxu0 0.0
    %2355 = vmatprep.subr.mxu0 0.0
    %2356 = vmatpush1.msra.mxu0 0.0
    %2357 = vmatprep.subr.mxu0 0.0
    %2358 = vmatpush1.msra.mxu0 0.0
    %2359 = vmatprep.subr.mxu0 0.0
    %2360 = vmatpush1.msra.mxu0 0.0
    %2361 = vmatprep.subr.mxu0 0.0
    %2362 = vmatpush1.msra.mxu0 0.0
    %2363 = vmatprep.subr.mxu0 0.0
    %2364 = vmatpush1.msra.mxu0 0.0
    %2365 = vmatprep.subr.mxu0 0.0
    %2366 = vmatpush1.msra.mxu0 0.0
    %2367 = vmatprep.subr.mxu0 0.0
    %2368 = vmatpush1.msra.mxu0 0.0
    %2369 = vmatprep.subr.mxu0 0.0
    %2370 = vmatpush1.msra.mxu0 0.0
    %2371 = vmatprep.subr.mxu0 0.0
    %2372 = vmatpush1.msra.mxu0 0.0
    %2373 = vmatprep.subr.mxu0 0.0
    %2374 = vmatpush1.msra.mxu0 0.0
    %2375 = vmatprep.subr.mxu0 0.0
    %2376 = vmatpush1.msra.mxu0 0.0
    %2377 = vmatprep.subr.mxu0 0.0
    %2378 = vmatpush1.msra.mxu0 0.0
    %2379 = vmatprep.subr.mxu0 0.0
    %2380 = vmatpush1.msra.mxu0 0.0
    %2381 = vmatprep.subr.mxu0 0.0
    %2382 = vmatpush1.msra.mxu0 0.0
    %2383 = vmatprep.subr.mxu0 0.0
    %2384 = vmatpush1.msra.mxu0 0.0
    %2385 = vmatprep.subr.mxu0 0.0
    %2386 = vmatpush1.msra.mxu0 0.0
    %2387 = vmatprep.subr.mxu0 0.0
    %2388 = vmatpush1.msra.mxu0 0.0
    %2389 = vmatprep.subr.mxu0 0.0
    %2390 = vmatpush1.msra.mxu0 0.0
    %2391 = vmatprep.subr.mxu0 0.0
    %2392 = vmatpush1.msra.mxu0 0.0
    %2393 = vmatprep.subr.mxu0 0.0
    %2394 = vmatpush1.msra.mxu0 0.0
    %2395 = vmatprep.subr.mxu0 0.0
    %2396 = vmatpush1.msra.mxu0 0.0
    %2397 = vmatprep.subr.mxu0 0.0
    %2398 = vmatpush1.msra.mxu0 0.0
    %2399 = vmatprep.subr.mxu0 0.0
    %2400 = vmatpush1.msra.mxu0 0.0
    %2401 = vmatprep.subr.mxu0 0.0
    %2402 = vmatpush1.msra.mxu0 0.0
    %2403 = vmatprep.subr.mxu0 0.0
    %2404 = vmatpush1.msra.mxu0 0.0
    %2405 = vmatprep.subr.mxu0 0.0
    %2406 = vmatpush1.msra.mxu0 0.0
    %2407 = vmatprep.mubr.f32.mxu0 0.0
    %2408 = vmatmul.mubr.f32.gmra.mrb[0].mxu0 %v2338
    %v2409 = vpop.f32.mrb[0].mxu0
    %v2410 = vadd.f32 %v2336, %v2409
    %v2411 = vpop.f32.mrb[0].mxu0
    %2412 = vmatprep.mubr.f32.mxu0 0.0
    %2413 = vmatmul.mubr.f32.gmra.mrb[0].mxu0 %v2341
    %v2414 = vpop.f32.mrb[0].mxu0
    %v2415 = vadd.f32 %v2336, %v2414
    %v2416 = vpop.f32.mrb[0].mxu0
    %2417 = vdwg.mxu0
    %vm2418 = vcmp.gt.f32.partialorder %v2410, 0.0
    %vm2419 = vcmp.gt.f32.partialorder %v2415, 0.0
    %v2420 = vmul.f32 %v2410, 0.01
    %v2421 = vmul.f32 %v2415, 0.01
    %v2422 = vsel %vm2418, %v2410, %v2420
    %v2423 = vsel %vm2419, %v2415, %v2421
    %v2424 = vld [vmem:[#allocation4 + $0xa0] sm:$0xff]
    %v2425 = vld [vmem:[#allocation4 + $0xa8] sm:$0xff]
    %v2426 = vld [vmem:[#allocation4 + $0xb0] sm:$0xff]
    %v2427 = vld [vmem:[#allocation4 + $0xb8] sm:$0xff]
    %v2428 = vld [vmem:[#allocation4 + $0xc0] sm:$0xff]
    %v2429 = vld [vmem:[#allocation4 + $0xc8] sm:$0xff]
    %v2430 = vld [vmem:[#allocation4 + $0xd0] sm:$0xff]
    %v2431 = vld [vmem:[#allocation4 + $0xd8] sm:$0xff]
    %v2432 = vld [vmem:[#allocation4 + $0xe0] sm:$0xff]
    %v2433 = vld [vmem:[#allocation4 + $0xe8] sm:$0xff]
    %v2434 = vld [vmem:[#allocation4 + $0xf0] sm:$0xff]
    %v2435 = vld [vmem:[#allocation4 + $0xf8] sm:$0xff]
    %v2436 = vld [vmem:[#allocation4 + $0x100] sm:$0xff]
    %v2437 = vld [vmem:[#allocation4 + $0x108] sm:$0xff]
    %v2438 = vld [vmem:[#allocation4 + $0x110] sm:$0xff]
    %v2439 = vld [vmem:[#allocation4 + $0x118] sm:$0xff]
    %v2440 = vld [vmem:[#allocation4 + $0x120] sm:$0x1]
    %v2441 = vlaneseq
    %v2442 = vshrl.u32 %v2441, 7
    %v2443 = vsub.s32 0, %v2442
    %v2444 = vrot.slane %v2440, %v2443
    %2445 = vmatprep.subr.mxu0 0.0
    %2446 = vmatpush1.msra.mxu0 %v2424
    %2447 = vmatprep.subr.mxu0 0.0
    %2448 = vmatpush1.msra.mxu0 %v2425
    %2449 = vmatprep.subr.mxu0 0.0
    %2450 = vmatpush1.msra.mxu0 %v2426
    %2451 = vmatprep.subr.mxu0 0.0
    %2452 = vmatpush1.msra.mxu0 %v2427
    %2453 = vmatprep.subr.mxu0 0.0
    %2454 = vmatpush1.msra.mxu0 %v2428
    %2455 = vmatprep.subr.mxu0 0.0
    %2456 = vmatpush1.msra.mxu0 %v2429
    %2457 = vmatprep.subr.mxu0 0.0
    %2458 = vmatpush1.msra.mxu0 %v2430
    %2459 = vmatprep.subr.mxu0 0.0
    %2460 = vmatpush1.msra.mxu0 %v2431
    %2461 = vmatprep.subr.mxu0 0.0
    %2462 = vmatpush1.msra.mxu0 %v2432
    %2463 = vmatprep.subr.mxu0 0.0
    %2464 = vmatpush1.msra.mxu0 %v2433
    %2465 = vmatprep.subr.mxu0 0.0
    %2466 = vmatpush1.msra.mxu0 %v2434
    %2467 = vmatprep.subr.mxu0 0.0
    %2468 = vmatpush1.msra.mxu0 %v2435
    %2469 = vmatprep.subr.mxu0 0.0
    %2470 = vmatpush1.msra.mxu0 %v2436
    %2471 = vmatprep.subr.mxu0 0.0
    %2472 = vmatpush1.msra.mxu0 %v2437
    %2473 = vmatprep.subr.mxu0 0.0
    %2474 = vmatpush1.msra.mxu0 %v2438
    %2475 = vmatprep.subr.mxu0 0.0
    %2476 = vmatpush1.msra.mxu0 %v2439
    %2477 = vmatprep.subr.mxu0 0.0
    %2478 = vmatpush1.msra.mxu0 0.0
    %2479 = vmatprep.subr.mxu0 0.0
    %2480 = vmatpush1.msra.mxu0 0.0
    %2481 = vmatprep.subr.mxu0 0.0
    %2482 = vmatpush1.msra.mxu0 0.0
    %2483 = vmatprep.subr.mxu0 0.0
    %2484 = vmatpush1.msra.mxu0 0.0
    %2485 = vmatprep.subr.mxu0 0.0
    %2486 = vmatpush1.msra.mxu0 0.0
    %2487 = vmatprep.subr.mxu0 0.0
    %2488 = vmatpush1.msra.mxu0 0.0
    %2489 = vmatprep.subr.mxu0 0.0
    %2490 = vmatpush1.msra.mxu0 0.0
    %2491 = vmatprep.subr.mxu0 0.0
    %2492 = vmatpush1.msra.mxu0 0.0
    %2493 = vmatprep.subr.mxu0 0.0
    %2494 = vmatpush1.msra.mxu0 0.0
    %2495 = vmatprep.subr.mxu0 0.0
    %2496 = vmatpush1.msra.mxu0 0.0
    %2497 = vmatprep.subr.mxu0 0.0
    %2498 = vmatpush1.msra.mxu0 0.0
    %2499 = vmatprep.subr.mxu0 0.0
    %2500 = vmatpush1.msra.mxu0 0.0
    %2501 = vmatprep.subr.mxu0 0.0
    %2502 = vmatpush1.msra.mxu0 0.0
    %2503 = vmatprep.subr.mxu0 0.0
    %2504 = vmatpush1.msra.mxu0 0.0
    %2505 = vmatprep.subr.mxu0 0.0
    %2506 = vmatpush1.msra.mxu0 0.0
    %2507 = vmatprep.subr.mxu0 0.0
    %2508 = vmatpush1.msra.mxu0 0.0
    %2509 = vmatprep.mubr.f32.mxu0 0.0
    %2510 = vmatmul.mubr.f32.gmra.mrb[0].mxu0 %v2422
    %v2511 = vpop.f32.mrb[0].mxu0
    %v2512 = vadd.f32 %v2444, %v2511
    %v2513 = vpop.f32.mrb[0].mxu0
    %2514 = vmatprep.mubr.f32.mxu0 0.0
    %2515 = vmatmul.mubr.f32.gmra.mrb[0].mxu0 %v2423
    %v2516 = vpop.f32.mrb[0].mxu0
    %v2517 = vadd.f32 %v2444, %v2516
    %v2518 = vpop.f32.mrb[0].mxu0
    %2519 = vdwg.mxu0
    %vm2520 = vcmp.gt.f32.partialorder %v2512, 0.0
    %vm2521 = vcmp.gt.f32.partialorder %v2517, 0.0
    %v2522 = vmul.f32 %v2512, 0.01
    %v2523 = vmul.f32 %v2517, 0.01
    %v2524 = vsel %vm2520, %v2512, %v2522
    %v2525 = vsel %vm2521, %v2517, %v2523
    %v2526 = vld [vmem:[#allocation4 + $0x128] sm:$0xff]
    %v2527 = vld [vmem:[#allocation4 + $0x130] sm:$0xff]
    %v2528 = vld [vmem:[#allocation4 + $0x138] sm:$0xff]
    %v2529 = vld [vmem:[#allocation4 + $0x140] sm:$0xff]
    %v2530 = vld [vmem:[#allocation4 + $0x148] sm:$0xff]
    %v2531 = vld [vmem:[#allocation4 + $0x150] sm:$0xff]
    %v2532 = vld [vmem:[#allocation4 + $0x158] sm:$0xff]
    %v2533 = vld [vmem:[#allocation4 + $0x160] sm:$0xff]
    %v2534 = vld [vmem:[#allocation4 + $0x168] sm:$0xff]
    %v2535 = vld [vmem:[#allocation4 + $0x170] sm:$0xff]
    %v2536 = vld [vmem:[#allocation4 + $0x178] sm:$0xff]
    %v2537 = vld [vmem:[#allocation4 + $0x180] sm:$0xff]
    %v2538 = vld [vmem:[#allocation4 + $0x188] sm:$0xff]
    %v2539 = vld [vmem:[#allocation4 + $0x190] sm:$0xff]
    %v2540 = vld [vmem:[#allocation4 + $0x198] sm:$0xff]
    %v2541 = vld [vmem:[#allocation4 + $0x1a0] sm:$0xff]
    %v2542 = vld [vmem:[#allocation4 + $0x1a8] sm:$0x1]
    %v2543 = vlaneseq
    %v2544 = vshrl.u32 %v2543, 7
    %v2545 = vsub.s32 0, %v2544
    %v2546 = vrot.slane %v2542, %v2545
    %2547 = vmatprep.subr.mxu0 0.0
    %2548 = vmatpush1.msra.mxu0 %v2526
    %2549 = vmatprep.subr.mxu0 0.0
    %2550 = vmatpush1.msra.mxu0 %v2527
    %2551 = vmatprep.subr.mxu0 0.0
    %2552 = vmatpush1.msra.mxu0 %v2528
    %2553 = vmatprep.subr.mxu0 0.0
    %2554 = vmatpush1.msra.mxu0 %v2529
    %2555 = vmatprep.subr.mxu0 0.0
    %2556 = vmatpush1.msra.mxu0 %v2530
    %2557 = vmatprep.subr.mxu0 0.0
    %2558 = vmatpush1.msra.mxu0 %v2531
    %2559 = vmatprep.subr.mxu0 0.0
    %2560 = vmatpush1.msra.mxu0 %v2532
    %2561 = vmatprep.subr.mxu0 0.0
    %2562 = vmatpush1.msra.mxu0 %v2533
    %2563 = vmatprep.subr.mxu0 0.0
    %2564 = vmatpush1.msra.mxu0 %v2534
    %2565 = vmatprep.subr.mxu0 0.0
    %2566 = vmatpush1.msra.mxu0 %v2535
    %2567 = vmatprep.subr.mxu0 0.0
    %2568 = vmatpush1.msra.mxu0 %v2536
    %2569 = vmatprep.subr.mxu0 0.0
    %2570 = vmatpush1.msra.mxu0 %v2537
    %2571 = vmatprep.subr.mxu0 0.0
    %2572 = vmatpush1.msra.mxu0 %v2538
    %2573 = vmatprep.subr.mxu0 0.0
    %2574 = vmatpush1.msra.mxu0 %v2539
    %2575 = vmatprep.subr.mxu0 0.0
    %2576 = vmatpush1.msra.mxu0 %v2540
    %2577 = vmatprep.subr.mxu0 0.0
    %2578 = vmatpush1.msra.mxu0 %v2541
    %2579 = vmatprep.subr.mxu0 0.0
    %2580 = vmatpush1.msra.mxu0 0.0
    %2581 = vmatprep.subr.mxu0 0.0
    %2582 = vmatpush1.msra.mxu0 0.0
    %2583 = vmatprep.subr.mxu0 0.0
    %2584 = vmatpush1.msra.mxu0 0.0
    %2585 = vmatprep.subr.mxu0 0.0
    %2586 = vmatpush1.msra.mxu0 0.0
    %2587 = vmatprep.subr.mxu0 0.0
    %2588 = vmatpush1.msra.mxu0 0.0
    %2589 = vmatprep.subr.mxu0 0.0
    %2590 = vmatpush1.msra.mxu0 0.0
    %2591 = vmatprep.subr.mxu0 0.0
    %2592 = vmatpush1.msra.mxu0 0.0
    %2593 = vmatprep.subr.mxu0 0.0
    %2594 = vmatpush1.msra.mxu0 0.0
    %2595 = vmatprep.subr.mxu0 0.0
    %2596 = vmatpush1.msra.mxu0 0.0
    %2597 = vmatprep.subr.mxu0 0.0
    %2598 = vmatpush1.msra.mxu0 0.0
    %2599 = vmatprep.subr.mxu0 0.0
    %2600 = vmatpush1.msra.mxu0 0.0
    %2601 = vmatprep.subr.mxu0 0.0
    %2602 = vmatpush1.msra.mxu0 0.0
    %2603 = vmatprep.subr.mxu0 0.0
    %2604 = vmatpush1.msra.mxu0 0.0
    %2605 = vmatprep.subr.mxu0 0.0
    %2606 = vmatpush1.msra.mxu0 0.0
    %2607 = vmatprep.subr.mxu0 0.0
    %2608 = vmatpush1.msra.mxu0 0.0
    %2609 = vmatprep.subr.mxu0 0.0
    %2610 = vmatpush1.msra.mxu0 0.0
    %2611 = vmatprep.mubr.f32.mxu0 0.0
    %2612 = vmatmul.mubr.f32.gmra.mrb[0].mxu0 %v2524
    %v2613 = vpop.f32.mrb[0].mxu0
    %v2614 = vadd.f32 %v2546, %v2613
    %v2615 = vpop.f32.mrb[0].mxu0
    %2616 = vmatprep.mubr.f32.mxu0 0.0
    %2617 = vmatmul.mubr.f32.gmra.mrb[0].mxu0 %v2525
    %v2618 = vpop.f32.mrb[0].mxu0
    %v2619 = vadd.f32 %v2546, %v2618
    %v2620 = vpop.f32.mrb[0].mxu0
    %2621 = vdwg.mxu0
    %2622 = vst [vmem:[#allocation7] sm:$0xff] %v2614
    %2623 = vst [vmem:[#allocation7 + $0x8] sm:$0xff] %v2619
    // Predicated region
    $region14: #{tpu_custom_call.1} parent=1 // pred_check
      _
    $region15: #{tpu_custom_call.1} parent=1 // pred_check_branch
      %2625 = sbr.rel (0) target = $region17
    $region16: #{tpu_custom_call.1} parent=1 // pred_region
      %s2627 = ssub.s32 256, 256
      %2628 = vsyncadd [#allocation6], %s2627
      %s2629 = sshll.u32 [#allocation7], 4
      %s2630 = int_to_ptr.vmem [resolvable:$true] %s2629
      %2635 = dma.vmem_to_hbm [thread:$0]  %s2630, 256, %s2, [#allocation6], 128, 128, 8
    $region17: #{tpu_custom_call.1} parent=1 // pred_fallthru
      _
    // Predicated region
    $region18: #{tpu_custom_call.1} parent=1 // pred_check
      _
    $region19: #{tpu_custom_call.1} parent=1 // pred_check_branch
      %2637 = sbr.rel (0) target = $region21
    $region20: #{tpu_custom_call.1} parent=1 // pred_region
      %2638 = dma.done [#allocation6], 256
    $region21: #{tpu_custom_call.1} parent=1 // pred_fallthru
      _
    %2639 = vsyncpa [#allocation5], 1
    %2640 = vsyncpa [#allocation6], 1

</llo_original>
